<compile_context>
chip_gen: v7x
topology: tpu7x:2x2x1
jax: 0.10.0
libtpu: 0.0.40
codegen_flags: <defaults>
</compile_context>

<pallas_src>
import functools

import jax
import jax.numpy as jnp
from jax.experimental import pallas as pl
from jax.experimental.pallas import tpu as pltpu

_VMEM_LIMIT = 48 * 1024 * 1024
_TM = 512  # max row tile for the generic matmul kernel


def _cparams(*semantics):
    return pltpu.CompilerParams(
        dimension_semantics=semantics, vmem_limit_bytes=_VMEM_LIMIT
    )


# ---------------------------------------------------------------------------
# Generic matmul kernel: out = act(a @ w + b), bf16 (or f32) MXU, f32 accum.
# ---------------------------------------------------------------------------
def _matmul_bias_act_kernel(a_ref, w_ref, b_ref, o_ref, *, relu):
    acc = jnp.dot(a_ref[...], w_ref[...], preferred_element_type=jnp.float32)
    acc = acc + b_ref[...]
    if relu:
        acc = jnp.maximum(acc, 0.0)
    o_ref[...] = acc.astype(o_ref.dtype)


def pallas_matmul_bias(a, w, b, *, relu, compute_dtype=jnp.bfloat16,
                       out_dtype=jnp.float32, tm=_TM):
    """a:(M,K) w:(K,N) b:(N,).  No padding copy of `a`; ragged last tile OK."""
    M, K = a.shape
    K2, N = w.shape
    assert K == K2, (K, K2)
    if M <= tm:
        tm = M            # single block == full dim (always a legal block)
    grid = pl.cdiv(M, tm)
    return pl.pallas_call(
        functools.partial(_matmul_bias_act_kernel, relu=relu),
        out_shape=jax.ShapeDtypeStruct((M, N), out_dtype),
        grid=(grid,),
        in_specs=[
            pl.BlockSpec((tm, K), lambda i: (i, 0)),
            pl.BlockSpec((K, N), lambda i: (0, 0)),
            pl.BlockSpec((1, N), lambda i: (0, 0)),
        ],
        out_specs=pl.BlockSpec((tm, N), lambda i: (i, 0)),
        compiler_params=_cparams("parallel"),
    )(a.astype(compute_dtype), w.astype(compute_dtype),
      b.reshape(1, N).astype(jnp.float32))


# ---------------------------------------------------------------------------
# Fused stride-1 conv kernel: taps accumulated in-kernel (no im2col in HBM).
# ---------------------------------------------------------------------------
def _conv_taps_kernel(x_ref, w_ref, b_ref, o_ref, *, taps, relu):
    # x_ref: (1, Hp, Wp, C) bf16 | w_ref: (T, C, Cout) bf16 | b_ref: (1, Cout) f32
    _, ho, wo, cout = o_ref.shape
    c = x_ref.shape[-1]
    xv = x_ref[0].astype(jnp.float32)          # unpack once; 32-bit relayouts
    acc = jnp.zeros((ho * wo, cout), jnp.float32)
    for t, (r0, c0) in enumerate(taps):        # static loop, <= 9 taps
        patch = jax.lax.slice(xv, (r0, c0, 0), (r0 + ho, c0 + wo, c))
        a = patch.reshape(ho * wo, c).astype(jnp.bfloat16)
        acc = acc + jnp.dot(a, w_ref[t], preferred_element_type=jnp.float32)
    acc = acc + b_ref[...]
    if relu:
        acc = jnp.maximum(acc, 0.0)
    o_ref[...] = acc.reshape(o_ref.shape).astype(o_ref.dtype)


def conv2d_fused(x, w, b, *, dilation=1, relu=True, out_dtype=jnp.bfloat16):
    """Stride-1 'same' conv.  x: NHWC, w: PyTorch (Cout, Cin, kh, kw)."""
    n, h, wd, c = x.shape
    cout, cin, kh, kw = w.shape
    assert c == cin, (c, cin)
    # Keep only taps that can touch the real feature map (implicit zero pad);
    # atrous taps with |offset| >= feature size contribute nothing -> skipped.
    taps, wmats = [], []
    for ki in range(kh):
        for kj in range(kw):
            r = (ki - kh // 2) * dilation
            s = (kj - kw // 2) * dilation
            if abs(r) >= h or abs(s) >= wd:
                continue
            taps.append((r, s))
            wmats.append(jnp.transpose(w[:, :, ki, kj], (1, 0)))  # (Cin, Cout)
    ph = max(abs(r) for r, _ in taps)
    pw = max(abs(s) for _, s in taps)
    xpad = jnp.pad(x.astype(jnp.bfloat16), ((0, 0), (ph, ph), (pw, pw), (0, 0)))
    taps_p = tuple((r + ph, s + pw) for r, s in taps)   # top-left in padded coords
    wstack = jnp.stack(wmats, axis=0).astype(jnp.bfloat16)  # (T, Cin, Cout)
    hp, wp = h + 2 * ph, wd + 2 * pw
    t_cnt = len(taps_p)
    return pl.pallas_call(
        functools.partial(_conv_taps_kernel, taps=taps_p, relu=relu),
        out_shape=jax.ShapeDtypeStruct((n, h, wd, cout), out_dtype),
        grid=(n,),
        in_specs=[
            pl.BlockSpec((1, hp, wp, c), lambda i: (i, 0, 0, 0)),
            pl.BlockSpec((t_cnt, c, cout), lambda i: (0, 0, 0)),
            pl.BlockSpec((1, cout), lambda i: (0, 0)),
        ],
        out_specs=pl.BlockSpec((1, h, wd, cout), lambda i: (i, 0, 0, 0)),
        compiler_params=_cparams("parallel"),
    )(xpad, wstack, b.reshape(1, cout).astype(jnp.float32))


# ---------------------------------------------------------------------------
# Stride-2 conv (encoder): im2col gather in glue + Pallas bf16 matmul.
# TODO(synk): fuse the strided tap gather in-kernel (space-to-depth) as well.
# ---------------------------------------------------------------------------
def conv2d_im2col(x, w, b, *, stride, relu=True, out_dtype=jnp.bfloat16):
    n, h, wd, c = x.shape
    cout, cin, kh, kw = w.shape
    assert c == cin
    pad = kh // 2
    ho = (h + 2 * pad - kh) // stride + 1
    wo = (wd + 2 * pad - kw) // stride + 1
    xp = jnp.pad(x.astype(jnp.bfloat16), ((0, 0), (pad, pad), (pad, pad), (0, 0)))
    cols = []
    for ki in range(kh):
        for kj in range(kw):
            cols.append(jax.lax.slice(
                xp, (0, ki, kj, 0),
                (n, ki + (ho - 1) * stride + 1, kj + (wo - 1) * stride + 1, c),
                (1, stride, stride, 1)))
    patches = jnp.concatenate(cols, axis=-1)              # (N,Ho,Wo,kh*kw*C)
    a = patches.reshape(n * ho * wo, kh * kw * c)
    wm = jnp.transpose(w, (2, 3, 1, 0)).reshape(kh * kw * cin, cout)
    out = pallas_matmul_bias(a, wm, b, relu=relu, out_dtype=out_dtype)
    return out.reshape(n, ho, wo, cout)


# ---------------------------------------------------------------------------
# Chunked global average pool (f32 accumulator across the grid).
# ---------------------------------------------------------------------------
def _gap_kernel(x_ref, o_ref, *, denom):
    @pl.when(pl.program_id(0) == 0)
    def _():
        o_ref[...] = jnp.zeros_like(o_ref)
    o_ref[...] += jnp.sum(x_ref[...].astype(jnp.float32), axis=1)
    @pl.when(pl.program_id(0) == pl.num_programs(0) - 1)
    def _():
        o_ref[...] = o_ref[...] * (1.0 / denom)


def global_avg_pool(x_nhwc, *, ts=512):
    n, h, w, c = x_nhwc.shape
    hw = h * w
    x = x_nhwc.reshape(n, hw, c)
    ts = min(ts, hw)
    if hw % ts:
        x = jnp.pad(x, ((0, 0), (0, ts - hw % ts), (0, 0)))  # zeros: sum-safe
    steps = x.shape[1] // ts
    return pl.pallas_call(
        functools.partial(_gap_kernel, denom=float(hw)),
        out_shape=jax.ShapeDtypeStruct((n, c), jnp.float32),
        grid=(steps,),
        in_specs=[pl.BlockSpec((n, ts, c), lambda s: (0, s, 0))],
        out_specs=pl.BlockSpec((n, c), lambda s: (0, 0)),
        compiler_params=_cparams("arbitrary"),
    )(x)


# ---------------------------------------------------------------------------
# Separable bilinear upsample (align_corners=True), lane-dense matmuls.
# ---------------------------------------------------------------------------
def _bilinear_matrix(out_size, in_size):
    if in_size == 1:
        return jnp.ones((out_size, 1), jnp.float32)
    pos = jnp.arange(out_size, dtype=jnp.float32) * (in_size - 1) / (out_size - 1)
    lo = jnp.clip(jnp.floor(pos).astype(jnp.int32), 0, in_size - 2)
    frac = pos - lo.astype(jnp.float32)
    m = jnp.zeros((out_size, in_size), jnp.float32)
    rows = jnp.arange(out_size)
    m = m.at[rows, lo].add(1.0 - frac)
    m = m.at[rows, lo + 1].add(frac)
    return m


def bilinear_upsample(x_nhwc, ho, wo):
    n, h, w, c = x_nhwc.shape
    rh = _bilinear_matrix(ho, h)                             # (Ho, H)
    rw = _bilinear_matrix(wo, w)                             # (Wo, W)
    x = x_nhwc.astype(jnp.float32)
    # rows pass: (Ho, H) @ (H, W*N*C)   — W*N*C on lanes
    xm = jnp.transpose(x, (1, 2, 0, 3)).reshape(h, w * n * c)
    t = pallas_matmul_bias(rh, xm, jnp.zeros((w * n * c,), jnp.float32),
                           relu=False, compute_dtype=jnp.float32)
    # cols pass: (Wo, W) @ (W, Ho*N*C)  — Ho*N*C on lanes
    t = jnp.transpose(t.reshape(ho, w, n, c), (1, 0, 2, 3)).reshape(w, ho * n * c)
    y = pallas_matmul_bias(rw, t, jnp.zeros((ho * n * c,), jnp.float32),
                           relu=False, compute_dtype=jnp.float32)
    y = y.reshape(wo, ho, n, c)
    return jnp.transpose(y, (2, 1, 0, 3))                    # (N, Ho, Wo, C)


# ---------------------------------------------------------------------------
# Parameters (deterministic synthetic init; no checkpoint load)
# ---------------------------------------------------------------------------
def _conv_w(key, cout, cin, kh, kw):
    fan_in = cin * kh * kw
    return jax.random.normal(key, (cout, cin, kh, kw), jnp.float32) / jnp.sqrt(
        jnp.float32(fan_in))


def init_params(key, *, classes=1, enc=(16, 32, 64), aspp=32):
    ks = jax.random.split(key, 12)
    z = lambda ch: jnp.zeros((ch,), jnp.float32)
    p = {}
    p["enc1"] = (_conv_w(ks[0], enc[0], 3, 3, 3), z(enc[0]))
    p["enc2"] = (_conv_w(ks[1], enc[1], enc[0], 3, 3), z(enc[1]))
    p["enc3"] = (_conv_w(ks[2], enc[2], enc[1], 3, 3), z(enc[2]))
    p["aspp0"] = (_conv_w(ks[3], aspp, enc[2], 1, 1), z(aspp))
    p["aspp1"] = (_conv_w(ks[4], aspp, enc[2], 3, 3), z(aspp))
    p["aspp2"] = (_conv_w(ks[5], aspp, enc[2], 3, 3), z(aspp))
    p["aspp3"] = (_conv_w(ks[6], aspp, enc[2], 3, 3), z(aspp))
    p["aspp_pool"] = (_conv_w(ks[7], aspp, enc[2], 1, 1), z(aspp))
    p["aspp_proj"] = (_conv_w(ks[8], aspp, 5 * aspp, 1, 1), z(aspp))
    p["dec_conv"] = (_conv_w(ks[9], aspp, aspp, 3, 3), z(aspp))
    p["head"] = (_conv_w(ks[10], classes, aspp, 3, 3),
                 0.01 * jax.random.normal(ks[11], (classes,), jnp.float32))
    return p


# ---------------------------------------------------------------------------
# Forward pass (NCHW in, NCHW out — matches PyTorch)
# ---------------------------------------------------------------------------
def semantic_segmentation_forward(params, x_nchw):
    n, _, h_in, w_in = x_nchw.shape
    x = jnp.transpose(x_nchw, (0, 2, 3, 1)).astype(jnp.bfloat16)   # NHWC

    # encoder (output stride 8): stride-2 convs via im2col + Pallas matmul
    x = conv2d_im2col(x, *params["enc1"], stride=2, relu=True)
    x = conv2d_im2col(x, *params["enc2"], stride=2, relu=True)
    feats = conv2d_im2col(x, *params["enc3"], stride=2, relu=True)

    # ASPP: fused-tap Pallas convs (no im2col, no giant atrous halos)
    b0 = conv2d_fused(feats, *params["aspp0"], relu=True)
    b1 = conv2d_fused(feats, *params["aspp1"], dilation=12, relu=True)
    b2 = conv2d_fused(feats, *params["aspp2"], dilation=24, relu=True)
    b3 = conv2d_fused(feats, *params["aspp3"], dilation=36, relu=True)

    pooled = global_avg_pool(feats)                                # (N, C) f32
    wp, bp = params["aspp_pool"]
    wpm = jnp.transpose(wp[:, :, 0, 0], (1, 0))                    # (Cin, Cout)
    pooled = pallas_matmul_bias(pooled, wpm, bp, relu=True,
                                out_dtype=jnp.bfloat16)            # (N, aspp)
    b4 = jnp.broadcast_to(pooled[:, None, None, :], b0.shape)      # 1x1 -> HxW

    cat = jnp.concatenate([b0, b1, b2, b3, b4], axis=-1)
    y = conv2d_fused(cat, *params["aspp_proj"], relu=True)   # 1x1 proj (Dropout=id)
    y = conv2d_fused(y, *params["dec_conv"], relu=True)      # decoder 3x3

    # head (classes=1) + bilinear x8 upsample back to input resolution
    logits = conv2d_fused(y, *params["head"], relu=False, out_dtype=jnp.float32)
    logits = bilinear_upsample(logits, h_in, w_in)

    return jnp.transpose(logits, (0, 3, 1, 2))                     # NCHW


if __name__ == "__main__":
    key = jax.random.PRNGKey(0)
    pkey, xkey = jax.random.split(key)

    # classes=1 is hard-coded in the reference module (n_classes is ignored).
    params = init_params(pkey, classes=1)
    x = jax.random.normal(xkey, (2, 3, 16, 16), jnp.float32)        # NCHW

    fwd = jax.jit(semantic_segmentation_forward)
    out = jax.block_until_ready(fwd(params, x))

    assert out.shape == (2, 1, 16, 16), out.shape
    assert out.dtype == jnp.float32
    assert bool(jnp.all(jnp.isfinite(out)))
    print("KERNEL_OK")
</pallas_src>

<mosaic_0001>
module attributes {stable_mosaic.version = 11 : i64} {
  func.func private @main(%arg0: i32) attributes {dimension_semantics = [#tpu.dimension_semantics<core_parallel>], iteration_bounds = array<i64: 2>, tpu.core_type = #tpu.core_type<sc_scalar_subcore>, window_params = []} {
    return
  }
}

module attributes {stable_mosaic.version = 11 : i64} {
  func.func private @main(%arg0: i32) attributes {dimension_semantics = [#tpu.dimension_semantics<core_parallel>], iteration_bounds = array<i64: 2>, tpu.core_type = #tpu.core_type<sc_scalar_subcore>, window_params = []} {
    return
  }
}

module attributes {stable_mosaic.version = 11 : i64} {
  func.func @_matmul_bias_act_kernel(%arg0: i32, %arg1: memref<128x27xbf16, #tpu.memory_space<vmem>>, %arg2: memref<27x16xbf16, #tpu.memory_space<vmem>>, %arg3: memref<1x16xf32, #tpu.memory_space<vmem>>, %arg4: memref<128x16xbf16, #tpu.memory_space<vmem>>) attributes {dimension_semantics = [#tpu.dimension_semantics<parallel>], iteration_bounds = array<i64: 1>, scalar_prefetch = 0 : i64, scratch_operands = 0 : i64, tpu.core_type = #tpu.core_type<tc>, window_params = [{transform_indices = @transform_0, window_bounds = array<i64: 128, 27>}, {pipeline_mode = #tpu.pipeline_mode<synchronous>, transform_indices = @transform_1, window_bounds = array<i64: 27, 16>}, {pipeline_mode = #tpu.pipeline_mode<synchronous>, transform_indices = @transform_2, window_bounds = array<i64: 1, 16>}, {transform_indices = @transform_3, window_bounds = array<i64: 128, 16>}]} {
    %c0 = arith.constant 0 : index
    %c0_0 = arith.constant 0 : index
    %0 = vector.load %arg1[%c0, %c0_0] : memref<128x27xbf16, #tpu.memory_space<vmem>>, vector<128x27xbf16>
    %c0_1 = arith.constant 0 : index
    %c0_2 = arith.constant 0 : index
    %1 = vector.load %arg2[%c0_1, %c0_2] : memref<27x16xbf16, #tpu.memory_space<vmem>>, vector<27x16xbf16>
    %cst = arith.constant dense<0.000000e+00> : vector<128x16xf32>
    %2 = tpu.matmul %0, %1, %cst {dimension_numbers = #tpu.dot_dimension_numbers<[1], [0], [0], [1], [0, 0, 1, 1], [], []>} : vector<128x27xbf16>, vector<27x16xbf16>, vector<128x16xf32> -> vector<128x16xf32>
    %c0_3 = arith.constant 0 : index
    %c0_4 = arith.constant 0 : index
    %3 = vector.load %arg3[%c0_3, %c0_4] : memref<1x16xf32, #tpu.memory_space<vmem>>, vector<1x16xf32>
    %4 = vector.broadcast %3 : vector<1x16xf32> to vector<128x16xf32>
    %5 = arith.addf %2, %4 : vector<128x16xf32>
    %cst_5 = arith.constant 0.000000e+00 : f32
    %6 = vector.broadcast %cst_5 : f32 to vector<128x16xf32>
    %7 = arith.maximumf %5, %6 : vector<128x16xf32>
    %8 = arith.truncf %7 : vector<128x16xf32> to vector<128x16xbf16>
    %c0_6 = arith.constant 0 : index
    %c0_7 = arith.constant 0 : index
    %9 = vector.load %arg4[%c0_6, %c0_7] : memref<128x16xbf16, #tpu.memory_space<vmem>>, vector<128x16xbf16>
    tpu.vector_store %arg4[%c0_6, %c0_7], %8 {strides = array<i32>} : memref<128x16xbf16, #tpu.memory_space<vmem>>, vector<128x16xbf16>,
    return
  }
  func.func @transform_0(%arg0: i32) -> (i32, i32) {
    %c0_i32 = arith.constant 0 : i32
    %c0_i32_0 = arith.constant 0 : i32
    return %arg0, %c0_i32 : i32, i32
  }
  func.func @transform_1(%arg0: i32) -> (i32, i32) {
    %c0_i32 = arith.constant 0 : i32
    %c0_i32_0 = arith.constant 0 : i32
    %c0_i32_1 = arith.constant 0 : i32
    return %c0_i32, %c0_i32_0 : i32, i32
  }
  func.func @transform_2(%arg0: i32) -> (i32, i32) {
    %c0_i32 = arith.constant 0 : i32
    %c0_i32_0 = arith.constant 0 : i32
    %c0_i32_1 = arith.constant 0 : i32
    return %c0_i32, %c0_i32_0 : i32, i32
  }
  func.func @transform_3(%arg0: i32) -> (i32, i32) {
    %c0_i32 = arith.constant 0 : i32
    %c0_i32_0 = arith.constant 0 : i32
    return %arg0, %c0_i32 : i32, i32
  }
}

module attributes {stable_mosaic.version = 11 : i64} {
  func.func @_matmul_bias_act_kernel(%arg0: i32, %arg1: memref<32x144xbf16, #tpu.memory_space<vmem>>, %arg2: memref<144x32xbf16, #tpu.memory_space<vmem>>, %arg3: memref<1x32xf32, #tpu.memory_space<vmem>>, %arg4: memref<32x32xbf16, #tpu.memory_space<vmem>>) attributes {dimension_semantics = [#tpu.dimension_semantics<parallel>], iteration_bounds = array<i64: 1>, scalar_prefetch = 0 : i64, scratch_operands = 0 : i64, tpu.core_type = #tpu.core_type<tc>, window_params = [{transform_indices = @transform_0, window_bounds = array<i64: 32, 144>}, {pipeline_mode = #tpu.pipeline_mode<synchronous>, transform_indices = @transform_1, window_bounds = array<i64: 144, 32>}, {pipeline_mode = #tpu.pipeline_mode<synchronous>, transform_indices = @transform_2, window_bounds = array<i64: 1, 32>}, {transform_indices = @transform_3, window_bounds = array<i64: 32, 32>}]} {
    %c0 = arith.constant 0 : index
    %c0_0 = arith.constant 0 : index
    %0 = vector.load %arg1[%c0, %c0_0] : memref<32x144xbf16, #tpu.memory_space<vmem>>, vector<32x144xbf16>
    %c0_1 = arith.constant 0 : index
    %c0_2 = arith.constant 0 : index
    %1 = vector.load %arg2[%c0_1, %c0_2] : memref<144x32xbf16, #tpu.memory_space<vmem>>, vector<144x32xbf16>
    %cst = arith.constant dense<0.000000e+00> : vector<32x32xf32>
    %2 = tpu.matmul %0, %1, %cst {dimension_numbers = #tpu.dot_dimension_numbers<[1], [0], [0], [1], [0, 0, 1, 1], [], []>} : vector<32x144xbf16>, vector<144x32xbf16>, vector<32x32xf32> -> vector<32x32xf32>
    %c0_3 = arith.constant 0 : index
    %c0_4 = arith.constant 0 : index
    %3 = vector.load %arg3[%c0_3, %c0_4] : memref<1x32xf32, #tpu.memory_space<vmem>>, vector<1x32xf32>
    %4 = vector.broadcast %3 : vector<1x32xf32> to vector<32x32xf32>
    %5 = arith.addf %2, %4 : vector<32x32xf32>
    %cst_5 = arith.constant 0.000000e+00 : f32
    %6 = vector.broadcast %cst_5 : f32 to vector<32x32xf32>
    %7 = arith.maximumf %5, %6 : vector<32x32xf32>
    %8 = arith.truncf %7 : vector<32x32xf32> to vector<32x32xbf16>
    %c0_6 = arith.constant 0 : index
    %c0_7 = arith.constant 0 : index
    %9 = vector.load %arg4[%c0_6, %c0_7] : memref<32x32xbf16, #tpu.memory_space<vmem>>, vector<32x32xbf16>
    tpu.vector_store %arg4[%c0_6, %c0_7], %8 {strides = array<i32>} : memref<32x32xbf16, #tpu.memory_space<vmem>>, vector<32x32xbf16>,
    return
  }
  func.func @transform_0(%arg0: i32) -> (i32, i32) {
    %c0_i32 = arith.constant 0 : i32
    %c0_i32_0 = arith.constant 0 : i32
    return %arg0, %c0_i32 : i32, i32
  }
  func.func @transform_1(%arg0: i32) -> (i32, i32) {
    %c0_i32 = arith.constant 0 : i32
    %c0_i32_0 = arith.constant 0 : i32
    %c0_i32_1 = arith.constant 0 : i32
    return %c0_i32, %c0_i32_0 : i32, i32
  }
  func.func @transform_2(%arg0: i32) -> (i32, i32) {
    %c0_i32 = arith.constant 0 : i32
    %c0_i32_0 = arith.constant 0 : i32
    %c0_i32_1 = arith.constant 0 : i32
    return %c0_i32, %c0_i32_0 : i32, i32
  }
  func.func @transform_3(%arg0: i32) -> (i32, i32) {
    %c0_i32 = arith.constant 0 : i32
    %c0_i32_0 = arith.constant 0 : i32
    return %arg0, %c0_i32 : i32, i32
  }
}

module attributes {stable_mosaic.version = 11 : i64} {
  func.func @_gap_kernel(%arg0: i32, %arg1: memref<2x4x64xbf16, #tpu.memory_space<vmem>>, %arg2: memref<2x64xf32, #tpu.memory_space<vmem>>) attributes {dimension_semantics = [#tpu.dimension_semantics<arbitrary>], iteration_bounds = array<i64: 1>, scalar_prefetch = 0 : i64, scratch_operands = 0 : i64, tpu.core_type = #tpu.core_type<tc>, window_params = [{transform_indices = @transform_0, window_bounds = array<i64: 2, 4, 64>}, {pipeline_mode = #tpu.pipeline_mode<synchronous>, transform_indices = @transform_1, window_bounds = array<i64: 2, 64>}]} {
    %c0_i32 = arith.constant 0 : i32
    %0 = arith.cmpi eq, %arg0, %c0_i32 : i32
    %1 = arith.extui %0 : i1 to i32
    %c0_i32_0 = arith.constant 0 : i32
    %2 = arith.cmpi ne, %1, %c0_i32_0 : i32
    scf.if %2 {
      %cst_9 = arith.constant 0.000000e+00 : f32
      %12 = vector.broadcast %cst_9 : f32 to vector<2x64xf32>
      %c0_10 = arith.constant 0 : index
      %c0_11 = arith.constant 0 : index
      %13 = vector.load %arg2[%c0_10, %c0_11] : memref<2x64xf32, #tpu.memory_space<vmem>>, vector<2x64xf32>
      tpu.vector_store %arg2[%c0_10, %c0_11], %12 {strides = array<i32>} : memref<2x64xf32, #tpu.memory_space<vmem>>, vector<2x64xf32>,
    } else {
    }
    %c0 = arith.constant 0 : index
    %c0_1 = arith.constant 0 : index
    %3 = vector.load %arg2[%c0, %c0_1] : memref<2x64xf32, #tpu.memory_space<vmem>>, vector<2x64xf32>
    %c0_2 = arith.constant 0 : index
    %c0_3 = arith.constant 0 : index
    %c0_4 = arith.constant 0 : index
    %4 = vector.load %arg1[%c0_2, %c0_3, %c0_4] : memref<2x4x64xbf16, #tpu.memory_space<vmem>>, vector<2x4x64xbf16>
    %5 = arith.extf %4 : vector<2x4x64xbf16> to vector<2x4x64xf32>
    %cst = arith.constant dense<0.000000e+00> : vector<2x64xf32>
    %6 = vector.multi_reduction <add>, %5, %cst [1] : vector<2x4x64xf32> to vector<2x64xf32>
    %7 = arith.addf %3, %6 : vector<2x64xf32>
    %c0_5 = arith.constant 0 : index
    %c0_6 = arith.constant 0 : index
    %8 = vector.load %arg2[%c0_5, %c0_6] : memref<2x64xf32, #tpu.memory_space<vmem>>, vector<2x64xf32>
    tpu.vector_store %arg2[%c0_5, %c0_6], %7 {strides = array<i32>} : memref<2x64xf32, #tpu.memory_space<vmem>>, vector<2x64xf32>,
    %c0_i32_7 = arith.constant 0 : i32
    %9 = arith.cmpi eq, %arg0, %c0_i32_7 : i32
    %10 = arith.extui %9 : i1 to i32
    %c0_i32_8 = arith.constant 0 : i32
    %11 = arith.cmpi ne, %10, %c0_i32_8 : i32
    scf.if %11 {
      %c0_9 = arith.constant 0 : index
      %c0_10 = arith.constant 0 : index
      %12 = vector.load %arg2[%c0_9, %c0_10] : memref<2x64xf32, #tpu.memory_space<vmem>>, vector<2x64xf32>
      %cst_11 = arith.constant 2.500000e-01 : f32
      %13 = vector.broadcast %cst_11 : f32 to vector<2x64xf32>
      %14 = arith.mulf %12, %13 : vector<2x64xf32>
      %c0_12 = arith.constant 0 : index
      %c0_13 = arith.constant 0 : index
      %15 = vector.load %arg2[%c0_12, %c0_13] : memref<2x64xf32, #tpu.memory_space<vmem>>, vector<2x64xf32>
      tpu.vector_store %arg2[%c0_12, %c0_13], %14 {strides = array<i32>} : memref<2x64xf32, #tpu.memory_space<vmem>>, vector<2x64xf32>,
    } else {
    }
    return
  }
  func.func @transform_0(%arg0: i32) -> (i32, i32, i32) {
    %c0_i32 = arith.constant 0 : i32
    %c0_i32_0 = arith.constant 0 : i32
    %c0_i32_1 = arith.constant 0 : i32
    return %c0_i32, %arg0, %c0_i32_0 : i32, i32, i32
  }
  func.func @transform_1(%arg0: i32) -> (i32, i32) {
    %c0_i32 = arith.constant 0 : i32
    %c0_i32_0 = arith.constant 0 : i32
    %c0_i32_1 = arith.constant 0 : i32
    return %c0_i32, %c0_i32_0 : i32, i32
  }
}

module attributes {stable_mosaic.version = 11 : i64} {
  func.func @_matmul_bias_act_kernel(%arg0: i32, %arg1: memref<8x288xbf16, #tpu.memory_space<vmem>>, %arg2: memref<288x64xbf16, #tpu.memory_space<vmem>>, %arg3: memref<1x64xf32, #tpu.memory_space<vmem>>, %arg4: memref<8x64xbf16, #tpu.memory_space<vmem>>) attributes {dimension_semantics = [#tpu.dimension_semantics<parallel>], iteration_bounds = array<i64: 1>, scalar_prefetch = 0 : i64, scratch_operands = 0 : i64, tpu.core_type = #tpu.core_type<tc>, window_params = [{transform_indices = @transform_0, window_bounds = array<i64: 8, 288>}, {pipeline_mode = #tpu.pipeline_mode<synchronous>, transform_indices = @transform_1, window_bounds = array<i64: 288, 64>}, {pipeline_mode = #tpu.pipeline_mode<synchronous>, transform_indices = @transform_2, window_bounds = array<i64: 1, 64>}, {transform_indices = @transform_3, window_bounds = array<i64: 8, 64>}]} {
    %c0 = arith.constant 0 : index
    %c0_0 = arith.constant 0 : index
    %0 = vector.load %arg1[%c0, %c0_0] : memref<8x288xbf16, #tpu.memory_space<vmem>>, vector<8x288xbf16>
    %c0_1 = arith.constant 0 : index
    %c0_2 = arith.constant 0 : index
    %1 = vector.load %arg2[%c0_1, %c0_2] : memref<288x64xbf16, #tpu.memory_space<vmem>>, vector<288x64xbf16>
    %cst = arith.constant dense<0.000000e+00> : vector<8x64xf32>
    %2 = tpu.matmul %0, %1, %cst {dimension_numbers = #tpu.dot_dimension_numbers<[1], [0], [0], [1], [0, 0, 1, 1], [], []>} : vector<8x288xbf16>, vector<288x64xbf16>, vector<8x64xf32> -> vector<8x64xf32>
    %c0_3 = arith.constant 0 : index
    %c0_4 = arith.constant 0 : index
    %3 = vector.load %arg3[%c0_3, %c0_4] : memref<1x64xf32, #tpu.memory_space<vmem>>, vector<1x64xf32>
    %4 = vector.broadcast %3 : vector<1x64xf32> to vector<8x64xf32>
    %5 = arith.addf %2, %4 : vector<8x64xf32>
    %cst_5 = arith.constant 0.000000e+00 : f32
    %6 = vector.broadcast %cst_5 : f32 to vector<8x64xf32>
    %7 = arith.maximumf %5, %6 : vector<8x64xf32>
    %8 = arith.truncf %7 : vector<8x64xf32> to vector<8x64xbf16>
    %c0_6 = arith.constant 0 : index
    %c0_7 = arith.constant 0 : index
    %9 = vector.load %arg4[%c0_6, %c0_7] : memref<8x64xbf16, #tpu.memory_space<vmem>>, vector<8x64xbf16>
    tpu.vector_store %arg4[%c0_6, %c0_7], %8 {strides = array<i32>} : memref<8x64xbf16, #tpu.memory_space<vmem>>, vector<8x64xbf16>,
    return
  }
  func.func @transform_0(%arg0: i32) -> (i32, i32) {
    %c0_i32 = arith.constant 0 : i32
    %c0_i32_0 = arith.constant 0 : i32
    return %arg0, %c0_i32 : i32, i32
  }
  func.func @transform_1(%arg0: i32) -> (i32, i32) {
    %c0_i32 = arith.constant 0 : i32
    %c0_i32_0 = arith.constant 0 : i32
    %c0_i32_1 = arith.constant 0 : i32
    return %c0_i32, %c0_i32_0 : i32, i32
  }
  func.func @transform_2(%arg0: i32) -> (i32, i32) {
    %c0_i32 = arith.constant 0 : i32
    %c0_i32_0 = arith.constant 0 : i32
    %c0_i32_1 = arith.constant 0 : i32
    return %c0_i32, %c0_i32_0 : i32, i32
  }
  func.func @transform_3(%arg0: i32) -> (i32, i32) {
    %c0_i32 = arith.constant 0 : i32
    %c0_i32_0 = arith.constant 0 : i32
    return %arg0, %c0_i32 : i32, i32
  }
}

module attributes {stable_mosaic.version = 11 : i64} {
  func.func @_conv_taps_kernel(%arg0: i32, %arg1: memref<1x2x2x64xbf16, #tpu.memory_space<vmem>>, %arg2: memref<1x64x32xbf16, #tpu.memory_space<vmem>>, %arg3: memref<1x32xf32, #tpu.memory_space<vmem>>, %arg4: memref<1x2x2x32xbf16, #tpu.memory_space<vmem>>) attributes {dimension_semantics = [#tpu.dimension_semantics<parallel>], iteration_bounds = array<i64: 2>, scalar_prefetch = 0 : i64, scratch_operands = 0 : i64, tpu.core_type = #tpu.core_type<tc>, window_params = [{transform_indices = @transform_0, window_bounds = array<i64: 1, 2, 2, 64>}, {pipeline_mode = #tpu.pipeline_mode<synchronous>, transform_indices = @transform_1, window_bounds = array<i64: 1, 64, 32>}, {pipeline_mode = #tpu.pipeline_mode<synchronous>, transform_indices = @transform_2, window_bounds = array<i64: 1, 32>}, {transform_indices = @transform_3, window_bounds = array<i64: 1, 2, 2, 32>}]} {
    %c0 = arith.constant 0 : index
    %c0_0 = arith.constant 0 : index
    %c0_1 = arith.constant 0 : index
    %c0_2 = arith.constant 0 : index
    %0 = vector.load %arg1[%c0, %c0_0, %c0_1, %c0_2] : memref<1x2x2x64xbf16, #tpu.memory_space<vmem>>, vector<1x2x2x64xbf16>
    %1 = vector.shape_cast %0 : vector<1x2x2x64xbf16> to vector<2x2x64xbf16>
    %2 = arith.extf %1 : vector<2x2x64xbf16> to vector<2x2x64xf32>
    %cst = arith.constant 0.000000e+00 : f32
    %3 = vector.broadcast %cst : f32 to vector<4x32xf32>
    %4 = vector.extract_strided_slice %2 {offsets = [0, 0, 0], sizes = [2, 2, 64], strides = [1, 1, 1]} : vector<2x2x64xf32> to vector<2x2x64xf32>
    %5 = vector.shape_cast %4 : vector<2x2x64xf32> to vector<4x64xf32>
    %6 = arith.truncf %5 : vector<4x64xf32> to vector<4x64xbf16>
    %c0_3 = arith.constant 0 : index
    %c0_4 = arith.constant 0 : index
    %c0_5 = arith.constant 0 : index
    %7 = vector.load %arg2[%c0_3, %c0_4, %c0_5] : memref<1x64x32xbf16, #tpu.memory_space<vmem>>, vector<1x64x32xbf16>
    %8 = vector.shape_cast %7 : vector<1x64x32xbf16> to vector<64x32xbf16>
    %cst_6 = arith.constant dense<0.000000e+00> : vector<4x32xf32>
    %9 = tpu.matmul %6, %8, %cst_6 {dimension_numbers = #tpu.dot_dimension_numbers<[1], [0], [0], [1], [0, 0, 1, 1], [], []>} : vector<4x64xbf16>, vector<64x32xbf16>, vector<4x32xf32> -> vector<4x32xf32>
    %10 = arith.addf %3, %9 : vector<4x32xf32>
    %c0_7 = arith.constant 0 : index
    %c0_8 = arith.constant 0 : index
    %11 = vector.load %arg3[%c0_7, %c0_8] : memref<1x32xf32, #tpu.memory_space<vmem>>, vector<1x32xf32>
    %12 = vector.broadcast %11 : vector<1x32xf32> to vector<4x32xf32>
    %13 = arith.addf %10, %12 : vector<4x32xf32>
    %cst_9 = arith.constant 0.000000e+00 : f32
    %14 = vector.broadcast %cst_9 : f32 to vector<4x32xf32>
    %15 = arith.maximumf %13, %14 : vector<4x32xf32>
    %16 = vector.shape_cast %15 : vector<4x32xf32> to vector<1x2x2x32xf32>
    %17 = arith.truncf %16 : vector<1x2x2x32xf32> to vector<1x2x2x32xbf16>
    %c0_10 = arith.constant 0 : index
    %c0_11 = arith.constant 0 : index
    %c0_12 = arith.constant 0 : index
    %c0_13 = arith.constant 0 : index
    %18 = vector.load %arg4[%c0_10, %c0_11, %c0_12, %c0_13] : memref<1x2x2x32xbf16, #tpu.memory_space<vmem>>, vector<1x2x2x32xbf16>
    tpu.vector_store %arg4[%c0_10, %c0_11, %c0_12, %c0_13], %17 {strides = array<i32>} : memref<1x2x2x32xbf16, #tpu.memory_space<vmem>>, vector<1x2x2x32xbf16>,
    return
  }
  func.func @transform_0(%arg0: i32) -> (i32, i32, i32, i32) {
    %c0_i32 = arith.constant 0 : i32
    %c0_i32_0 = arith.constant 0 : i32
    %c0_i32_1 = arith.constant 0 : i32
    %c0_i32_2 = arith.constant 0 : i32
    return %arg0, %c0_i32, %c0_i32_0, %c0_i32_1 : i32, i32, i32, i32
  }
  func.func @transform_1(%arg0: i32) -> (i32, i32, i32) {
    %c0_i32 = arith.constant 0 : i32
    %c0_i32_0 = arith.constant 0 : i32
    %c0_i32_1 = arith.constant 0 : i32
    %c0_i32_2 = arith.constant 0 : i32
    return %c0_i32, %c0_i32_0, %c0_i32_1 : i32, i32, i32
  }
  func.func @transform_2(%arg0: i32) -> (i32, i32) {
    %c0_i32 = arith.constant 0 : i32
    %c0_i32_0 = arith.constant 0 : i32
    %c0_i32_1 = arith.constant 0 : i32
    return %c0_i32, %c0_i32_0 : i32, i32
  }
  func.func @transform_3(%arg0: i32) -> (i32, i32, i32, i32) {
    %c0_i32 = arith.constant 0 : i32
    %c0_i32_0 = arith.constant 0 : i32
    %c0_i32_1 = arith.constant 0 : i32
    %c0_i32_2 = arith.constant 0 : i32
    return %arg0, %c0_i32, %c0_i32_0, %c0_i32_1 : i32, i32, i32, i32
  }
}

module attributes {stable_mosaic.version = 11 : i64} {
  func.func @_matmul_bias_act_kernel(%arg0: i32, %arg1: memref<2x64xbf16, #tpu.memory_space<vmem>>, %arg2: memref<64x32xbf16, #tpu.memory_space<vmem>>, %arg3: memref<1x32xf32, #tpu.memory_space<vmem>>, %arg4: memref<2x32xbf16, #tpu.memory_space<vmem>>) attributes {dimension_semantics = [#tpu.dimension_semantics<parallel>], iteration_bounds = array<i64: 1>, scalar_prefetch = 0 : i64, scratch_operands = 0 : i64, tpu.core_type = #tpu.core_type<tc>, window_params = [{transform_indices = @transform_0, window_bounds = array<i64: 2, 64>}, {pipeline_mode = #tpu.pipeline_mode<synchronous>, transform_indices = @transform_1, window_bounds = array<i64: 64, 32>}, {pipeline_mode = #tpu.pipeline_mode<synchronous>, transform_indices = @transform_2, window_bounds = array<i64: 1, 32>}, {transform_indices = @transform_3, window_bounds = array<i64: 2, 32>}]} {
    %c0 = arith.constant 0 : index
    %c0_0 = arith.constant 0 : index
    %0 = vector.load %arg1[%c0, %c0_0] : memref<2x64xbf16, #tpu.memory_space<vmem>>, vector<2x64xbf16>
    %c0_1 = arith.constant 0 : index
    %c0_2 = arith.constant 0 : index
    %1 = vector.load %arg2[%c0_1, %c0_2] : memref<64x32xbf16, #tpu.memory_space<vmem>>, vector<64x32xbf16>
    %cst = arith.constant dense<0.000000e+00> : vector<2x32xf32>
    %2 = tpu.matmul %0, %1, %cst {dimension_numbers = #tpu.dot_dimension_numbers<[1], [0], [0], [1], [0, 0, 1, 1], [], []>} : vector<2x64xbf16>, vector<64x32xbf16>, vector<2x32xf32> -> vector<2x32xf32>
    %c0_3 = arith.constant 0 : index
    %c0_4 = arith.constant 0 : index
    %3 = vector.load %arg3[%c0_3, %c0_4] : memref<1x32xf32, #tpu.memory_space<vmem>>, vector<1x32xf32>
    %4 = vector.broadcast %3 : vector<1x32xf32> to vector<2x32xf32>
    %5 = arith.addf %2, %4 : vector<2x32xf32>
    %cst_5 = arith.constant 0.000000e+00 : f32
    %6 = vector.broadcast %cst_5 : f32 to vector<2x32xf32>
    %7 = arith.maximumf %5, %6 : vector<2x32xf32>
    %8 = arith.truncf %7 : vector<2x32xf32> to vector<2x32xbf16>
    %c0_6 = arith.constant 0 : index
    %c0_7 = arith.constant 0 : index
    %9 = vector.load %arg4[%c0_6, %c0_7] : memref<2x32xbf16, #tpu.memory_space<vmem>>, vector<2x32xbf16>
    tpu.vector_store %arg4[%c0_6, %c0_7], %8 {strides = array<i32>} : memref<2x32xbf16, #tpu.memory_space<vmem>>, vector<2x32xbf16>,
    return
  }
  func.func @transform_0(%arg0: i32) -> (i32, i32) {
    %c0_i32 = arith.constant 0 : i32
    %c0_i32_0 = arith.constant 0 : i32
    return %arg0, %c0_i32 : i32, i32
  }
  func.func @transform_1(%arg0: i32) -> (i32, i32) {
    %c0_i32 = arith.constant 0 : i32
    %c0_i32_0 = arith.constant 0 : i32
    %c0_i32_1 = arith.constant 0 : i32
    return %c0_i32, %c0_i32_0 : i32, i32
  }
  func.func @transform_2(%arg0: i32) -> (i32, i32) {
    %c0_i32 = arith.constant 0 : i32
    %c0_i32_0 = arith.constant 0 : i32
    %c0_i32_1 = arith.constant 0 : i32
    return %c0_i32, %c0_i32_0 : i32, i32
  }
  func.func @transform_3(%arg0: i32) -> (i32, i32) {
    %c0_i32 = arith.constant 0 : i32
    %c0_i32_0 = arith.constant 0 : i32
    return %arg0, %c0_i32 : i32, i32
  }
}

module attributes {stable_mosaic.version = 11 : i64} {
  func.func @_conv_taps_kernel(%arg0: i32, %arg1: memref<1x2x2x160xbf16, #tpu.memory_space<vmem>>, %arg2: memref<1x160x32xbf16, #tpu.memory_space<vmem>>, %arg3: memref<1x32xf32, #tpu.memory_space<vmem>>, %arg4: memref<1x2x2x32xbf16, #tpu.memory_space<vmem>>) attributes {dimension_semantics = [#tpu.dimension_semantics<parallel>], iteration_bounds = array<i64: 2>, scalar_prefetch = 0 : i64, scratch_operands = 0 : i64, tpu.core_type = #tpu.core_type<tc>, window_params = [{transform_indices = @transform_0, window_bounds = array<i64: 1, 2, 2, 160>}, {pipeline_mode = #tpu.pipeline_mode<synchronous>, transform_indices = @transform_1, window_bounds = array<i64: 1, 160, 32>}, {pipeline_mode = #tpu.pipeline_mode<synchronous>, transform_indices = @transform_2, window_bounds = array<i64: 1, 32>}, {transform_indices = @transform_3, window_bounds = array<i64: 1, 2, 2, 32>}]} {
    %c0 = arith.constant 0 : index
    %c0_0 = arith.constant 0 : index
    %c0_1 = arith.constant 0 : index
    %c0_2 = arith.constant 0 : index
    %0 = vector.load %arg1[%c0, %c0_0, %c0_1, %c0_2] : memref<1x2x2x160xbf16, #tpu.memory_space<vmem>>, vector<1x2x2x160xbf16>
    %1 = vector.shape_cast %0 : vector<1x2x2x160xbf16> to vector<2x2x160xbf16>
    %2 = arith.extf %1 : vector<2x2x160xbf16> to vector<2x2x160xf32>
    %cst = arith.constant 0.000000e+00 : f32
    %3 = vector.broadcast %cst : f32 to vector<4x32xf32>
    %4 = vector.extract_strided_slice %2 {offsets = [0, 0, 0], sizes = [2, 2, 160], strides = [1, 1, 1]} : vector<2x2x160xf32> to vector<2x2x160xf32>
    %5 = vector.shape_cast %4 : vector<2x2x160xf32> to vector<4x160xf32>
    %6 = arith.truncf %5 : vector<4x160xf32> to vector<4x160xbf16>
    %c0_3 = arith.constant 0 : index
    %c0_4 = arith.constant 0 : index
    %c0_5 = arith.constant 0 : index
    %7 = vector.load %arg2[%c0_3, %c0_4, %c0_5] : memref<1x160x32xbf16, #tpu.memory_space<vmem>>, vector<1x160x32xbf16>
    %8 = vector.shape_cast %7 : vector<1x160x32xbf16> to vector<160x32xbf16>
    %cst_6 = arith.constant dense<0.000000e+00> : vector<4x32xf32>
    %9 = tpu.matmul %6, %8, %cst_6 {dimension_numbers = #tpu.dot_dimension_numbers<[1], [0], [0], [1], [0, 0, 1, 1], [], []>} : vector<4x160xbf16>, vector<160x32xbf16>, vector<4x32xf32> -> vector<4x32xf32>
    %10 = arith.addf %3, %9 : vector<4x32xf32>
    %c0_7 = arith.constant 0 : index
    %c0_8 = arith.constant 0 : index
    %11 = vector.load %arg3[%c0_7, %c0_8] : memref<1x32xf32, #tpu.memory_space<vmem>>, vector<1x32xf32>
    %12 = vector.broadcast %11 : vector<1x32xf32> to vector<4x32xf32>
    %13 = arith.addf %10, %12 : vector<4x32xf32>
    %cst_9 = arith.constant 0.000000e+00 : f32
    %14 = vector.broadcast %cst_9 : f32 to vector<4x32xf32>
    %15 = arith.maximumf %13, %14 : vector<4x32xf32>
    %16 = vector.shape_cast %15 : vector<4x32xf32> to vector<1x2x2x32xf32>
    %17 = arith.truncf %16 : vector<1x2x2x32xf32> to vector<1x2x2x32xbf16>
    %c0_10 = arith.constant 0 : index
    %c0_11 = arith.constant 0 : index
    %c0_12 = arith.constant 0 : index
    %c0_13 = arith.constant 0 : index
    %18 = vector.load %arg4[%c0_10, %c0_11, %c0_12, %c0_13] : memref<1x2x2x32xbf16, #tpu.memory_space<vmem>>, vector<1x2x2x32xbf16>
    tpu.vector_store %arg4[%c0_10, %c0_11, %c0_12, %c0_13], %17 {strides = array<i32>} : memref<1x2x2x32xbf16, #tpu.memory_space<vmem>>, vector<1x2x2x32xbf16>,
    return
  }
  func.func @transform_0(%arg0: i32) -> (i32, i32, i32, i32) {
    %c0_i32 = arith.constant 0 : i32
    %c0_i32_0 = arith.constant 0 : i32
    %c0_i32_1 = arith.constant 0 : i32
    %c0_i32_2 = arith.constant 0 : i32
    return %arg0, %c0_i32, %c0_i32_0, %c0_i32_1 : i32, i32, i32, i32
  }
  func.func @transform_1(%arg0: i32) -> (i32, i32, i32) {
    %c0_i32 = arith.constant 0 : i32
    %c0_i32_0 = arith.constant 0 : i32
    %c0_i32_1 = arith.constant 0 : i32
    %c0_i32_2 = arith.constant 0 : i32
    return %c0_i32, %c0_i32_0, %c0_i32_1 : i32, i32, i32
  }
  func.func @transform_2(%arg0: i32) -> (i32, i32) {
    %c0_i32 = arith.constant 0 : i32
    %c0_i32_0 = arith.constant 0 : i32
    %c0_i32_1 = arith.constant 0 : i32
    return %c0_i32, %c0_i32_0 : i32, i32
  }
  func.func @transform_3(%arg0: i32) -> (i32, i32, i32, i32) {
    %c0_i32 = arith.constant 0 : i32
    %c0_i32_0 = arith.constant 0 : i32
    %c0_i32_1 = arith.constant 0 : i32
    %c0_i32_2 = arith.constant 0 : i32
    return %arg0, %c0_i32, %c0_i32_0, %c0_i32_1 : i32, i32, i32, i32
  }
}

module attributes {stable_mosaic.version = 11 : i64} {
  func.func @_conv_taps_kernel(%arg0: i32, %arg1: memref<1x4x4x32xbf16, #tpu.memory_space<vmem>>, %arg2: memref<9x32x32xbf16, #tpu.memory_space<vmem>>, %arg3: memref<1x32xf32, #tpu.memory_space<vmem>>, %arg4: memref<1x2x2x32xbf16, #tpu.memory_space<vmem>>) attributes {dimension_semantics = [#tpu.dimension_semantics<parallel>], iteration_bounds = array<i64: 2>, scalar_prefetch = 0 : i64, scratch_operands = 0 : i64, tpu.core_type = #tpu.core_type<tc>, window_params = [{transform_indices = @transform_0, window_bounds = array<i64: 1, 4, 4, 32>}, {pipeline_mode = #tpu.pipeline_mode<synchronous>, transform_indices = @transform_1, window_bounds = array<i64: 9, 32, 32>}, {pipeline_mode = #tpu.pipeline_mode<synchronous>, transform_indices = @transform_2, window_bounds = array<i64: 1, 32>}, {transform_indices = @transform_3, window_bounds = array<i64: 1, 2, 2, 32>}]} {
    %c0 = arith.constant 0 : index
    %c0_0 = arith.constant 0 : index
    %c0_1 = arith.constant 0 : index
    %c0_2 = arith.constant 0 : index
    %0 = vector.load %arg1[%c0, %c0_0, %c0_1, %c0_2] : memref<1x4x4x32xbf16, #tpu.memory_space<vmem>>, vector<1x4x4x32xbf16>
    %1 = vector.shape_cast %0 : vector<1x4x4x32xbf16> to vector<4x4x32xbf16>
    %2 = arith.extf %1 : vector<4x4x32xbf16> to vector<4x4x32xf32>
    %cst = arith.constant 0.000000e+00 : f32
    %3 = vector.broadcast %cst : f32 to vector<4x32xf32>
    %4 = vector.extract_strided_slice %2 {offsets = [0, 0, 0], sizes = [2, 2, 32], strides = [1, 1, 1]} : vector<4x4x32xf32> to vector<2x2x32xf32>
    %5 = vector.shape_cast %4 : vector<2x2x32xf32> to vector<4x32xf32>
    %6 = arith.truncf %5 : vector<4x32xf32> to vector<4x32xbf16>
    %c0_3 = arith.constant 0 : index
    %c0_4 = arith.constant 0 : index
    %c0_5 = arith.constant 0 : index
    %7 = vector.load %arg2[%c0_3, %c0_4, %c0_5] : memref<9x32x32xbf16, #tpu.memory_space<vmem>>, vector<1x32x32xbf16>
    %8 = vector.shape_cast %7 : vector<1x32x32xbf16> to vector<32x32xbf16>
    %cst_6 = arith.constant dense<0.000000e+00> : vector<4x32xf32>
    %9 = tpu.matmul %6, %8, %cst_6 {dimension_numbers = #tpu.dot_dimension_numbers<[1], [0], [0], [1], [0, 0, 1, 1], [], []>} : vector<4x32xbf16>, vector<32x32xbf16>, vector<4x32xf32> -> vector<4x32xf32>
    %10 = arith.addf %3, %9 : vector<4x32xf32>
    %11 = vector.extract_strided_slice %2 {offsets = [0, 1, 0], sizes = [2, 2, 32], strides = [1, 1, 1]} : vector<4x4x32xf32> to vector<2x2x32xf32>
    %12 = vector.shape_cast %11 : vector<2x2x32xf32> to vector<4x32xf32>
    %13 = arith.truncf %12 : vector<4x32xf32> to vector<4x32xbf16>
    %c1 = arith.constant 1 : index
    %c0_7 = arith.constant 0 : index
    %c0_8 = arith.constant 0 : index
    %14 = vector.load %arg2[%c1, %c0_7, %c0_8] : memref<9x32x32xbf16, #tpu.memory_space<vmem>>, vector<1x32x32xbf16>
    %15 = vector.shape_cast %14 : vector<1x32x32xbf16> to vector<32x32xbf16>
    %cst_9 = arith.constant dense<0.000000e+00> : vector<4x32xf32>
    %16 = tpu.matmul %13, %15, %cst_9 {dimension_numbers = #tpu.dot_dimension_numbers<[1], [0], [0], [1], [0, 0, 1, 1], [], []>} : vector<4x32xbf16>, vector<32x32xbf16>, vector<4x32xf32> -> vector<4x32xf32>
    %17 = arith.addf %10, %16 : vector<4x32xf32>
    %18 = vector.extract_strided_slice %2 {offsets = [0, 2, 0], sizes = [2, 2, 32], strides = [1, 1, 1]} : vector<4x4x32xf32> to vector<2x2x32xf32>
    %19 = vector.shape_cast %18 : vector<2x2x32xf32> to vector<4x32xf32>
    %20 = arith.truncf %19 : vector<4x32xf32> to vector<4x32xbf16>
    %c2 = arith.constant 2 : index
    %c0_10 = arith.constant 0 : index
    %c0_11 = arith.constant 0 : index
    %21 = vector.load %arg2[%c2, %c0_10, %c0_11] : memref<9x32x32xbf16, #tpu.memory_space<vmem>>, vector<1x32x32xbf16>
    %22 = vector.shape_cast %21 : vector<1x32x32xbf16> to vector<32x32xbf16>
    %cst_12 = arith.constant dense<0.000000e+00> : vector<4x32xf32>
    %23 = tpu.matmul %20, %22, %cst_12 {dimension_numbers = #tpu.dot_dimension_numbers<[1], [0], [0], [1], [0, 0, 1, 1], [], []>} : vector<4x32xbf16>, vector<32x32xbf16>, vector<4x32xf32> -> vector<4x32xf32>
    %24 = arith.addf %17, %23 : vector<4x32xf32>
    %25 = vector.extract_strided_slice %2 {offsets = [1, 0, 0], sizes = [2, 2, 32], strides = [1, 1, 1]} : vector<4x4x32xf32> to vector<2x2x32xf32>
    %26 = vector.shape_cast %25 : vector<2x2x32xf32> to vector<4x32xf32>
    %27 = arith.truncf %26 : vector<4x32xf32> to vector<4x32xbf16>
    %c3 = arith.constant 3 : index
    %c0_13 = arith.constant 0 : index
    %c0_14 = arith.constant 0 : index
    %28 = vector.load %arg2[%c3, %c0_13, %c0_14] : memref<9x32x32xbf16, #tpu.memory_space<vmem>>, vector<1x32x32xbf16>
    %29 = vector.shape_cast %28 : vector<1x32x32xbf16> to vector<32x32xbf16>
    %cst_15 = arith.constant dense<0.000000e+00> : vector<4x32xf32>
    %30 = tpu.matmul %27, %29, %cst_15 {dimension_numbers = #tpu.dot_dimension_numbers<[1], [0], [0], [1], [0, 0, 1, 1], [], []>} : vector<4x32xbf16>, vector<32x32xbf16>, vector<4x32xf32> -> vector<4x32xf32>
    %31 = arith.addf %24, %30 : vector<4x32xf32>
    %32 = vector.extract_strided_slice %2 {offsets = [1, 1, 0], sizes = [2, 2, 32], strides = [1, 1, 1]} : vector<4x4x32xf32> to vector<2x2x32xf32>
    %33 = vector.shape_cast %32 : vector<2x2x32xf32> to vector<4x32xf32>
    %34 = arith.truncf %33 : vector<4x32xf32> to vector<4x32xbf16>
    %c4 = arith.constant 4 : index
    %c0_16 = arith.constant 0 : index
    %c0_17 = arith.constant 0 : index
    %35 = vector.load %arg2[%c4, %c0_16, %c0_17] : memref<9x32x32xbf16, #tpu.memory_space<vmem>>, vector<1x32x32xbf16>
    %36 = vector.shape_cast %35 : vector<1x32x32xbf16> to vector<32x32xbf16>
    %cst_18 = arith.constant dense<0.000000e+00> : vector<4x32xf32>
    %37 = tpu.matmul %34, %36, %cst_18 {dimension_numbers = #tpu.dot_dimension_numbers<[1], [0], [0], [1], [0, 0, 1, 1], [], []>} : vector<4x32xbf16>, vector<32x32xbf16>, vector<4x32xf32> -> vector<4x32xf32>
    %38 = arith.addf %31, %37 : vector<4x32xf32>
    %39 = vector.extract_strided_slice %2 {offsets = [1, 2, 0], sizes = [2, 2, 32], strides = [1, 1, 1]} : vector<4x4x32xf32> to vector<2x2x32xf32>
    %40 = vector.shape_cast %39 : vector<2x2x32xf32> to vector<4x32xf32>
    %41 = arith.truncf %40 : vector<4x32xf32> to vector<4x32xbf16>
    %c5 = arith.constant 5 : index
    %c0_19 = arith.constant 0 : index
    %c0_20 = arith.constant 0 : index
    %42 = vector.load %arg2[%c5, %c0_19, %c0_20] : memref<9x32x32xbf16, #tpu.memory_space<vmem>>, vector<1x32x32xbf16>
    %43 = vector.shape_cast %42 : vector<1x32x32xbf16> to vector<32x32xbf16>
    %cst_21 = arith.constant dense<0.000000e+00> : vector<4x32xf32>
    %44 = tpu.matmul %41, %43, %cst_21 {dimension_numbers = #tpu.dot_dimension_numbers<[1], [0], [0], [1], [0, 0, 1, 1], [], []>} : vector<4x32xbf16>, vector<32x32xbf16>, vector<4x32xf32> -> vector<4x32xf32>
    %45 = arith.addf %38, %44 : vector<4x32xf32>
    %46 = vector.extract_strided_slice %2 {offsets = [2, 0, 0], sizes = [2, 2, 32], strides = [1, 1, 1]} : vector<4x4x32xf32> to vector<2x2x32xf32>
    %47 = vector.shape_cast %46 : vector<2x2x32xf32> to vector<4x32xf32>
    %48 = arith.truncf %47 : vector<4x32xf32> to vector<4x32xbf16>
    %c6 = arith.constant 6 : index
    %c0_22 = arith.constant 0 : index
    %c0_23 = arith.constant 0 : index
    %49 = vector.load %arg2[%c6, %c0_22, %c0_23] : memref<9x32x32xbf16, #tpu.memory_space<vmem>>, vector<1x32x32xbf16>
    %50 = vector.shape_cast %49 : vector<1x32x32xbf16> to vector<32x32xbf16>
    %cst_24 = arith.constant dense<0.000000e+00> : vector<4x32xf32>
    %51 = tpu.matmul %48, %50, %cst_24 {dimension_numbers = #tpu.dot_dimension_numbers<[1], [0], [0], [1], [0, 0, 1, 1], [], []>} : vector<4x32xbf16>, vector<32x32xbf16>, vector<4x32xf32> -> vector<4x32xf32>
    %52 = arith.addf %45, %51 : vector<4x32xf32>
    %53 = vector.extract_strided_slice %2 {offsets = [2, 1, 0], sizes = [2, 2, 32], strides = [1, 1, 1]} : vector<4x4x32xf32> to vector<2x2x32xf32>
    %54 = vector.shape_cast %53 : vector<2x2x32xf32> to vector<4x32xf32>
    %55 = arith.truncf %54 : vector<4x32xf32> to vector<4x32xbf16>
    %c7 = arith.constant 7 : index
    %c0_25 = arith.constant 0 : index
    %c0_26 = arith.constant 0 : index
    %56 = vector.load %arg2[%c7, %c0_25, %c0_26] : memref<9x32x32xbf16, #tpu.memory_space<vmem>>, vector<1x32x32xbf16>
    %57 = vector.shape_cast %56 : vector<1x32x32xbf16> to vector<32x32xbf16>
    %cst_27 = arith.constant dense<0.000000e+00> : vector<4x32xf32>
    %58 = tpu.matmul %55, %57, %cst_27 {dimension_numbers = #tpu.dot_dimension_numbers<[1], [0], [0], [1], [0, 0, 1, 1], [], []>} : vector<4x32xbf16>, vector<32x32xbf16>, vector<4x32xf32> -> vector<4x32xf32>
    %59 = arith.addf %52, %58 : vector<4x32xf32>
    %60 = vector.extract_strided_slice %2 {offsets = [2, 2, 0], sizes = [2, 2, 32], strides = [1, 1, 1]} : vector<4x4x32xf32> to vector<2x2x32xf32>
    %61 = vector.shape_cast %60 : vector<2x2x32xf32> to vector<4x32xf32>
    %62 = arith.truncf %61 : vector<4x32xf32> to vector<4x32xbf16>
    %c8 = arith.constant 8 : index
    %c0_28 = arith.constant 0 : index
    %c0_29 = arith.constant 0 : index
    %63 = vector.load %arg2[%c8, %c0_28, %c0_29] : memref<9x32x32xbf16, #tpu.memory_space<vmem>>, vector<1x32x32xbf16>
    %64 = vector.shape_cast %63 : vector<1x32x32xbf16> to vector<32x32xbf16>
    %cst_30 = arith.constant dense<0.000000e+00> : vector<4x32xf32>
    %65 = tpu.matmul %62, %64, %cst_30 {dimension_numbers = #tpu.dot_dimension_numbers<[1], [0], [0], [1], [0, 0, 1, 1], [], []>} : vector<4x32xbf16>, vector<32x32xbf16>, vector<4x32xf32> -> vector<4x32xf32>
    %66 = arith.addf %59, %65 : vector<4x32xf32>
    %c0_31 = arith.constant 0 : index
    %c0_32 = arith.constant 0 : index
    %67 = vector.load %arg3[%c0_31, %c0_32] : memref<1x32xf32, #tpu.memory_space<vmem>>, vector<1x32xf32>
    %68 = vector.broadcast %67 : vector<1x32xf32> to vector<4x32xf32>
    %69 = arith.addf %66, %68 : vector<4x32xf32>
    %cst_33 = arith.constant 0.000000e+00 : f32
    %70 = vector.broadcast %cst_33 : f32 to vector<4x32xf32>
    %71 = arith.maximumf %69, %70 : vector<4x32xf32>
    %72 = vector.shape_cast %71 : vector<4x32xf32> to vector<1x2x2x32xf32>
    %73 = arith.truncf %72 : vector<1x2x2x32xf32> to vector<1x2x2x32xbf16>
    %c0_34 = arith.constant 0 : index
    %c0_35 = arith.constant 0 : index
    %c0_36 = arith.constant 0 : index
    %c0_37 = arith.constant 0 : index
    %74 = vector.load %arg4[%c0_34, %c0_35, %c0_36, %c0_37] : memref<1x2x2x32xbf16, #tpu.memory_space<vmem>>, vector<1x2x2x32xbf16>
    tpu.vector_store %arg4[%c0_34, %c0_35, %c0_36, %c0_37], %73 {strides = array<i32>} : memref<1x2x2x32xbf16, #tpu.memory_space<vmem>>, vector<1x2x2x32xbf16>,
    return
  }
  func.func @transform_0(%arg0: i32) -> (i32, i32, i32, i32) {
    %c0_i32 = arith.constant 0 : i32
    %c0_i32_0 = arith.constant 0 : i32
    %c0_i32_1 = arith.constant 0 : i32
    %c0_i32_2 = arith.constant 0 : i32
    return %arg0, %c0_i32, %c0_i32_0, %c0_i32_1 : i32, i32, i32, i32
  }
  func.func @transform_1(%arg0: i32) -> (i32, i32, i32) {
    %c0_i32 = arith.constant 0 : i32
    %c0_i32_0 = arith.constant 0 : i32
    %c0_i32_1 = arith.constant 0 : i32
    %c0_i32_2 = arith.constant 0 : i32
    return %c0_i32, %c0_i32_0, %c0_i32_1 : i32, i32, i32
  }
  func.func @transform_2(%arg0: i32) -> (i32, i32) {
    %c0_i32 = arith.constant 0 : i32
    %c0_i32_0 = arith.constant 0 : i32
    %c0_i32_1 = arith.constant 0 : i32
    return %c0_i32, %c0_i32_0 : i32, i32
  }
  func.func @transform_3(%arg0: i32) -> (i32, i32, i32, i32) {
    %c0_i32 = arith.constant 0 : i32
    %c0_i32_0 = arith.constant 0 : i32
    %c0_i32_1 = arith.constant 0 : i32
    %c0_i32_2 = arith.constant 0 : i32
    return %arg0, %c0_i32, %c0_i32_0, %c0_i32_1 : i32, i32, i32, i32
  }
}

module attributes {stable_mosaic.version = 11 : i64} {
  func.func @_conv_taps_kernel(%arg0: i32, %arg1: memref<1x4x4x32xbf16, #tpu.memory_space<vmem>>, %arg2: memref<9x32x1xbf16, #tpu.memory_space<vmem>>, %arg3: memref<1x1xf32, #tpu.memory_space<vmem>>, %arg4: memref<1x2x2x1xf32, #tpu.memory_space<vmem>>) attributes {dimension_semantics = [#tpu.dimension_semantics<parallel>], iteration_bounds = array<i64: 2>, scalar_prefetch = 0 : i64, scratch_operands = 0 : i64, tpu.core_type = #tpu.core_type<tc>, window_params = [{transform_indices = @transform_0, window_bounds = array<i64: 1, 4, 4, 32>}, {pipeline_mode = #tpu.pipeline_mode<synchronous>, transform_indices = @transform_1, window_bounds = array<i64: 9, 32, 1>}, {pipeline_mode = #tpu.pipeline_mode<synchronous>, transform_indices = @transform_2, window_bounds = array<i64: 1, 1>}, {transform_indices = @transform_3, window_bounds = array<i64: 1, 2, 2, 1>}]} {
    %c0 = arith.constant 0 : index
    %c0_0 = arith.constant 0 : index
    %c0_1 = arith.constant 0 : index
    %c0_2 = arith.constant 0 : index
    %0 = vector.load %arg1[%c0, %c0_0, %c0_1, %c0_2] : memref<1x4x4x32xbf16, #tpu.memory_space<vmem>>, vector<1x4x4x32xbf16>
    %1 = vector.shape_cast %0 : vector<1x4x4x32xbf16> to vector<4x4x32xbf16>
    %2 = arith.extf %1 : vector<4x4x32xbf16> to vector<4x4x32xf32>
    %cst = arith.constant 0.000000e+00 : f32
    %3 = vector.broadcast %cst : f32 to vector<4x1xf32>
    %4 = vector.extract_strided_slice %2 {offsets = [0, 0, 0], sizes = [2, 2, 32], strides = [1, 1, 1]} : vector<4x4x32xf32> to vector<2x2x32xf32>
    %5 = vector.shape_cast %4 : vector<2x2x32xf32> to vector<4x32xf32>
    %6 = arith.truncf %5 : vector<4x32xf32> to vector<4x32xbf16>
    %c0_3 = arith.constant 0 : index
    %c0_4 = arith.constant 0 : index
    %c0_5 = arith.constant 0 : index
    %7 = vector.load %arg2[%c0_3, %c0_4, %c0_5] : memref<9x32x1xbf16, #tpu.memory_space<vmem>>, vector<1x32x1xbf16>
    %8 = vector.shape_cast %7 : vector<1x32x1xbf16> to vector<32x1xbf16>
    %cst_6 = arith.constant dense<0.000000e+00> : vector<4x1xf32>
    %9 = tpu.matmul %6, %8, %cst_6 {dimension_numbers = #tpu.dot_dimension_numbers<[1], [0], [0], [1], [0, 0, 1, 1], [], []>} : vector<4x32xbf16>, vector<32x1xbf16>, vector<4x1xf32> -> vector<4x1xf32>
    %10 = arith.addf %3, %9 : vector<4x1xf32>
    %11 = vector.extract_strided_slice %2 {offsets = [0, 1, 0], sizes = [2, 2, 32], strides = [1, 1, 1]} : vector<4x4x32xf32> to vector<2x2x32xf32>
    %12 = vector.shape_cast %11 : vector<2x2x32xf32> to vector<4x32xf32>
    %13 = arith.truncf %12 : vector<4x32xf32> to vector<4x32xbf16>
    %c1 = arith.constant 1 : index
    %c0_7 = arith.constant 0 : index
    %c0_8 = arith.constant 0 : index
    %14 = vector.load %arg2[%c1, %c0_7, %c0_8] : memref<9x32x1xbf16, #tpu.memory_space<vmem>>, vector<1x32x1xbf16>
    %15 = vector.shape_cast %14 : vector<1x32x1xbf16> to vector<32x1xbf16>
    %cst_9 = arith.constant dense<0.000000e+00> : vector<4x1xf32>
    %16 = tpu.matmul %13, %15, %cst_9 {dimension_numbers = #tpu.dot_dimension_numbers<[1], [0], [0], [1], [0, 0, 1, 1], [], []>} : vector<4x32xbf16>, vector<32x1xbf16>, vector<4x1xf32> -> vector<4x1xf32>
    %17 = arith.addf %10, %16 : vector<4x1xf32>
    %18 = vector.extract_strided_slice %2 {offsets = [0, 2, 0], sizes = [2, 2, 32], strides = [1, 1, 1]} : vector<4x4x32xf32> to vector<2x2x32xf32>
    %19 = vector.shape_cast %18 : vector<2x2x32xf32> to vector<4x32xf32>
    %20 = arith.truncf %19 : vector<4x32xf32> to vector<4x32xbf16>
    %c2 = arith.constant 2 : index
    %c0_10 = arith.constant 0 : index
    %c0_11 = arith.constant 0 : index
    %21 = vector.load %arg2[%c2, %c0_10, %c0_11] : memref<9x32x1xbf16, #tpu.memory_space<vmem>>, vector<1x32x1xbf16>
    %22 = vector.shape_cast %21 : vector<1x32x1xbf16> to vector<32x1xbf16>
    %cst_12 = arith.constant dense<0.000000e+00> : vector<4x1xf32>
    %23 = tpu.matmul %20, %22, %cst_12 {dimension_numbers = #tpu.dot_dimension_numbers<[1], [0], [0], [1], [0, 0, 1, 1], [], []>} : vector<4x32xbf16>, vector<32x1xbf16>, vector<4x1xf32> -> vector<4x1xf32>
    %24 = arith.addf %17, %23 : vector<4x1xf32>
    %25 = vector.extract_strided_slice %2 {offsets = [1, 0, 0], sizes = [2, 2, 32], strides = [1, 1, 1]} : vector<4x4x32xf32> to vector<2x2x32xf32>
    %26 = vector.shape_cast %25 : vector<2x2x32xf32> to vector<4x32xf32>
    %27 = arith.truncf %26 : vector<4x32xf32> to vector<4x32xbf16>
    %c3 = arith.constant 3 : index
    %c0_13 = arith.constant 0 : index
    %c0_14 = arith.constant 0 : index
    %28 = vector.load %arg2[%c3, %c0_13, %c0_14] : memref<9x32x1xbf16, #tpu.memory_space<vmem>>, vector<1x32x1xbf16>
    %29 = vector.shape_cast %28 : vector<1x32x1xbf16> to vector<32x1xbf16>
    %cst_15 = arith.constant dense<0.000000e+00> : vector<4x1xf32>
    %30 = tpu.matmul %27, %29, %cst_15 {dimension_numbers = #tpu.dot_dimension_numbers<[1], [0], [0], [1], [0, 0, 1, 1], [], []>} : vector<4x32xbf16>, vector<32x1xbf16>, vector<4x1xf32> -> vector<4x1xf32>
    %31 = arith.addf %24, %30 : vector<4x1xf32>
    %32 = vector.extract_strided_slice %2 {offsets = [1, 1, 0], sizes = [2, 2, 32], strides = [1, 1, 1]} : vector<4x4x32xf32> to vector<2x2x32xf32>
    %33 = vector.shape_cast %32 : vector<2x2x32xf32> to vector<4x32xf32>
    %34 = arith.truncf %33 : vector<4x32xf32> to vector<4x32xbf16>
    %c4 = arith.constant 4 : index
    %c0_16 = arith.constant 0 : index
    %c0_17 = arith.constant 0 : index
    %35 = vector.load %arg2[%c4, %c0_16, %c0_17] : memref<9x32x1xbf16, #tpu.memory_space<vmem>>, vector<1x32x1xbf16>
    %36 = vector.shape_cast %35 : vector<1x32x1xbf16> to vector<32x1xbf16>
    %cst_18 = arith.constant dense<0.000000e+00> : vector<4x1xf32>
    %37 = tpu.matmul %34, %36, %cst_18 {dimension_numbers = #tpu.dot_dimension_numbers<[1], [0], [0], [1], [0, 0, 1, 1], [], []>} : vector<4x32xbf16>, vector<32x1xbf16>, vector<4x1xf32> -> vector<4x1xf32>
    %38 = arith.addf %31, %37 : vector<4x1xf32>
    %39 = vector.extract_strided_slice %2 {offsets = [1, 2, 0], sizes = [2, 2, 32], strides = [1, 1, 1]} : vector<4x4x32xf32> to vector<2x2x32xf32>
    %40 = vector.shape_cast %39 : vector<2x2x32xf32> to vector<4x32xf32>
    %41 = arith.truncf %40 : vector<4x32xf32> to vector<4x32xbf16>
    %c5 = arith.constant 5 : index
    %c0_19 = arith.constant 0 : index
    %c0_20 = arith.constant 0 : index
    %42 = vector.load %arg2[%c5, %c0_19, %c0_20] : memref<9x32x1xbf16, #tpu.memory_space<vmem>>, vector<1x32x1xbf16>
    %43 = vector.shape_cast %42 : vector<1x32x1xbf16> to vector<32x1xbf16>
    %cst_21 = arith.constant dense<0.000000e+00> : vector<4x1xf32>
    %44 = tpu.matmul %41, %43, %cst_21 {dimension_numbers = #tpu.dot_dimension_numbers<[1], [0], [0], [1], [0, 0, 1, 1], [], []>} : vector<4x32xbf16>, vector<32x1xbf16>, vector<4x1xf32> -> vector<4x1xf32>
    %45 = arith.addf %38, %44 : vector<4x1xf32>
    %46 = vector.extract_strided_slice %2 {offsets = [2, 0, 0], sizes = [2, 2, 32], strides = [1, 1, 1]} : vector<4x4x32xf32> to vector<2x2x32xf32>
    %47 = vector.shape_cast %46 : vector<2x2x32xf32> to vector<4x32xf32>
    %48 = arith.truncf %47 : vector<4x32xf32> to vector<4x32xbf16>
    %c6 = arith.constant 6 : index
    %c0_22 = arith.constant 0 : index
    %c0_23 = arith.constant 0 : index
    %49 = vector.load %arg2[%c6, %c0_22, %c0_23] : memref<9x32x1xbf16, #tpu.memory_space<vmem>>, vector<1x32x1xbf16>
    %50 = vector.shape_cast %49 : vector<1x32x1xbf16> to vector<32x1xbf16>
    %cst_24 = arith.constant dense<0.000000e+00> : vector<4x1xf32>
    %51 = tpu.matmul %48, %50, %cst_24 {dimension_numbers = #tpu.dot_dimension_numbers<[1], [0], [0], [1], [0, 0, 1, 1], [], []>} : vector<4x32xbf16>, vector<32x1xbf16>, vector<4x1xf32> -> vector<4x1xf32>
    %52 = arith.addf %45, %51 : vector<4x1xf32>
    %53 = vector.extract_strided_slice %2 {offsets = [2, 1, 0], sizes = [2, 2, 32], strides = [1, 1, 1]} : vector<4x4x32xf32> to vector<2x2x32xf32>
    %54 = vector.shape_cast %53 : vector<2x2x32xf32> to vector<4x32xf32>
    %55 = arith.truncf %54 : vector<4x32xf32> to vector<4x32xbf16>
    %c7 = arith.constant 7 : index
    %c0_25 = arith.constant 0 : index
    %c0_26 = arith.constant 0 : index
    %56 = vector.load %arg2[%c7, %c0_25, %c0_26] : memref<9x32x1xbf16, #tpu.memory_space<vmem>>, vector<1x32x1xbf16>
    %57 = vector.shape_cast %56 : vector<1x32x1xbf16> to vector<32x1xbf16>
    %cst_27 = arith.constant dense<0.000000e+00> : vector<4x1xf32>
    %58 = tpu.matmul %55, %57, %cst_27 {dimension_numbers = #tpu.dot_dimension_numbers<[1], [0], [0], [1], [0, 0, 1, 1], [], []>} : vector<4x32xbf16>, vector<32x1xbf16>, vector<4x1xf32> -> vector<4x1xf32>
    %59 = arith.addf %52, %58 : vector<4x1xf32>
    %60 = vector.extract_strided_slice %2 {offsets = [2, 2, 0], sizes = [2, 2, 32], strides = [1, 1, 1]} : vector<4x4x32xf32> to vector<2x2x32xf32>
    %61 = vector.shape_cast %60 : vector<2x2x32xf32> to vector<4x32xf32>
    %62 = arith.truncf %61 : vector<4x32xf32> to vector<4x32xbf16>
    %c8 = arith.constant 8 : index
    %c0_28 = arith.constant 0 : index
    %c0_29 = arith.constant 0 : index
    %63 = vector.load %arg2[%c8, %c0_28, %c0_29] : memref<9x32x1xbf16, #tpu.memory_space<vmem>>, vector<1x32x1xbf16>
    %64 = vector.shape_cast %63 : vector<1x32x1xbf16> to vector<32x1xbf16>
    %cst_30 = arith.constant dense<0.000000e+00> : vector<4x1xf32>
    %65 = tpu.matmul %62, %64, %cst_30 {dimension_numbers = #tpu.dot_dimension_numbers<[1], [0], [0], [1], [0, 0, 1, 1], [], []>} : vector<4x32xbf16>, vector<32x1xbf16>, vector<4x1xf32> -> vector<4x1xf32>
    %66 = arith.addf %59, %65 : vector<4x1xf32>
    %c0_31 = arith.constant 0 : index
    %c0_32 = arith.constant 0 : index
    %67 = vector.load %arg3[%c0_31, %c0_32] : memref<1x1xf32, #tpu.memory_space<vmem>>, vector<1x1xf32>
    %68 = vector.broadcast %67 : vector<1x1xf32> to vector<4x1xf32>
    %69 = arith.addf %66, %68 : vector<4x1xf32>
    %70 = vector.shape_cast %69 : vector<4x1xf32> to vector<1x2x2x1xf32>
    %c0_33 = arith.constant 0 : index
    %c0_34 = arith.constant 0 : index
    %c0_35 = arith.constant 0 : index
    %c0_36 = arith.constant 0 : index
    %71 = vector.load %arg4[%c0_33, %c0_34, %c0_35, %c0_36] : memref<1x2x2x1xf32, #tpu.memory_space<vmem>>, vector<1x2x2x1xf32>
    tpu.vector_store %arg4[%c0_33, %c0_34, %c0_35, %c0_36], %70 {strides = array<i32>} : memref<1x2x2x1xf32, #tpu.memory_space<vmem>>, vector<1x2x2x1xf32>,
    return
  }
  func.func @transform_0(%arg0: i32) -> (i32, i32, i32, i32) {
    %c0_i32 = arith.constant 0 : i32
    %c0_i32_0 = arith.constant 0 : i32
    %c0_i32_1 = arith.constant 0 : i32
    %c0_i32_2 = arith.constant 0 : i32
    return %arg0, %c0_i32, %c0_i32_0, %c0_i32_1 : i32, i32, i32, i32
  }
  func.func @transform_1(%arg0: i32) -> (i32, i32, i32) {
    %c0_i32 = arith.constant 0 : i32
    %c0_i32_0 = arith.constant 0 : i32
    %c0_i32_1 = arith.constant 0 : i32
    %c0_i32_2 = arith.constant 0 : i32
    return %c0_i32, %c0_i32_0, %c0_i32_1 : i32, i32, i32
  }
  func.func @transform_2(%arg0: i32) -> (i32, i32) {
    %c0_i32 = arith.constant 0 : i32
    %c0_i32_0 = arith.constant 0 : i32
    %c0_i32_1 = arith.constant 0 : i32
    return %c0_i32, %c0_i32_0 : i32, i32
  }
  func.func @transform_3(%arg0: i32) -> (i32, i32, i32, i32) {
    %c0_i32 = arith.constant 0 : i32
    %c0_i32_0 = arith.constant 0 : i32
    %c0_i32_1 = arith.constant 0 : i32
    %c0_i32_2 = arith.constant 0 : i32
    return %arg0, %c0_i32, %c0_i32_0, %c0_i32_1 : i32, i32, i32, i32
  }
}

module attributes {stable_mosaic.version = 11 : i64} {
  func.func @_matmul_bias_act_kernel(%arg0: i32, %arg1: memref<16x2xf32, #tpu.memory_space<vmem>>, %arg2: memref<2x4xf32, #tpu.memory_space<vmem>>, %arg3: memref<1x4xf32, #tpu.memory_space<vmem>>, %arg4: memref<16x4xf32, #tpu.memory_space<vmem>>) attributes {dimension_semantics = [#tpu.dimension_semantics<parallel>], iteration_bounds = array<i64: 1>, scalar_prefetch = 0 : i64, scratch_operands = 0 : i64, tpu.core_type = #tpu.core_type<tc>, window_params = [{transform_indices = @transform_0, window_bounds = array<i64: 16, 2>}, {pipeline_mode = #tpu.pipeline_mode<synchronous>, transform_indices = @transform_1, window_bounds = array<i64: 2, 4>}, {pipeline_mode = #tpu.pipeline_mode<synchronous>, transform_indices = @transform_2, window_bounds = array<i64: 1, 4>}, {transform_indices = @transform_3, window_bounds = array<i64: 16, 4>}]} {
    %c0 = arith.constant 0 : index
    %c0_0 = arith.constant 0 : index
    %0 = vector.load %arg1[%c0, %c0_0] : memref<16x2xf32, #tpu.memory_space<vmem>>, vector<16x2xf32>
    %c0_1 = arith.constant 0 : index
    %c0_2 = arith.constant 0 : index
    %1 = vector.load %arg2[%c0_1, %c0_2] : memref<2x4xf32, #tpu.memory_space<vmem>>, vector<2x4xf32>
    %cst = arith.constant dense<0.000000e+00> : vector<16x4xf32>
    %2 = tpu.matmul %0, %1, %cst {dimension_numbers = #tpu.dot_dimension_numbers<[1], [0], [0], [1], [0, 0, 1, 1], [], []>} : vector<16x2xf32>, vector<2x4xf32>, vector<16x4xf32> -> vector<16x4xf32>
    %c0_3 = arith.constant 0 : index
    %c0_4 = arith.constant 0 : index
    %3 = vector.load %arg3[%c0_3, %c0_4] : memref<1x4xf32, #tpu.memory_space<vmem>>, vector<1x4xf32>
    %4 = vector.broadcast %3 : vector<1x4xf32> to vector<16x4xf32>
    %5 = arith.addf %2, %4 : vector<16x4xf32>
    %c0_5 = arith.constant 0 : index
    %c0_6 = arith.constant 0 : index
    %6 = vector.load %arg4[%c0_5, %c0_6] : memref<16x4xf32, #tpu.memory_space<vmem>>, vector<16x4xf32>
    tpu.vector_store %arg4[%c0_5, %c0_6], %5 {strides = array<i32>} : memref<16x4xf32, #tpu.memory_space<vmem>>, vector<16x4xf32>,
    return
  }
  func.func @transform_0(%arg0: i32) -> (i32, i32) {
    %c0_i32 = arith.constant 0 : i32
    %c0_i32_0 = arith.constant 0 : i32
    return %arg0, %c0_i32 : i32, i32
  }
  func.func @transform_1(%arg0: i32) -> (i32, i32) {
    %c0_i32 = arith.constant 0 : i32
    %c0_i32_0 = arith.constant 0 : i32
    %c0_i32_1 = arith.constant 0 : i32
    return %c0_i32, %c0_i32_0 : i32, i32
  }
  func.func @transform_2(%arg0: i32) -> (i32, i32) {
    %c0_i32 = arith.constant 0 : i32
    %c0_i32_0 = arith.constant 0 : i32
    %c0_i32_1 = arith.constant 0 : i32
    return %c0_i32, %c0_i32_0 : i32, i32
  }
  func.func @transform_3(%arg0: i32) -> (i32, i32) {
    %c0_i32 = arith.constant 0 : i32
    %c0_i32_0 = arith.constant 0 : i32
    return %arg0, %c0_i32 : i32, i32
  }
}

module attributes {stable_mosaic.version = 11 : i64} {
  func.func @_matmul_bias_act_kernel(%arg0: i32, %arg1: memref<16x2xf32, #tpu.memory_space<vmem>>, %arg2: memref<2x32xf32, #tpu.memory_space<vmem>>, %arg3: memref<1x32xf32, #tpu.memory_space<vmem>>, %arg4: memref<16x32xf32, #tpu.memory_space<vmem>>) attributes {dimension_semantics = [#tpu.dimension_semantics<parallel>], iteration_bounds = array<i64: 1>, scalar_prefetch = 0 : i64, scratch_operands = 0 : i64, tpu.core_type = #tpu.core_type<tc>, window_params = [{transform_indices = @transform_0, window_bounds = array<i64: 16, 2>}, {pipeline_mode = #tpu.pipeline_mode<synchronous>, transform_indices = @transform_1, window_bounds = array<i64: 2, 32>}, {pipeline_mode = #tpu.pipeline_mode<synchronous>, transform_indices = @transform_2, window_bounds = array<i64: 1, 32>}, {transform_indices = @transform_3, window_bounds = array<i64: 16, 32>}]} {
    %c0 = arith.constant 0 : index
    %c0_0 = arith.constant 0 : index
    %0 = vector.load %arg1[%c0, %c0_0] : memref<16x2xf32, #tpu.memory_space<vmem>>, vector<16x2xf32>
    %c0_1 = arith.constant 0 : index
    %c0_2 = arith.constant 0 : index
    %1 = vector.load %arg2[%c0_1, %c0_2] : memref<2x32xf32, #tpu.memory_space<vmem>>, vector<2x32xf32>
    %cst = arith.constant dense<0.000000e+00> : vector<16x32xf32>
    %2 = tpu.matmul %0, %1, %cst {dimension_numbers = #tpu.dot_dimension_numbers<[1], [0], [0], [1], [0, 0, 1, 1], [], []>} : vector<16x2xf32>, vector<2x32xf32>, vector<16x32xf32> -> vector<16x32xf32>
    %c0_3 = arith.constant 0 : index
    %c0_4 = arith.constant 0 : index
    %3 = vector.load %arg3[%c0_3, %c0_4] : memref<1x32xf32, #tpu.memory_space<vmem>>, vector<1x32xf32>
    %4 = vector.broadcast %3 : vector<1x32xf32> to vector<16x32xf32>
    %5 = arith.addf %2, %4 : vector<16x32xf32>
    %c0_5 = arith.constant 0 : index
    %c0_6 = arith.constant 0 : index
    %6 = vector.load %arg4[%c0_5, %c0_6] : memref<16x32xf32, #tpu.memory_space<vmem>>, vector<16x32xf32>
    tpu.vector_store %arg4[%c0_5, %c0_6], %5 {strides = array<i32>} : memref<16x32xf32, #tpu.memory_space<vmem>>, vector<16x32xf32>,
    return
  }
  func.func @transform_0(%arg0: i32) -> (i32, i32) {
    %c0_i32 = arith.constant 0 : i32
    %c0_i32_0 = arith.constant 0 : i32
    return %arg0, %c0_i32 : i32, i32
  }
  func.func @transform_1(%arg0: i32) -> (i32, i32) {
    %c0_i32 = arith.constant 0 : i32
    %c0_i32_0 = arith.constant 0 : i32
    %c0_i32_1 = arith.constant 0 : i32
    return %c0_i32, %c0_i32_0 : i32, i32
  }
  func.func @transform_2(%arg0: i32) -> (i32, i32) {
    %c0_i32 = arith.constant 0 : i32
    %c0_i32_0 = arith.constant 0 : i32
    %c0_i32_1 = arith.constant 0 : i32
    return %c0_i32, %c0_i32_0 : i32, i32
  }
  func.func @transform_3(%arg0: i32) -> (i32, i32) {
    %c0_i32 = arith.constant 0 : i32
    %c0_i32_0 = arith.constant 0 : i32
    return %arg0, %c0_i32 : i32, i32
  }
}

</mosaic_0001>

<llo_original>
// kernel: semantic_segmentation_forward.14
$region0: #{semantic_segmentation_forward.14}
  #allocation0 [shape = 'u32[]', space=smem, size = 0x4, offset = 0x4, fixed_abs, tag = 'smem constant byte address 0x4 - core index']
  #allocation1 [shape = 'u32[144,128]{1,0:T(1,128)}', space=vmem, size = 0x12000, scoped, tag = 'internal scratch']
  %s0 = inlined_call_operand.vmem [shape: bf16[128,27], index: 0, kind: input, shape index: {}]
  %s1 = inlined_call_operand.vmem [shape: bf16[27,16], index: 1, kind: input, shape index: {}]
  %s2 = inlined_call_operand.vmem [shape: f32[1,16], index: 2, kind: input, shape index: {}]
  %s3 = inlined_call_operand.vmem [shape: bf16[128,16], index: 3, kind: output, shape index: {}]
  %s4 = sld [smem:[#allocation0]]
  $region22: #{semantic_segmentation_forward.14} parent=0
    _
  %s6 = ssub.s32 1, %s4
  %s7 = scalar_select 0, %s6, %s4
  // Predicated region
  $region2: #{semantic_segmentation_forward.14} parent=0 // pred_check
    _
  $region3: #{semantic_segmentation_forward.14} parent=0 // pred_check_branch
    %9 = sbr.rel (0) target = $region5
  $region4: #{semantic_segmentation_forward.14} parent=0 // pred_region
    _
  $region5: #{semantic_segmentation_forward.14} parent=0 // pred_fallthru
    _
  // Predicated region
  $region6: #{semantic_segmentation_forward.14} parent=0 // pred_check
    _
  $region7: #{semantic_segmentation_forward.14} parent=0 // pred_check_branch
    %11 = sbr.rel (0) target = $region9
  $region8: #{semantic_segmentation_forward.14} parent=0 // pred_region
    _
  $region9: #{semantic_segmentation_forward.14} parent=0 // pred_fallthru
    _
  // Predicated region
  $region10: #{semantic_segmentation_forward.14} parent=0 // pred_check
    _
  $region11: #{semantic_segmentation_forward.14} parent=0 // pred_check_branch
    %13 = sbr.rel (0) target = $region13
  $region12: #{semantic_segmentation_forward.14} parent=0 // pred_region
    _
  $region13: #{semantic_segmentation_forward.14} parent=0 // pred_fallthru
    _
  %v15 = vld [vmem:[%s0] sm:$0xf]
  %v16 = vld [vmem:[%s0 + $0x4] sm:$0xf]
  %v17 = vld [vmem:[%s0 + $0x8] sm:$0xf]
  %v18 = vld [vmem:[%s0 + $0xc] sm:$0xf]
  %v19 = vld [vmem:[%s0 + $0x10] sm:$0xf]
  %v20 = vld [vmem:[%s0 + $0x14] sm:$0xf]
  %v21 = vld [vmem:[%s0 + $0x18] sm:$0xf]
  %v22 = vld [vmem:[%s0 + $0x1c] sm:$0xf]
  %v23 = vld [vmem:[%s0 + $0x20] sm:$0xf]
  %v24 = vld [vmem:[%s0 + $0x24] sm:$0xf]
  %v25 = vld [vmem:[%s0 + $0x28] sm:$0xf]
  %v26 = vld [vmem:[%s0 + $0x2c] sm:$0xf]
  %v27 = vld [vmem:[%s0 + $0x30] sm:$0xf]
  %v28 = vld [vmem:[%s0 + $0x34] sm:$0xf]
  %v29 = vld [vmem:[%s0 + $0x38] sm:$0xf]
  %v30 = vld [vmem:[%s0 + $0x3c] sm:$0xf]
  %v31 = vld [vmem:[%s1] sm:$0xf]
  %v32 = vld [vmem:[%s1 + $0x4] sm:$0xf]
  %v33 = vld [vmem:[%s1 + $0x8] sm:$0xf]
  %v34 = vld [vmem:[%s1 + $0xc] sm:$0x3]
  %v35 = vld [vmem:[%s2] sm:$0x1]
  %v37 = vlaneseq
  %v38 = vshrl.u32 %v37, 7
  %v39 = vsub.s32 0, %v38
  %v40 = vrot.slane %v35, %v39
  %v58 = vunpack.c.l.b16 %v15
  %v59 = vunpack.c.l.b16 %v16
  %v60 = vunpack.c.l.b16 %v17
  %v61 = vunpack.c.l.b16 %v18
  %v62 = vunpack.c.l.b16 %v19
  %v63 = vunpack.c.l.b16 %v20
  %v64 = vunpack.c.l.b16 %v21
  %v65 = vunpack.c.l.b16 %v22
  %v66 = vunpack.c.l.b16 %v23
  %v67 = vunpack.c.l.b16 %v24
  %v68 = vunpack.c.l.b16 %v25
  %v69 = vunpack.c.l.b16 %v26
  %v70 = vunpack.c.l.b16 %v27
  %v71 = vunpack.c.l.b16 %v28
  %v72 = vunpack.c.l.b16 %v29
  %v73 = vunpack.c.l.b16 %v30
  %v74 = vpack.c.b16 %v59, %v58
  %v75 = vpack.c.b16 %v61, %v60
  %v76 = vpack.c.b16 %v63, %v62
  %v77 = vpack.c.b16 %v65, %v64
  %v78 = vpack.c.b16 %v67, %v66
  %v79 = vpack.c.b16 %v69, %v68
  %v80 = vpack.c.b16 %v71, %v70
  %v81 = vpack.c.b16 %v73, %v72
  %v86 = vunpack.c.l.b16 %v31
  %v87 = vunpack.c.l.b16 %v32
  %v88 = vunpack.c.l.b16 %v33
  %v89 = vunpack.c.l.b16 %v34
  %v90 = vpack.c.b16 %v87, %v86
  %v91 = vpack.c.b16 %v89, %v88
  %vm93 = vcmask 220160
  %v95 = vsel %vm93, %v74, 0
  %v98 = vsel %vm93, %v75, 0
  %v101 = vsel %vm93, %v76, 0
  %v104 = vsel %vm93, %v77, 0
  %v107 = vsel %vm93, %v78, 0
  %v110 = vsel %vm93, %v79, 0
  %v113 = vsel %vm93, %v80, 0
  %v116 = vsel %vm93, %v81, 0
  %vm118 = vcmask 1044480
  %vm119 = vcmask 1045504
  %v120 = vsel %vm118, 4294967295, 65535
  %v121 = vsel %vm119, %v120, 0
  %v123 = vand.u32 %v91, %v121
  %125 = vmatprep.subr.bf16.mxu0 0
  %126 = vmatpush1.bf16.msra.mxu0 %v90
  %127 = vmatprep.subr.bf16.mxu0 0
  %128 = vmatpush1.bf16.msra.mxu0 %v123
  %129 = vmatprep.subr.bf16.mxu0 0
  %130 = vmatpush1.bf16.msra.mxu0 0
  %131 = vmatprep.subr.bf16.mxu0 0
  %132 = vmatpush1.bf16.msra.mxu0 0
  %133 = vmatprep.subr.bf16.mxu0 0
  %134 = vmatpush1.bf16.msra.mxu0 0
  %135 = vmatprep.subr.bf16.mxu0 0
  %136 = vmatpush1.bf16.msra.mxu0 0
  %137 = vmatprep.subr.bf16.mxu0 0
  %138 = vmatpush1.bf16.msra.mxu0 0
  %139 = vmatprep.subr.bf16.mxu0 0
  %140 = vmatpush1.bf16.msra.mxu0 0
  %141 = vmatprep.subr.bf16.mxu0 0
  %142 = vmatpush1.bf16.msra.mxu0 0
  %143 = vmatprep.subr.bf16.mxu0 0
  %144 = vmatpush1.bf16.msra.mxu0 0
  %145 = vmatprep.subr.bf16.mxu0 0
  %146 = vmatpush1.bf16.msra.mxu0 0
  %147 = vmatprep.subr.bf16.mxu0 0
  %148 = vmatpush1.bf16.msra.mxu0 0
  %149 = vmatprep.subr.bf16.mxu0 0
  %150 = vmatpush1.bf16.msra.mxu0 0
  %151 = vmatprep.subr.bf16.mxu0 0
  %152 = vmatpush1.bf16.msra.mxu0 0
  %153 = vmatprep.subr.bf16.mxu0 0
  %154 = vmatpush1.bf16.msra.mxu0 0
  %155 = vmatprep.subr.bf16.mxu0 0
  %156 = vmatpush1.bf16.msra.mxu0 0
  %157 = vmatprep.mubr.bf16.mxu0 0
  %158 = vmatmul.mubr.bf16.gmra.mrb[0].mxu0 %v95
  %v159 = vpop.f32.mrb[0].mxu0
  %v160 = vadd.f32 %v40, %v159
  %v161 = vpop.f32.mrb[0].mxu0
  %v162 = vpop.f32.mrb[0].mxu0
  %v163 = vadd.f32 %v40, %v162
  %v164 = vpop.f32.mrb[0].mxu0
  %165 = vmatprep.mubr.bf16.mxu0 0
  %166 = vmatmul.mubr.bf16.gmra.mrb[0].mxu0 %v98
  %v167 = vpop.f32.mrb[0].mxu0
  %v168 = vadd.f32 %v40, %v167
  %v169 = vpop.f32.mrb[0].mxu0
  %v170 = vpop.f32.mrb[0].mxu0
  %v171 = vadd.f32 %v40, %v170
  %v172 = vpop.f32.mrb[0].mxu0
  %173 = vmatprep.mubr.bf16.mxu0 0
  %174 = vmatmul.mubr.bf16.gmra.mrb[0].mxu0 %v101
  %v175 = vpop.f32.mrb[0].mxu0
  %v176 = vadd.f32 %v40, %v175
  %v177 = vpop.f32.mrb[0].mxu0
  %v178 = vpop.f32.mrb[0].mxu0
  %v179 = vadd.f32 %v40, %v178
  %v180 = vpop.f32.mrb[0].mxu0
  %181 = vmatprep.mubr.bf16.mxu0 0
  %182 = vmatmul.mubr.bf16.gmra.mrb[0].mxu0 %v104
  %v183 = vpop.f32.mrb[0].mxu0
  %v184 = vadd.f32 %v40, %v183
  %v185 = vpop.f32.mrb[0].mxu0
  %v186 = vpop.f32.mrb[0].mxu0
  %v187 = vadd.f32 %v40, %v186
  %v188 = vpop.f32.mrb[0].mxu0
  %189 = vmatprep.mubr.bf16.mxu0 0
  %190 = vmatmul.mubr.bf16.gmra.mrb[0].mxu0 %v107
  %v191 = vpop.f32.mrb[0].mxu0
  %v192 = vadd.f32 %v40, %v191
  %v193 = vpop.f32.mrb[0].mxu0
  %v194 = vpop.f32.mrb[0].mxu0
  %v195 = vadd.f32 %v40, %v194
  %v196 = vpop.f32.mrb[0].mxu0
  %197 = vmatprep.mubr.bf16.mxu0 0
  %198 = vmatmul.mubr.bf16.gmra.mrb[0].mxu0 %v110
  %v199 = vpop.f32.mrb[0].mxu0
  %v200 = vadd.f32 %v40, %v199
  %v201 = vpop.f32.mrb[0].mxu0
  %v202 = vpop.f32.mrb[0].mxu0
  %v203 = vadd.f32 %v40, %v202
  %v204 = vpop.f32.mrb[0].mxu0
  %205 = vmatprep.mubr.bf16.mxu0 0
  %206 = vmatmul.mubr.bf16.gmra.mrb[0].mxu0 %v113
  %v207 = vpop.f32.mrb[0].mxu0
  %v208 = vadd.f32 %v40, %v207
  %v209 = vpop.f32.mrb[0].mxu0
  %v210 = vpop.f32.mrb[0].mxu0
  %v211 = vadd.f32 %v40, %v210
  %v212 = vpop.f32.mrb[0].mxu0
  %213 = vmatprep.mubr.bf16.mxu0 0
  %214 = vmatmul.mubr.bf16.gmra.mrb[0].mxu0 %v116
  %v215 = vpop.f32.mrb[0].mxu0
  %v216 = vadd.f32 %v40, %v215
  %v217 = vpop.f32.mrb[0].mxu0
  %v218 = vpop.f32.mrb[0].mxu0
  %v219 = vadd.f32 %v40, %v218
  %v220 = vpop.f32.mrb[0].mxu0
  %221 = vdwg.mxu0
  %v222 = vmax.f32 %v160, 0.0
  %v223 = vmax.f32 %v163, 0.0
  %v224 = vmax.f32 %v168, 0.0
  %v225 = vmax.f32 %v171, 0.0
  %v226 = vmax.f32 %v176, 0.0
  %v227 = vmax.f32 %v179, 0.0
  %v228 = vmax.f32 %v184, 0.0
  %v229 = vmax.f32 %v187, 0.0
  %v230 = vmax.f32 %v192, 0.0
  %v231 = vmax.f32 %v195, 0.0
  %v232 = vmax.f32 %v200, 0.0
  %v233 = vmax.f32 %v203, 0.0
  %v234 = vmax.f32 %v208, 0.0
  %v235 = vmax.f32 %v211, 0.0
  %v236 = vmax.f32 %v216, 0.0
  %v237 = vmax.f32 %v219, 0.0
  %v238 = vpack.c.bf16 %v223, %v222
  %v239 = vpack.c.bf16 %v225, %v224
  %v240 = vpack.c.bf16 %v227, %v226
  %v241 = vpack.c.bf16 %v229, %v228
  %v242 = vpack.c.bf16 %v231, %v230
  %v243 = vpack.c.bf16 %v233, %v232
  %v244 = vpack.c.bf16 %v235, %v234
  %v245 = vpack.c.bf16 %v237, %v236
  %v254 = vunpack.c.l.b16 %v238
  %v255 = vunpack.c.h.b16 %v238
  %v256 = vunpack.c.l.b16 %v239
  %v257 = vunpack.c.h.b16 %v239
  %v258 = vunpack.c.l.b16 %v240
  %v259 = vunpack.c.h.b16 %v240
  %v260 = vunpack.c.l.b16 %v241
  %v261 = vunpack.c.h.b16 %v241
  %v262 = vunpack.c.l.b16 %v242
  %v263 = vunpack.c.h.b16 %v242
  %v264 = vunpack.c.l.b16 %v243
  %v265 = vunpack.c.h.b16 %v243
  %v266 = vunpack.c.l.b16 %v244
  %v267 = vunpack.c.h.b16 %v244
  %v268 = vunpack.c.l.b16 %v245
  %v269 = vunpack.c.h.b16 %v245
  %v270 = vpack.c.b16 %v254, %v254
  %v271 = vpack.c.b16 %v255, %v255
  %v272 = vpack.c.b16 %v256, %v256
  %v273 = vpack.c.b16 %v257, %v257
  %v274 = vpack.c.b16 %v258, %v258
  %v275 = vpack.c.b16 %v259, %v259
  %v276 = vpack.c.b16 %v260, %v260
  %v277 = vpack.c.b16 %v261, %v261
  %v278 = vpack.c.b16 %v262, %v262
  %v279 = vpack.c.b16 %v263, %v263
  %v280 = vpack.c.b16 %v264, %v264
  %v281 = vpack.c.b16 %v265, %v265
  %v282 = vpack.c.b16 %v266, %v266
  %v283 = vpack.c.b16 %v267, %v267
  %v284 = vpack.c.b16 %v268, %v268
  %v285 = vpack.c.b16 %v269, %v269
  %vm302 = vcmask 125952
  %303 = vst.msk [vmem:[%s3] sm:$0xf] %vm302, %v270
  %304 = vst.msk [vmem:[%s3 + $0x4] sm:$0xf] %vm302, %v271
  %305 = vst.msk [vmem:[%s3 + $0x8] sm:$0xf] %vm302, %v272
  %306 = vst.msk [vmem:[%s3 + $0xc] sm:$0xf] %vm302, %v273
  %307 = vst.msk [vmem:[%s3 + $0x10] sm:$0xf] %vm302, %v274
  %308 = vst.msk [vmem:[%s3 + $0x14] sm:$0xf] %vm302, %v275
  %309 = vst.msk [vmem:[%s3 + $0x18] sm:$0xf] %vm302, %v276
  %310 = vst.msk [vmem:[%s3 + $0x1c] sm:$0xf] %vm302, %v277
  %311 = vst.msk [vmem:[%s3 + $0x20] sm:$0xf] %vm302, %v278
  %312 = vst.msk [vmem:[%s3 + $0x24] sm:$0xf] %vm302, %v279
  %313 = vst.msk [vmem:[%s3 + $0x28] sm:$0xf] %vm302, %v280
  %314 = vst.msk [vmem:[%s3 + $0x2c] sm:$0xf] %vm302, %v281
  %315 = vst.msk [vmem:[%s3 + $0x30] sm:$0xf] %vm302, %v282
  %316 = vst.msk [vmem:[%s3 + $0x34] sm:$0xf] %vm302, %v283
  %317 = vst.msk [vmem:[%s3 + $0x38] sm:$0xf] %vm302, %v284
  %318 = vst.msk [vmem:[%s3 + $0x3c] sm:$0xf] %vm302, %v285
  // Predicated region
  $region14: #{semantic_segmentation_forward.14} parent=0 // pred_check
    _
  $region15: #{semantic_segmentation_forward.14} parent=0 // pred_check_branch
    %320 = sbr.rel (0) target = $region17
  $region16: #{semantic_segmentation_forward.14} parent=0 // pred_region
    _
  $region17: #{semantic_segmentation_forward.14} parent=0 // pred_fallthru
    _
  // Predicated region
  $region18: #{semantic_segmentation_forward.14} parent=0 // pred_check
    _
  $region19: #{semantic_segmentation_forward.14} parent=0 // pred_check_branch
    %322 = sbr.rel (0) target = $region21
  $region20: #{semantic_segmentation_forward.14} parent=0 // pred_region
    _
  $region21: #{semantic_segmentation_forward.14} parent=0 // pred_fallthru
    _

// kernel: semantic_segmentation_forward.15
$region0: #{semantic_segmentation_forward.15}
  #allocation0 [shape = 'u32[]', space=smem, size = 0x4, offset = 0x4, fixed_abs, tag = 'smem constant byte address 0x4 - core index']
  #allocation1 [shape = 'u32[144,128]{1,0:T(1,128)}', space=vmem, size = 0x12000, scoped, tag = 'internal scratch']
  %s0 = inlined_call_operand.vmem [shape: bf16[32,144], index: 0, kind: input, shape index: {}]
  %s1 = inlined_call_operand.vmem [shape: bf16[144,32], index: 1, kind: input, shape index: {}]
  %s2 = inlined_call_operand.vmem [shape: f32[1,32], index: 2, kind: input, shape index: {}]
  %s3 = inlined_call_operand.vmem [shape: bf16[32,32], index: 3, kind: output, shape index: {}]
  %s4 = sld [smem:[#allocation0]]
  $region22: #{semantic_segmentation_forward.15} parent=0
    _
  %s6 = ssub.s32 1, %s4
  %s7 = scalar_select 0, %s6, %s4
  // Predicated region
  $region2: #{semantic_segmentation_forward.15} parent=0 // pred_check
    _
  $region3: #{semantic_segmentation_forward.15} parent=0 // pred_check_branch
    %9 = sbr.rel (0) target = $region5
  $region4: #{semantic_segmentation_forward.15} parent=0 // pred_region
    _
  $region5: #{semantic_segmentation_forward.15} parent=0 // pred_fallthru
    _
  // Predicated region
  $region6: #{semantic_segmentation_forward.15} parent=0 // pred_check
    _
  $region7: #{semantic_segmentation_forward.15} parent=0 // pred_check_branch
    %11 = sbr.rel (0) target = $region9
  $region8: #{semantic_segmentation_forward.15} parent=0 // pred_region
    _
  $region9: #{semantic_segmentation_forward.15} parent=0 // pred_fallthru
    _
  // Predicated region
  $region10: #{semantic_segmentation_forward.15} parent=0 // pred_check
    _
  $region11: #{semantic_segmentation_forward.15} parent=0 // pred_check_branch
    %13 = sbr.rel (0) target = $region13
  $region12: #{semantic_segmentation_forward.15} parent=0 // pred_region
    _
  $region13: #{semantic_segmentation_forward.15} parent=0 // pred_fallthru
    _
  %v15 = vld [vmem:[%s0] sm:$0xff]
  %v16 = vld [vmem:[%s0 + $0x8] sm:$0xff]
  %v17 = vld [vmem:[%s0 + $0x10] sm:$0xff]
  %v18 = vld [vmem:[%s0 + $0x18] sm:$0xff]
  %v19 = vld [vmem:[%s1] sm:$0xf]
  %v20 = vld [vmem:[%s1 + $0x4] sm:$0xf]
  %v21 = vld [vmem:[%s1 + $0x8] sm:$0xf]
  %v22 = vld [vmem:[%s1 + $0xc] sm:$0xf]
  %v23 = vld [vmem:[%s1 + $0x10] sm:$0xf]
  %v24 = vld [vmem:[%s1 + $0x14] sm:$0xf]
  %v25 = vld [vmem:[%s1 + $0x18] sm:$0xf]
  %v26 = vld [vmem:[%s1 + $0x1c] sm:$0xf]
  %v27 = vld [vmem:[%s1 + $0x20] sm:$0xf]
  %v28 = vld [vmem:[%s1 + $0x24] sm:$0xf]
  %v29 = vld [vmem:[%s1 + $0x28] sm:$0xf]
  %v30 = vld [vmem:[%s1 + $0x2c] sm:$0xf]
  %v31 = vld [vmem:[%s1 + $0x30] sm:$0xf]
  %v32 = vld [vmem:[%s1 + $0x34] sm:$0xf]
  %v33 = vld [vmem:[%s1 + $0x38] sm:$0xf]
  %v34 = vld [vmem:[%s1 + $0x3c] sm:$0xf]
  %v35 = vld [vmem:[%s1 + $0x40] sm:$0xf]
  %v36 = vld [vmem:[%s1 + $0x44] sm:$0xf]
  %v37 = vld [vmem:[%s2] sm:$0x1]
  %v39 = vlaneseq
  %v40 = vshrl.u32 %v39, 7
  %v41 = vsub.s32 0, %v40
  %v42 = vrot.slane %v37, %v41
  %v48 = vunpack.c.l.b16 %v15
  %v49 = vunpack.c.h.b16 %v15
  %v50 = vunpack.c.l.b16 %v16
  %v51 = vunpack.c.h.b16 %v16
  %v52 = vunpack.c.l.b16 %v17
  %v53 = vunpack.c.h.b16 %v17
  %v54 = vunpack.c.l.b16 %v18
  %v55 = vunpack.c.h.b16 %v18
  %v56 = vpack.c.b16 %v50, %v48
  %v57 = vpack.c.b16 %v51, %v49
  %v58 = vpack.c.b16 %v54, %v52
  %v59 = vpack.c.b16 %v55, %v53
  %v80 = vunpack.c.l.b16 %v19
  %v81 = vunpack.c.l.b16 %v20
  %v82 = vunpack.c.l.b16 %v21
  %v83 = vunpack.c.l.b16 %v22
  %v84 = vunpack.c.l.b16 %v23
  %v85 = vunpack.c.l.b16 %v24
  %v86 = vunpack.c.l.b16 %v25
  %v87 = vunpack.c.l.b16 %v26
  %v88 = vunpack.c.l.b16 %v27
  %v89 = vunpack.c.l.b16 %v28
  %v90 = vunpack.c.l.b16 %v29
  %v91 = vunpack.c.l.b16 %v30
  %v92 = vunpack.c.l.b16 %v31
  %v93 = vunpack.c.l.b16 %v32
  %v94 = vunpack.c.l.b16 %v33
  %v95 = vunpack.c.l.b16 %v34
  %v96 = vunpack.c.l.b16 %v35
  %v97 = vunpack.c.l.b16 %v36
  %v98 = vpack.c.b16 %v81, %v80
  %v99 = vpack.c.b16 %v83, %v82
  %v100 = vpack.c.b16 %v85, %v84
  %v101 = vpack.c.b16 %v87, %v86
  %v102 = vpack.c.b16 %v89, %v88
  %v103 = vpack.c.b16 %v91, %v90
  %v104 = vpack.c.b16 %v93, %v92
  %v105 = vpack.c.b16 %v95, %v94
  %v106 = vpack.c.b16 %v97, %v96
  %vm116 = vcmask 130048
  %v118 = vsel %vm116, %v57, 0
  %v121 = vsel %vm116, %v59, 0
  %123 = vmatprep.subr.bf16.mxu0 0
  %124 = vmatpush1.bf16.msra.mxu0 %v98
  %125 = vmatprep.subr.bf16.mxu0 0
  %126 = vmatpush1.bf16.msra.mxu0 %v99
  %127 = vmatprep.subr.bf16.mxu0 0
  %128 = vmatpush1.bf16.msra.mxu0 %v100
  %129 = vmatprep.subr.bf16.mxu0 0
  %130 = vmatpush1.bf16.msra.mxu0 %v101
  %131 = vmatprep.subr.bf16.mxu0 0
  %132 = vmatpush1.bf16.msra.mxu0 %v102
  %133 = vmatprep.subr.bf16.mxu0 0
  %134 = vmatpush1.bf16.msra.mxu0 %v103
  %135 = vmatprep.subr.bf16.mxu0 0
  %136 = vmatpush1.bf16.msra.mxu0 %v104
  %137 = vmatprep.subr.bf16.mxu0 0
  %138 = vmatpush1.bf16.msra.mxu0 %v105
  %139 = vmatprep.subr.bf16.mxu0 0
  %140 = vmatpush1.bf16.msra.mxu0 %v106
  %141 = vmatprep.subr.bf16.mxu0 0
  %142 = vmatpush1.bf16.msra.mxu0 0
  %143 = vmatprep.subr.bf16.mxu0 0
  %144 = vmatpush1.bf16.msra.mxu0 0
  %145 = vmatprep.subr.bf16.mxu0 0
  %146 = vmatpush1.bf16.msra.mxu0 0
  %147 = vmatprep.subr.bf16.mxu0 0
  %148 = vmatpush1.bf16.msra.mxu0 0
  %149 = vmatprep.subr.bf16.mxu0 0
  %150 = vmatpush1.bf16.msra.mxu0 0
  %151 = vmatprep.subr.bf16.mxu0 0
  %152 = vmatpush1.bf16.msra.mxu0 0
  %153 = vmatprep.subr.bf16.mxu0 0
  %154 = vmatpush1.bf16.msra.mxu0 0
  %155 = vmatprep.mubr.bf16.mxu0 %v118
  %156 = vmatmul.mubr.bf16.gmra.mrb[0].mxu0 %v56
  %v157 = vpop.f32.mrb[0].mxu0
  %v158 = vadd.f32 %v42, %v157
  %v159 = vpop.f32.mrb[0].mxu0
  %v160 = vpop.f32.mrb[0].mxu0
  %v161 = vadd.f32 %v42, %v160
  %v162 = vpop.f32.mrb[0].mxu0
  %163 = vmatprep.mubr.bf16.mxu0 %v121
  %164 = vmatmul.mubr.bf16.gmra.mrb[0].mxu0 %v58
  %v165 = vpop.f32.mrb[0].mxu0
  %v166 = vadd.f32 %v42, %v165
  %v167 = vpop.f32.mrb[0].mxu0
  %v168 = vpop.f32.mrb[0].mxu0
  %v169 = vadd.f32 %v42, %v168
  %v170 = vpop.f32.mrb[0].mxu0
  %171 = vdwg.mxu0
  %v172 = vmax.f32 %v158, 0.0
  %v173 = vmax.f32 %v161, 0.0
  %v174 = vmax.f32 %v166, 0.0
  %v175 = vmax.f32 %v169, 0.0
  %v176 = vpack.c.bf16 %v173, %v172
  %v177 = vpack.c.bf16 %v175, %v174
  %v180 = vunpack.c.l.b16 %v176
  %v181 = vunpack.c.h.b16 %v176
  %v182 = vunpack.c.l.b16 %v177
  %v183 = vunpack.c.h.b16 %v177
  %v184 = vpack.c.b16 %v180, %v180
  %v185 = vpack.c.b16 %v181, %v181
  %v186 = vpack.c.b16 %v182, %v182
  %v187 = vpack.c.b16 %v183, %v183
  %vm192 = vcmask 257024
  %193 = vst.msk [vmem:[%s3] sm:$0xf] %vm192, %v184
  %194 = vst.msk [vmem:[%s3 + $0x4] sm:$0xf] %vm192, %v185
  %195 = vst.msk [vmem:[%s3 + $0x8] sm:$0xf] %vm192, %v186
  %196 = vst.msk [vmem:[%s3 + $0xc] sm:$0xf] %vm192, %v187
  // Predicated region
  $region14: #{semantic_segmentation_forward.15} parent=0 // pred_check
    _
  $region15: #{semantic_segmentation_forward.15} parent=0 // pred_check_branch
    %198 = sbr.rel (0) target = $region17
  $region16: #{semantic_segmentation_forward.15} parent=0 // pred_region
    _
  $region17: #{semantic_segmentation_forward.15} parent=0 // pred_fallthru
    _
  // Predicated region
  $region18: #{semantic_segmentation_forward.15} parent=0 // pred_check
    _
  $region19: #{semantic_segmentation_forward.15} parent=0 // pred_check_branch
    %200 = sbr.rel (0) target = $region21
  $region20: #{semantic_segmentation_forward.15} parent=0 // pred_region
    _
  $region21: #{semantic_segmentation_forward.15} parent=0 // pred_fallthru
    _

// kernel: semantic_segmentation_forward.21
$region0: #{semantic_segmentation_forward.21}
  #allocation0 [shape = 'u32[]', space=smem, size = 0x4, offset = 0x4, fixed_abs, tag = 'smem constant byte address 0x4 - core index']
  #allocation1 [shape = 'u32[144,128]{1,0:T(1,128)}', space=vmem, size = 0x12000, scoped, tag = 'internal scratch']
  %s0 = inlined_call_operand.vmem [shape: bf16[2,4,64], index: 0, kind: input, shape index: {}]
  %s1 = inlined_call_operand.vmem [shape: f32[2,64], index: 1, kind: output, shape index: {}]
  %s2 = sld [smem:[#allocation0]]
  $region22: #{semantic_segmentation_forward.21} parent=0
    _
  %s4 = ssub.s32 1, %s2
  %s5 = scalar_select 0, %s4, %s2
  // Predicated region
  $region2: #{semantic_segmentation_forward.21} parent=0 // pred_check
    _
  $region3: #{semantic_segmentation_forward.21} parent=0 // pred_check_branch
    %7 = sbr.rel (0) target = $region5
  $region4: #{semantic_segmentation_forward.21} parent=0 // pred_region
    _
  $region5: #{semantic_segmentation_forward.21} parent=0 // pred_fallthru
    _
  %p8 = scmp.eq.s32.totalorder 0, 0
  // Predicated region
  $region6: #{semantic_segmentation_forward.21} parent=0 // pred_check
    %p9 = pneg %p8
  $region7: #{semantic_segmentation_forward.21} parent=0 // pred_check_branch
    %11 = sbr.rel (%p9) target = $region9
  $region8: #{semantic_segmentation_forward.21} parent=0 // pred_region
    %vm12 = vcmask 517120
    %13 = vst.msk [vmem:[%s1] sm:$0x3] %vm12, 0.0
  $region9: #{semantic_segmentation_forward.21} parent=0 // pred_fallthru
    _
  %v14 = vld [vmem:[%s1] sm:$0x3]
  %v15 = vld [vmem:[%s0] sm:$0x3]
  %v16 = vld [vmem:[%s0 + $0x2] sm:$0x3]
  %v17 = vunpack.c.l.bf16 %v15
  %v18 = vunpack.c.l.bf16 %v16
  %vm19 = vcmask 519168
  %v20 = vsel %vm19, %v17, 0.0
  %v21 = vrot.slane %v20, 4
  %v22 = vadd.f32 %v20, %v21
  %v23 = vrot.slane %v22, 2
  %v24 = vadd.f32 %v22, %v23
  %v25 = vrot.slane %v24, 1
  %v26 = vadd.f32 %v24, %v25
  %v27 = vsel %vm19, %v18, 0.0
  %v28 = vrot.slane %v27, 4
  %v29 = vadd.f32 %v27, %v28
  %v30 = vrot.slane %v29, 2
  %v31 = vadd.f32 %v29, %v30
  %v32 = vrot.slane %v31, 1
  %v33 = vadd.f32 %v31, %v32
  %vm36 = vcmask 1041409
  %v37 = vsel %vm36, %v33, %v26
  %v39 = vadd.f32 %v14, %v37
  %vm40 = vcmask 517120
  %41 = vst.msk [vmem:[%s1] sm:$0x3] %vm40, %v39
  // Predicated region
  $region10: #{semantic_segmentation_forward.21} parent=0 // pred_check
    %p42 = pneg %p8
  $region11: #{semantic_segmentation_forward.21} parent=0 // pred_check_branch
    %44 = sbr.rel (%p42) target = $region13
  $region12: #{semantic_segmentation_forward.21} parent=0 // pred_region
    %v45 = vld [vmem:[%s1] sm:$0x3]
    %v46 = vmul.f32 %v45, 0.25
    %47 = vst.msk [vmem:[%s1] sm:$0x3] %vm40, %v46
  $region13: #{semantic_segmentation_forward.21} parent=0 // pred_fallthru
    _
  // Predicated region
  $region14: #{semantic_segmentation_forward.21} parent=0 // pred_check
    _
  $region15: #{semantic_segmentation_forward.21} parent=0 // pred_check_branch
    %49 = sbr.rel (0) target = $region17
  $region16: #{semantic_segmentation_forward.21} parent=0 // pred_region
    _
  $region17: #{semantic_segmentation_forward.21} parent=0 // pred_fallthru
    _
  // Predicated region
  $region18: #{semantic_segmentation_forward.21} parent=0 // pred_check
    _
  $region19: #{semantic_segmentation_forward.21} parent=0 // pred_check_branch
    %51 = sbr.rel (0) target = $region21
  $region20: #{semantic_segmentation_forward.21} parent=0 // pred_region
    _
  $region21: #{semantic_segmentation_forward.21} parent=0 // pred_fallthru
    _

// kernel: semantic_segmentation_forward.18
$region0: #{semantic_segmentation_forward.18}
  #allocation0 [shape = 'u32[]', space=smem, size = 0x4, offset = 0x4, fixed_abs, tag = 'smem constant byte address 0x4 - core index']
  #allocation1 [shape = 'u32[144,128]{1,0:T(1,128)}', space=vmem, size = 0x12000, scoped, tag = 'internal scratch']
  %s0 = inlined_call_operand.vmem [shape: bf16[2,2,2,64], index: 0, kind: input, shape index: {}]
  %s1 = inlined_call_operand.vmem [shape: bf16[1,64,32], index: 1, kind: input, shape index: {}]
  %s2 = inlined_call_operand.vmem [shape: f32[1,32], index: 2, kind: input, shape index: {}]
  %s3 = inlined_call_operand.vmem [shape: bf16[2,2,2,32], index: 3, kind: output, shape index: {}]
  %s4 = sld [smem:[#allocation0]]
  $region45: #{semantic_segmentation_forward.18} parent=0
    _
  %s6 = ssub.s32 1, %s4
  %s7 = scalar_select 0, %s6, %s4
  loop: start=0, step=1, limit=4
  $region2: #{semantic_segmentation_forward.18} parent=0 // loop_pre_header
    _
  $region3: #{semantic_segmentation_forward.18} parent=0 // loop_header
    %s9 = sphi 0, %s13
    %p10 = scmp.ge.s32.totalorder %s9, 4
    %s19 = sphi 0, %s21
    %s22 = sphi 0, %s19
    %s23 = sphi 0, %s22
    %s39 = sphi 0, %s23
    %s43 = sphi 0, %s43
    %s45 = sphi 0, %s43
    %s46 = sphi 0, %s45
    %s60 = sphi 0, %s46
    %s64 = sphi 0, %s64
    %s66 = sphi 0, %s64
    %s67 = sphi 0, %s66
    %s81 = sphi 0, %s67
    %s87 = sphi 0, %s89
    %s90 = sphi 0, %s87
    %s91 = sphi 0, %s90
    %s107 = sphi 0, %s91
  $region4: #{semantic_segmentation_forward.18} parent=0 // loop_header_branch
    %12 = sbr.rel (%p10) target = $region8
  $region5: #{semantic_segmentation_forward.18} parent=0 // loop_body
    %s14 = ssub.s32 %s9, 1
    %s15 = ssub.s32 %s9, 2
    %s16 = sadd.s32 %s9, 1
    %s17 = ssub.s32 %s9, %s16
    %p18 = scmp.eq.s32.totalorder %s17, 0
    %s20 = sadd.s32 %s19, 1
    %s21 = scalar_select %p18, %s19, %s20
    %p24 = pneg %p18
    %p25 = scmp.eq.s32.totalorder %s9, 1
    %p26 = por %p24, %p25
    %p27 = scmp.ne.s32.totalorder %s19, %s22
    %p28 = scmp.eq.s32.totalorder %s9, 0
    %p29 = por %p27, %p28
    %p30 = scmp.ne.s32.totalorder %s19, %s22
    %p31 = scmp.eq.s32.totalorder %s14, 1
    %p32 = por %p30, %p31
    %p33 = scmp.ne.s32.totalorder %s22, %s23
    %p34 = scmp.eq.s32.totalorder %s14, 0
    %p35 = por %p33, %p34
    %p36 = scmp.ne.s32.totalorder %s22, %s23
    %p37 = scmp.eq.s32.totalorder %s15, 1
    %p38 = por %p36, %p37
    %p40 = scmp.ne.s32.totalorder %s23, %s39
    %p41 = scmp.eq.s32.totalorder %s15, 0
    %p42 = por %p40, %p41
    %s44 = sadd.s32 %s43, 1
    %p47 = scmp.eq.s32.totalorder %s9, 1
    %p48 = scmp.ne.s32.totalorder %s43, %s45
    %p49 = scmp.eq.s32.totalorder %s9, 0
    %p50 = por %p48, %p49
    %p51 = scmp.ne.s32.totalorder %s43, %s45
    %p52 = scmp.eq.s32.totalorder %s14, 1
    %p53 = por %p51, %p52
    %p54 = scmp.ne.s32.totalorder %s45, %s46
    %p55 = scmp.eq.s32.totalorder %s14, 0
    %p56 = por %p54, %p55
    %p57 = scmp.ne.s32.totalorder %s45, %s46
    %p58 = scmp.eq.s32.totalorder %s15, 1
    %p59 = por %p57, %p58
    %p61 = scmp.ne.s32.totalorder %s46, %s60
    %p62 = scmp.eq.s32.totalorder %s15, 0
    %p63 = por %p61, %p62
    %s65 = sadd.s32 %s64, 1
    %p68 = scmp.eq.s32.totalorder %s9, 1
    %p69 = scmp.ne.s32.totalorder %s64, %s66
    %p70 = scmp.eq.s32.totalorder %s9, 0
    %p71 = por %p69, %p70
    %p72 = scmp.ne.s32.totalorder %s64, %s66
    %p73 = scmp.eq.s32.totalorder %s14, 1
    %p74 = por %p72, %p73
    %p75 = scmp.ne.s32.totalorder %s66, %s67
    %p76 = scmp.eq.s32.totalorder %s14, 0
    %p77 = por %p75, %p76
    %p78 = scmp.ne.s32.totalorder %s66, %s67
    %p79 = scmp.eq.s32.totalorder %s15, 1
    %p80 = por %p78, %p79
    %p82 = scmp.ne.s32.totalorder %s67, %s81
    %p83 = scmp.eq.s32.totalorder %s15, 0
    %p84 = por %p82, %p83
    %s85 = ssub.s32 %s9, %s16
    %p86 = scmp.eq.s32.totalorder %s85, 0
    %s88 = sadd.s32 %s87, 1
    %s89 = scalar_select %p86, %s87, %s88
    %p92 = pneg %p86
    %p93 = scmp.eq.s32.totalorder %s9, 1
    %p94 = por %p92, %p93
    %p95 = scmp.ne.s32.totalorder %s87, %s90
    %p96 = scmp.eq.s32.totalorder %s9, 0
    %p97 = por %p95, %p96
    %p98 = scmp.ne.s32.totalorder %s87, %s90
    %p99 = scmp.eq.s32.totalorder %s14, 1
    %p100 = por %p98, %p99
    %p101 = scmp.ne.s32.totalorder %s90, %s91
    %p102 = scmp.eq.s32.totalorder %s14, 0
    %p103 = por %p101, %p102
    %p104 = scmp.ne.s32.totalorder %s90, %s91
    %p105 = scmp.eq.s32.totalorder %s15, 1
    %p106 = por %p104, %p105
    %p108 = scmp.ne.s32.totalorder %s91, %s107
    %p109 = scmp.eq.s32.totalorder %s15, 0
    %p110 = por %p108, %p109
    %p111 = scmp.le.s32.totalorder 1, %s9
    %p112 = scmp.lt.s32.totalorder %s9, 3
    %p113 = pnand %p111, %p112
    %p114 = pneg %p113
    // Predicated region
    $region9: #{semantic_segmentation_forward.18} parent=5 // pred_check
      _
    $region10: #{semantic_segmentation_forward.18} parent=5 // pred_check_branch
      %116 = sbr.rel (%p113) target = $region12
    $region11: #{semantic_segmentation_forward.18} parent=5 // pred_region
      %s117 = ssub.s32 %s9, 1
      // Predicated region
      $region13: #{semantic_segmentation_forward.18} parent=11 // pred_check
        %p118 = pneg %p56
      $region14: #{semantic_segmentation_forward.18} parent=11 // pred_check_branch
        %120 = sbr.rel (%p118) target = $region16
      $region15: #{semantic_segmentation_forward.18} parent=11 // pred_region
        _
      $region16: #{semantic_segmentation_forward.18} parent=11 // pred_fallthru
        _
      // Predicated region
      $region17: #{semantic_segmentation_forward.18} parent=11 // pred_check
        %p121 = pneg %p77
      $region18: #{semantic_segmentation_forward.18} parent=11 // pred_check_branch
        %123 = sbr.rel (%p121) target = $region20
      $region19: #{semantic_segmentation_forward.18} parent=11 // pred_region
        _
      $region20: #{semantic_segmentation_forward.18} parent=11 // pred_fallthru
        _
    $region12: #{semantic_segmentation_forward.18} parent=5 // pred_fallthru
      _
    %p124 = scmp.lt.s32.totalorder %s9, 2
    // Predicated region
    $region21: #{semantic_segmentation_forward.18} parent=5 // pred_check
      %p125 = pneg %p124
    $region22: #{semantic_segmentation_forward.18} parent=5 // pred_check_branch
      %127 = sbr.rel (%p125) target = $region24
    $region23: #{semantic_segmentation_forward.18} parent=5 // pred_region
      // Predicated region
      $region25: #{semantic_segmentation_forward.18} parent=23 // pred_check
        %p128 = pneg %p29
      $region26: #{semantic_segmentation_forward.18} parent=23 // pred_check_branch
        %130 = sbr.rel (%p128) target = $region28
      $region27: #{semantic_segmentation_forward.18} parent=23 // pred_region
        %p131 = scmp.lt.s32.totalorder %s9, 1
        %s132 = scalar_select %p131, %s9, 1
        %s133 = smul.addr %s132, 2
        %s134 = scalar_lea.vmem %s0, %s133
      $region28: #{semantic_segmentation_forward.18} parent=23 // pred_fallthru
        _
    $region24: #{semantic_segmentation_forward.18} parent=5 // pred_fallthru
      _
    %p135 = scmp.le.s32.totalorder 1, %s9
    %p136 = scmp.lt.s32.totalorder %s9, 3
    %p137 = pnand %p135, %p136
    %p138 = pneg %p137
    // Predicated region
    $region29: #{semantic_segmentation_forward.18} parent=5 // pred_check
      _
    $region30: #{semantic_segmentation_forward.18} parent=5 // pred_check_branch
      %140 = sbr.rel (%p137) target = $region32
    $region31: #{semantic_segmentation_forward.18} parent=5 // pred_region
      %s141 = ssub.s32 %s9, 1
      %p142 = scmp.lt.s32.totalorder %s14, 1
      %s143 = scalar_select %p142, %s14, 1
      %s144 = smul.addr %s143, 2
      %s145 = scalar_lea.vmem %s0, %s144
      %p146 = pneg %p35
      %p147 = pneg %p32
      %p148 = pneg %p56
      %p149 = pneg %p53
      %p150 = pneg %p77
      %p151 = pneg %p74
      %p152 = pneg %p103
      %p153 = pneg %p100
      %p154 = scmp.lt.s32.totalorder %s14, 1
      %s155 = scalar_select %p154, %s14, 1
      %s156 = smul.addr %s155, 2
      %s157 = scalar_lea.vmem %s3, %s156
      %p158 = scmp.lt.s32.totalorder %s14, 1
      %s159 = scalar_select %p158, %s14, 1
      %s160 = smul.addr %s159, 2
      %s161 = scalar_lea.vmem %s0, %s160
      %p162 = scmp.lt.s32.totalorder %s14, 1
      %s163 = scalar_select %p162, %s14, 1
      %s164 = smul.addr %s163, 2
      %s165 = scalar_lea.vmem %s3, %s164
      %v167 = vld [vmem:[%s161] sm:$0x1]
      %v168 = vld [vmem:[%s161 + $0x1] sm:$0x1]
      %v169 = vunpack.c.l.bf16 %v167
      %v170 = vunpack.c.l.bf16 %v168
      %v173 = vcombine.low %v169, %v170
      %v175 = vunpack.c.l.s4 1983009808
      %v176 = vunpack.c.0.s8 %v175
      %v177 = vlaneseq
      %v178 = vshrl.u32 %v177, 7
      %v179 = vsub.s32 %v176, %v178
      %v180 = vrot.slane %v173, %v179
      %v182 = vpack.c.bf16 %v180, %v180
      %v183 = vld [vmem:[%s1] sm:$0xf]
      %v184 = vld [vmem:[%s1 + $0x4] sm:$0xf]
      %v185 = vld [vmem:[%s1 + $0x8] sm:$0xf]
      %v186 = vld [vmem:[%s1 + $0xc] sm:$0xf]
      %v187 = vld [vmem:[%s1 + $0x10] sm:$0xf]
      %v188 = vld [vmem:[%s1 + $0x14] sm:$0xf]
      %v189 = vld [vmem:[%s1 + $0x18] sm:$0xf]
      %v190 = vld [vmem:[%s1 + $0x1c] sm:$0xf]
      %v191 = vld [vmem:[%s2] sm:$0x1]
      %v193 = vlaneseq
      %v194 = vshrl.u32 %v193, 7
      %v195 = vsub.s32 0, %v194
      %v196 = vrot.slane %v191, %v195
      %v206 = vunpack.c.l.b16 %v183
      %v207 = vunpack.c.l.b16 %v184
      %v208 = vunpack.c.l.b16 %v185
      %v209 = vunpack.c.l.b16 %v186
      %v210 = vunpack.c.l.b16 %v187
      %v211 = vunpack.c.l.b16 %v188
      %v212 = vunpack.c.l.b16 %v189
      %v213 = vunpack.c.l.b16 %v190
      %v214 = vpack.c.b16 %v207, %v206
      %v215 = vpack.c.b16 %v209, %v208
      %v216 = vpack.c.b16 %v211, %v210
      %v217 = vpack.c.b16 %v213, %v212
      %vm222 = vcmask 523264
      %v224 = vsel %vm222, %v182, 0
      %226 = vmatprep.subr.bf16.mxu0 0
      %227 = vmatpush1.bf16.msra.mxu0 %v214
      %228 = vmatprep.subr.bf16.mxu0 0
      %229 = vmatpush1.bf16.msra.mxu0 %v215
      %230 = vmatprep.subr.bf16.mxu0 0
      %231 = vmatpush1.bf16.msra.mxu0 %v216
      %232 = vmatprep.subr.bf16.mxu0 0
      %233 = vmatpush1.bf16.msra.mxu0 %v217
      %234 = vmatprep.subr.bf16.mxu0 0
      %235 = vmatpush1.bf16.msra.mxu0 0
      %236 = vmatprep.subr.bf16.mxu0 0
      %237 = vmatpush1.bf16.msra.mxu0 0
      %238 = vmatprep.subr.bf16.mxu0 0
      %239 = vmatpush1.bf16.msra.mxu0 0
      %240 = vmatprep.subr.bf16.mxu0 0
      %241 = vmatpush1.bf16.msra.mxu0 0
      %242 = vmatprep.subr.bf16.mxu0 0
      %243 = vmatpush1.bf16.msra.mxu0 0
      %244 = vmatprep.subr.bf16.mxu0 0
      %245 = vmatpush1.bf16.msra.mxu0 0
      %246 = vmatprep.subr.bf16.mxu0 0
      %247 = vmatpush1.bf16.msra.mxu0 0
      %248 = vmatprep.subr.bf16.mxu0 0
      %249 = vmatpush1.bf16.msra.mxu0 0
      %250 = vmatprep.subr.bf16.mxu0 0
      %251 = vmatpush1.bf16.msra.mxu0 0
      %252 = vmatprep.subr.bf16.mxu0 0
      %253 = vmatpush1.bf16.msra.mxu0 0
      %254 = vmatprep.subr.bf16.mxu0 0
      %255 = vmatpush1.bf16.msra.mxu0 0
      %256 = vmatprep.subr.bf16.mxu0 0
      %257 = vmatpush1.bf16.msra.mxu0 0
      %258 = vmatprep.mubr.bf16.mxu0 0
      %259 = vmatmul.mubr.bf16.gmra.mrb[0].mxu0 %v224
      %v260 = vpop.f32.mrb[0].mxu0
      %v261 = vadd.f32 %v196, %v260
      %v262 = vpop.f32.mrb[0].mxu0
      %v263 = vpop.f32.mrb[0].mxu0
      %v264 = vpop.f32.mrb[0].mxu0
      %265 = vdwg.mxu0
      %v266 = vmax.f32 %v261, 0.0
      %v269 = vunpack.c.l.s4 1983009808
      %v270 = vunpack.c.0.s8 %v269
      %v271 = vlaneseq
      %v272 = vshrl.u32 %v271, 7
      %v273 = vsub.s32 %v270, %v272
      %v274 = vrot.slane %v266, %v273
      %v275 = vcombine.high %v274, %v274
      %v278 = vpack.c.bf16 %v274, %v274
      %v279 = vpack.c.bf16 %v275, %v275
      %vm280 = vcmask 253952
      %281 = vst.msk [vmem:[%s165] sm:$0x1] %vm280, %v278
      %282 = vst.msk [vmem:[%s165 + $0x1] sm:$0x1] %vm280, %v279
      %p283 = scmp.lt.s32.totalorder %s14, 1
      %s284 = scalar_select %p283, %s14, 1
      %s285 = smul.addr %s284, 2
      %s286 = scalar_lea.vmem %s3, %s285
      // Predicated region
      $region33: #{semantic_segmentation_forward.18} parent=31 // pred_check
        %p287 = pneg %p100
      $region34: #{semantic_segmentation_forward.18} parent=31 // pred_check_branch
        %289 = sbr.rel (%p287) target = $region36
      $region35: #{semantic_segmentation_forward.18} parent=31 // pred_region
        _
      $region36: #{semantic_segmentation_forward.18} parent=31 // pred_fallthru
        _
    $region32: #{semantic_segmentation_forward.18} parent=5 // pred_fallthru
      _
    %p290 = scmp.le.s32.totalorder 2, %s9
    // Predicated region
    $region37: #{semantic_segmentation_forward.18} parent=5 // pred_check
      %p291 = pneg %p290
    $region38: #{semantic_segmentation_forward.18} parent=5 // pred_check_branch
      %293 = sbr.rel (%p291) target = $region40
    $region39: #{semantic_segmentation_forward.18} parent=5 // pred_region
      %s294 = ssub.s32 %s9, 2
      // Predicated region
      $region41: #{semantic_segmentation_forward.18} parent=39 // pred_check
        %p295 = pneg %p106
      $region42: #{semantic_segmentation_forward.18} parent=39 // pred_check_branch
        %297 = sbr.rel (%p295) target = $region44
      $region43: #{semantic_segmentation_forward.18} parent=39 // pred_region
        %p298 = scmp.lt.s32.totalorder %s15, 1
        %s299 = scalar_select %p298, %s15, 1
        %s300 = smul.addr %s299, 2
        %s301 = scalar_lea.vmem %s3, %s300
      $region44: #{semantic_segmentation_forward.18} parent=39 // pred_fallthru
        _
    $region40: #{semantic_segmentation_forward.18} parent=5 // pred_fallthru
      _
  $region6: #{semantic_segmentation_forward.18} parent=0 // loop_footer
    %s13 = sadd.s32 1, %s9
  $region7: #{semantic_segmentation_forward.18} parent=0 // loop_footer_branch
    %8 = sbr.rel target = $region3
  $region8: #{semantic_segmentation_forward.18} parent=0 // loop_exit
    _

// kernel: semantic_segmentation_forward.16
$region0: #{semantic_segmentation_forward.16}
  #allocation0 [shape = 'u32[]', space=smem, size = 0x4, offset = 0x4, fixed_abs, tag = 'smem constant byte address 0x4 - core index']
  #allocation1 [shape = 'u32[144,128]{1,0:T(1,128)}', space=vmem, size = 0x12000, scoped, tag = 'internal scratch']
  %s0 = inlined_call_operand.vmem [shape: bf16[8,288], index: 0, kind: input, shape index: {}]
  %s1 = inlined_call_operand.vmem [shape: bf16[288,64], index: 1, kind: input, shape index: {}]
  %s2 = inlined_call_operand.vmem [shape: f32[1,64], index: 2, kind: input, shape index: {}]
  %s3 = inlined_call_operand.vmem [shape: bf16[8,64], index: 3, kind: output, shape index: {}]
  %s4 = sld [smem:[#allocation0]]
  $region22: #{semantic_segmentation_forward.16} parent=0
    _
  %s6 = ssub.s32 1, %s4
  %s7 = scalar_select 0, %s6, %s4
  // Predicated region
  $region2: #{semantic_segmentation_forward.16} parent=0 // pred_check
    _
  $region3: #{semantic_segmentation_forward.16} parent=0 // pred_check_branch
    %9 = sbr.rel (0) target = $region5
  $region4: #{semantic_segmentation_forward.16} parent=0 // pred_region
    _
  $region5: #{semantic_segmentation_forward.16} parent=0 // pred_fallthru
    _
  // Predicated region
  $region6: #{semantic_segmentation_forward.16} parent=0 // pred_check
    _
  $region7: #{semantic_segmentation_forward.16} parent=0 // pred_check_branch
    %11 = sbr.rel (0) target = $region9
  $region8: #{semantic_segmentation_forward.16} parent=0 // pred_region
    _
  $region9: #{semantic_segmentation_forward.16} parent=0 // pred_fallthru
    _
  // Predicated region
  $region10: #{semantic_segmentation_forward.16} parent=0 // pred_check
    _
  $region11: #{semantic_segmentation_forward.16} parent=0 // pred_check_branch
    %13 = sbr.rel (0) target = $region13
  $region12: #{semantic_segmentation_forward.16} parent=0 // pred_region
    _
  $region13: #{semantic_segmentation_forward.16} parent=0 // pred_fallthru
    _
  %v15 = vld [vmem:[%s0] sm:$0xff]
  %v16 = vld [vmem:[%s0 + $0x8] sm:$0xf]
  %v17 = vld [vmem:[%s1] sm:$0xf]
  %v18 = vld [vmem:[%s1 + $0x4] sm:$0xf]
  %v19 = vld [vmem:[%s1 + $0x8] sm:$0xf]
  %v20 = vld [vmem:[%s1 + $0xc] sm:$0xf]
  %v21 = vld [vmem:[%s1 + $0x10] sm:$0xf]
  %v22 = vld [vmem:[%s1 + $0x14] sm:$0xf]
  %v23 = vld [vmem:[%s1 + $0x18] sm:$0xf]
  %v24 = vld [vmem:[%s1 + $0x1c] sm:$0xf]
  %v25 = vld [vmem:[%s1 + $0x20] sm:$0xf]
  %v26 = vld [vmem:[%s1 + $0x24] sm:$0xf]
  %v27 = vld [vmem:[%s1 + $0x28] sm:$0xf]
  %v28 = vld [vmem:[%s1 + $0x2c] sm:$0xf]
  %v29 = vld [vmem:[%s1 + $0x30] sm:$0xf]
  %v30 = vld [vmem:[%s1 + $0x34] sm:$0xf]
  %v31 = vld [vmem:[%s1 + $0x38] sm:$0xf]
  %v32 = vld [vmem:[%s1 + $0x3c] sm:$0xf]
  %v33 = vld [vmem:[%s1 + $0x40] sm:$0xf]
  %v34 = vld [vmem:[%s1 + $0x44] sm:$0xf]
  %v35 = vld [vmem:[%s1 + $0x48] sm:$0xf]
  %v36 = vld [vmem:[%s1 + $0x4c] sm:$0xf]
  %v37 = vld [vmem:[%s1 + $0x50] sm:$0xf]
  %v38 = vld [vmem:[%s1 + $0x54] sm:$0xf]
  %v39 = vld [vmem:[%s1 + $0x58] sm:$0xf]
  %v40 = vld [vmem:[%s1 + $0x5c] sm:$0xf]
  %v41 = vld [vmem:[%s1 + $0x60] sm:$0xf]
  %v42 = vld [vmem:[%s1 + $0x64] sm:$0xf]
  %v43 = vld [vmem:[%s1 + $0x68] sm:$0xf]
  %v44 = vld [vmem:[%s1 + $0x6c] sm:$0xf]
  %v45 = vld [vmem:[%s1 + $0x70] sm:$0xf]
  %v46 = vld [vmem:[%s1 + $0x74] sm:$0xf]
  %v47 = vld [vmem:[%s1 + $0x78] sm:$0xf]
  %v48 = vld [vmem:[%s1 + $0x7c] sm:$0xf]
  %v49 = vld [vmem:[%s1 + $0x80] sm:$0xf]
  %v50 = vld [vmem:[%s1 + $0x84] sm:$0xf]
  %v51 = vld [vmem:[%s1 + $0x88] sm:$0xf]
  %v52 = vld [vmem:[%s1 + $0x8c] sm:$0xf]
  %v53 = vld [vmem:[%s2] sm:$0x1]
  %v55 = vlaneseq
  %v56 = vshrl.u32 %v55, 7
  %v57 = vsub.s32 0, %v56
  %v58 = vrot.slane %v53, %v57
  %v62 = vunpack.c.l.b16 %v15
  %v63 = vunpack.c.h.b16 %v15
  %v64 = vunpack.c.l.b16 %v16
  %v65 = vpack.c.b16 %v62, %v62
  %v66 = vpack.c.b16 %v63, %v63
  %v67 = vpack.c.b16 %v64, %v64
  %v106 = vunpack.c.l.b16 %v17
  %v107 = vunpack.c.l.b16 %v18
  %v108 = vunpack.c.l.b16 %v19
  %v109 = vunpack.c.l.b16 %v20
  %v110 = vunpack.c.l.b16 %v21
  %v111 = vunpack.c.l.b16 %v22
  %v112 = vunpack.c.l.b16 %v23
  %v113 = vunpack.c.l.b16 %v24
  %v114 = vunpack.c.l.b16 %v25
  %v115 = vunpack.c.l.b16 %v26
  %v116 = vunpack.c.l.b16 %v27
  %v117 = vunpack.c.l.b16 %v28
  %v118 = vunpack.c.l.b16 %v29
  %v119 = vunpack.c.l.b16 %v30
  %v120 = vunpack.c.l.b16 %v31
  %v121 = vunpack.c.l.b16 %v32
  %v122 = vunpack.c.l.b16 %v33
  %v123 = vunpack.c.l.b16 %v34
  %v124 = vunpack.c.l.b16 %v35
  %v125 = vunpack.c.l.b16 %v36
  %v126 = vunpack.c.l.b16 %v37
  %v127 = vunpack.c.l.b16 %v38
  %v128 = vunpack.c.l.b16 %v39
  %v129 = vunpack.c.l.b16 %v40
  %v130 = vunpack.c.l.b16 %v41
  %v131 = vunpack.c.l.b16 %v42
  %v132 = vunpack.c.l.b16 %v43
  %v133 = vunpack.c.l.b16 %v44
  %v134 = vunpack.c.l.b16 %v45
  %v135 = vunpack.c.l.b16 %v46
  %v136 = vunpack.c.l.b16 %v47
  %v137 = vunpack.c.l.b16 %v48
  %v138 = vunpack.c.l.b16 %v49
  %v139 = vunpack.c.l.b16 %v50
  %v140 = vunpack.c.l.b16 %v51
  %v141 = vunpack.c.l.b16 %v52
  %v142 = vpack.c.b16 %v107, %v106
  %v143 = vpack.c.b16 %v109, %v108
  %v144 = vpack.c.b16 %v111, %v110
  %v145 = vpack.c.b16 %v113, %v112
  %v146 = vpack.c.b16 %v115, %v114
  %v147 = vpack.c.b16 %v117, %v116
  %v148 = vpack.c.b16 %v119, %v118
  %v149 = vpack.c.b16 %v121, %v120
  %v150 = vpack.c.b16 %v123, %v122
  %v151 = vpack.c.b16 %v125, %v124
  %v152 = vpack.c.b16 %v127, %v126
  %v153 = vpack.c.b16 %v129, %v128
  %v154 = vpack.c.b16 %v131, %v130
  %v155 = vpack.c.b16 %v133, %v132
  %v156 = vpack.c.b16 %v135, %v134
  %v157 = vpack.c.b16 %v137, %v136
  %v158 = vpack.c.b16 %v139, %v138
  %v159 = vpack.c.b16 %v141, %v140
  %vm178 = vcmask 261120
  %v180 = vsel %vm178, %v67, 0
  %182 = vmatprep.subr.bf16.mxu0 0
  %183 = vmatpush1.bf16.msra.mxu0 %v142
  %184 = vmatprep.subr.bf16.mxu0 0
  %185 = vmatpush1.bf16.msra.mxu0 %v143
  %186 = vmatprep.subr.bf16.mxu0 0
  %187 = vmatpush1.bf16.msra.mxu0 %v144
  %188 = vmatprep.subr.bf16.mxu0 0
  %189 = vmatpush1.bf16.msra.mxu0 %v145
  %190 = vmatprep.subr.bf16.mxu0 0
  %191 = vmatpush1.bf16.msra.mxu0 %v146
  %192 = vmatprep.subr.bf16.mxu0 0
  %193 = vmatpush1.bf16.msra.mxu0 %v147
  %194 = vmatprep.subr.bf16.mxu0 0
  %195 = vmatpush1.bf16.msra.mxu0 %v148
  %196 = vmatprep.subr.bf16.mxu0 0
  %197 = vmatpush1.bf16.msra.mxu0 %v149
  %198 = vmatprep.subr.bf16.mxu0 0
  %199 = vmatpush1.bf16.msra.mxu0 %v150
  %200 = vmatprep.subr.bf16.mxu0 0
  %201 = vmatpush1.bf16.msra.mxu0 %v151
  %202 = vmatprep.subr.bf16.mxu0 0
  %203 = vmatpush1.bf16.msra.mxu0 %v152
  %204 = vmatprep.subr.bf16.mxu0 0
  %205 = vmatpush1.bf16.msra.mxu0 %v153
  %206 = vmatprep.subr.bf16.mxu0 0
  %207 = vmatpush1.bf16.msra.mxu0 %v154
  %208 = vmatprep.subr.bf16.mxu0 0
  %209 = vmatpush1.bf16.msra.mxu0 %v155
  %210 = vmatprep.subr.bf16.mxu0 0
  %211 = vmatpush1.bf16.msra.mxu0 %v156
  %212 = vmatprep.subr.bf16.mxu0 0
  %213 = vmatpush1.bf16.msra.mxu0 %v157
  %214 = vmatprep.mubr.bf16.mxu0 %v66
  %215 = vmatmul.mubr.bf16.gmra.mrb[0].mxu0 %v65
  %v216 = vpop.f32.mrb[0].mxu0
  %v217 = vadd.f32 %v58, %v216
  %v218 = vpop.f32.mrb[0].mxu0
  %v219 = vpop.f32.mrb[0].mxu0
  %v220 = vpop.f32.mrb[0].mxu0
  %221 = vdwg.mxu0
  %222 = vmatprep.subr.bf16.mxu0 0
  %223 = vmatpush1.bf16.msra.mxu0 %v158
  %224 = vmatprep.subr.bf16.mxu0 0
  %225 = vmatpush1.bf16.msra.mxu0 %v159
  %226 = vmatprep.subr.bf16.mxu0 0
  %227 = vmatpush1.bf16.msra.mxu0 0
  %228 = vmatprep.subr.bf16.mxu0 0
  %229 = vmatpush1.bf16.msra.mxu0 0
  %230 = vmatprep.subr.bf16.mxu0 0
  %231 = vmatpush1.bf16.msra.mxu0 0
  %232 = vmatprep.subr.bf16.mxu0 0
  %233 = vmatpush1.bf16.msra.mxu0 0
  %234 = vmatprep.subr.bf16.mxu0 0
  %235 = vmatpush1.bf16.msra.mxu0 0
  %236 = vmatprep.subr.bf16.mxu0 0
  %237 = vmatpush1.bf16.msra.mxu0 0
  %238 = vmatprep.subr.bf16.mxu0 0
  %239 = vmatpush1.bf16.msra.mxu0 0
  %240 = vmatprep.subr.bf16.mxu0 0
  %241 = vmatpush1.bf16.msra.mxu0 0
  %242 = vmatprep.subr.bf16.mxu0 0
  %243 = vmatpush1.bf16.msra.mxu0 0
  %244 = vmatprep.subr.bf16.mxu0 0
  %245 = vmatpush1.bf16.msra.mxu0 0
  %246 = vmatprep.subr.bf16.mxu0 0
  %247 = vmatpush1.bf16.msra.mxu0 0
  %248 = vmatprep.subr.bf16.mxu0 0
  %249 = vmatpush1.bf16.msra.mxu0 0
  %250 = vmatprep.subr.bf16.mxu0 0
  %251 = vmatpush1.bf16.msra.mxu0 0
  %252 = vmatprep.subr.bf16.mxu0 0
  %253 = vmatpush1.bf16.msra.mxu0 0
  %254 = vmatprep.mubr.bf16.mxu0 0
  %255 = vmatmul.mubr.bf16.gmra.mrb[0].mxu0 %v180
  %v256 = vpop.f32.mrb[0].mxu0
  %v257 = vadd.f32 %v217, %v256
  %v258 = vpop.f32.mrb[0].mxu0
  %v259 = vpop.f32.mrb[0].mxu0
  %v260 = vpop.f32.mrb[0].mxu0
  %261 = vdwg.mxu0
  %v262 = vmax.f32 %v257, 0.0
  %v263 = vpack.c.bf16 %v262, %v262
  %vm264 = vcmask 519168
  %265 = vst.msk [vmem:[%s3] sm:$0xf] %vm264, %v263
  // Predicated region
  $region14: #{semantic_segmentation_forward.16} parent=0 // pred_check
    _
  $region15: #{semantic_segmentation_forward.16} parent=0 // pred_check_branch
    %267 = sbr.rel (0) target = $region17
  $region16: #{semantic_segmentation_forward.16} parent=0 // pred_region
    _
  $region17: #{semantic_segmentation_forward.16} parent=0 // pred_fallthru
    _
  // Predicated region
  $region18: #{semantic_segmentation_forward.16} parent=0 // pred_check
    _
  $region19: #{semantic_segmentation_forward.16} parent=0 // pred_check_branch
    %269 = sbr.rel (0) target = $region21
  $region20: #{semantic_segmentation_forward.16} parent=0 // pred_region
    _
  $region21: #{semantic_segmentation_forward.16} parent=0 // pred_fallthru
    _

// kernel: semantic_segmentation_forward.22
$region0: #{semantic_segmentation_forward.22}
  #allocation0 [shape = 'u32[]', space=smem, size = 0x4, offset = 0x4, fixed_abs, tag = 'smem constant byte address 0x4 - core index']
  #allocation1 [shape = 'u32[144,128]{1,0:T(1,128)}', space=vmem, size = 0x12000, scoped, tag = 'internal scratch']
  %s0 = inlined_call_operand.vmem [shape: bf16[2,64], index: 0, kind: input, shape index: {}]
  %s1 = inlined_call_operand.vmem [shape: bf16[64,32], index: 1, kind: input, shape index: {}]
  %s2 = inlined_call_operand.vmem [shape: f32[1,32], index: 2, kind: input, shape index: {}]
  %s3 = inlined_call_operand.vmem [shape: bf16[2,32], index: 3, kind: output, shape index: {}]
  %s4 = sld [smem:[#allocation0]]
  $region22: #{semantic_segmentation_forward.22} parent=0
    _
  %s6 = ssub.s32 1, %s4
  %s7 = scalar_select 0, %s6, %s4
  // Predicated region
  $region2: #{semantic_segmentation_forward.22} parent=0 // pred_check
    _
  $region3: #{semantic_segmentation_forward.22} parent=0 // pred_check_branch
    %9 = sbr.rel (0) target = $region5
  $region4: #{semantic_segmentation_forward.22} parent=0 // pred_region
    _
  $region5: #{semantic_segmentation_forward.22} parent=0 // pred_fallthru
    _
  // Predicated region
  $region6: #{semantic_segmentation_forward.22} parent=0 // pred_check
    _
  $region7: #{semantic_segmentation_forward.22} parent=0 // pred_check_branch
    %11 = sbr.rel (0) target = $region9
  $region8: #{semantic_segmentation_forward.22} parent=0 // pred_region
    _
  $region9: #{semantic_segmentation_forward.22} parent=0 // pred_fallthru
    _
  // Predicated region
  $region10: #{semantic_segmentation_forward.22} parent=0 // pred_check
    _
  $region11: #{semantic_segmentation_forward.22} parent=0 // pred_check_branch
    %13 = sbr.rel (0) target = $region13
  $region12: #{semantic_segmentation_forward.22} parent=0 // pred_region
    _
  $region13: #{semantic_segmentation_forward.22} parent=0 // pred_fallthru
    _
  %v15 = vld [vmem:[%s0] sm:$0x1]
  %v16 = vld [vmem:[%s1] sm:$0xf]
  %v17 = vld [vmem:[%s1 + $0x4] sm:$0xf]
  %v18 = vld [vmem:[%s1 + $0x8] sm:$0xf]
  %v19 = vld [vmem:[%s1 + $0xc] sm:$0xf]
  %v20 = vld [vmem:[%s1 + $0x10] sm:$0xf]
  %v21 = vld [vmem:[%s1 + $0x14] sm:$0xf]
  %v22 = vld [vmem:[%s1 + $0x18] sm:$0xf]
  %v23 = vld [vmem:[%s1 + $0x1c] sm:$0xf]
  %v24 = vld [vmem:[%s2] sm:$0x1]
  %v26 = vlaneseq
  %v27 = vshrl.u32 %v26, 7
  %v28 = vsub.s32 0, %v27
  %v29 = vrot.slane %v24, %v28
  %v39 = vunpack.c.l.b16 %v16
  %v40 = vunpack.c.l.b16 %v17
  %v41 = vunpack.c.l.b16 %v18
  %v42 = vunpack.c.l.b16 %v19
  %v43 = vunpack.c.l.b16 %v20
  %v44 = vunpack.c.l.b16 %v21
  %v45 = vunpack.c.l.b16 %v22
  %v46 = vunpack.c.l.b16 %v23
  %v47 = vpack.c.b16 %v40, %v39
  %v48 = vpack.c.b16 %v42, %v41
  %v49 = vpack.c.b16 %v44, %v43
  %v50 = vpack.c.b16 %v46, %v45
  %vm55 = vcmask 523264
  %v57 = vsel %vm55, %v15, 0
  %59 = vmatprep.subr.bf16.mxu0 0
  %60 = vmatpush1.bf16.msra.mxu0 %v47
  %61 = vmatprep.subr.bf16.mxu0 0
  %62 = vmatpush1.bf16.msra.mxu0 %v48
  %63 = vmatprep.subr.bf16.mxu0 0
  %64 = vmatpush1.bf16.msra.mxu0 %v49
  %65 = vmatprep.subr.bf16.mxu0 0
  %66 = vmatpush1.bf16.msra.mxu0 %v50
  %67 = vmatprep.subr.bf16.mxu0 0
  %68 = vmatpush1.bf16.msra.mxu0 0
  %69 = vmatprep.subr.bf16.mxu0 0
  %70 = vmatpush1.bf16.msra.mxu0 0
  %71 = vmatprep.subr.bf16.mxu0 0
  %72 = vmatpush1.bf16.msra.mxu0 0
  %73 = vmatprep.subr.bf16.mxu0 0
  %74 = vmatpush1.bf16.msra.mxu0 0
  %75 = vmatprep.subr.bf16.mxu0 0
  %76 = vmatpush1.bf16.msra.mxu0 0
  %77 = vmatprep.subr.bf16.mxu0 0
  %78 = vmatpush1.bf16.msra.mxu0 0
  %79 = vmatprep.subr.bf16.mxu0 0
  %80 = vmatpush1.bf16.msra.mxu0 0
  %81 = vmatprep.subr.bf16.mxu0 0
  %82 = vmatpush1.bf16.msra.mxu0 0
  %83 = vmatprep.subr.bf16.mxu0 0
  %84 = vmatpush1.bf16.msra.mxu0 0
  %85 = vmatprep.subr.bf16.mxu0 0
  %86 = vmatpush1.bf16.msra.mxu0 0
  %87 = vmatprep.subr.bf16.mxu0 0
  %88 = vmatpush1.bf16.msra.mxu0 0
  %89 = vmatprep.subr.bf16.mxu0 0
  %90 = vmatpush1.bf16.msra.mxu0 0
  %91 = vmatprep.mubr.bf16.mxu0 0
  %92 = vmatmul.mubr.bf16.gmra.mrb[0].mxu0 %v57
  %v93 = vpop.f32.mrb[0].mxu0
  %v94 = vadd.f32 %v29, %v93
  %v95 = vpop.f32.mrb[0].mxu0
  %v96 = vpop.f32.mrb[0].mxu0
  %v97 = vpop.f32.mrb[0].mxu0
  %98 = vdwg.mxu0
  %v99 = vmax.f32 %v94, 0.0
  %v100 = vpack.c.bf16 %v99, %v99
  %vm101 = vcmask 253952
  %102 = vst.msk [vmem:[%s3] sm:$0x1] %vm101, %v100
  // Predicated region
  $region14: #{semantic_segmentation_forward.22} parent=0 // pred_check
    _
  $region15: #{semantic_segmentation_forward.22} parent=0 // pred_check_branch
    %104 = sbr.rel (0) target = $region17
  $region16: #{semantic_segmentation_forward.22} parent=0 // pred_region
    _
  $region17: #{semantic_segmentation_forward.22} parent=0 // pred_fallthru
    _
  // Predicated region
  $region18: #{semantic_segmentation_forward.22} parent=0 // pred_check
    _
  $region19: #{semantic_segmentation_forward.22} parent=0 // pred_check_branch
    %106 = sbr.rel (0) target = $region21
  $region20: #{semantic_segmentation_forward.22} parent=0 // pred_region
    _
  $region21: #{semantic_segmentation_forward.22} parent=0 // pred_fallthru
    _

// kernel: semantic_segmentation_forward.23
$region0: #{semantic_segmentation_forward.23}
  #allocation0 [shape = 'u32[]', space=smem, size = 0x4, offset = 0x4, fixed_abs, tag = 'smem constant byte address 0x4 - core index']
  #allocation1 [shape = 'u32[144,128]{1,0:T(1,128)}', space=vmem, size = 0x12000, scoped, tag = 'internal scratch']
  %s0 = inlined_call_operand.vmem [shape: bf16[2,2,2,160], index: 0, kind: input, shape index: {}]
  %s1 = inlined_call_operand.vmem [shape: bf16[1,160,32], index: 1, kind: input, shape index: {}]
  %s2 = inlined_call_operand.vmem [shape: f32[1,32], index: 2, kind: input, shape index: {}]
  %s3 = inlined_call_operand.vmem [shape: bf16[2,2,2,32], index: 3, kind: output, shape index: {}]
  %s4 = sld [smem:[#allocation0]]
  $region45: #{semantic_segmentation_forward.23} parent=0
    _
  %s6 = ssub.s32 1, %s4
  %s7 = scalar_select 0, %s6, %s4
  loop: start=0, step=1, limit=4
  $region2: #{semantic_segmentation_forward.23} parent=0 // loop_pre_header
    _
  $region3: #{semantic_segmentation_forward.23} parent=0 // loop_header
    %s9 = sphi 0, %s13
    %p10 = scmp.ge.s32.totalorder %s9, 4
    %s19 = sphi 0, %s21
    %s22 = sphi 0, %s19
    %s23 = sphi 0, %s22
    %s39 = sphi 0, %s23
    %s43 = sphi 0, %s43
    %s45 = sphi 0, %s43
    %s46 = sphi 0, %s45
    %s60 = sphi 0, %s46
    %s64 = sphi 0, %s64
    %s66 = sphi 0, %s64
    %s67 = sphi 0, %s66
    %s81 = sphi 0, %s67
    %s87 = sphi 0, %s89
    %s90 = sphi 0, %s87
    %s91 = sphi 0, %s90
    %s107 = sphi 0, %s91
  $region4: #{semantic_segmentation_forward.23} parent=0 // loop_header_branch
    %12 = sbr.rel (%p10) target = $region8
  $region5: #{semantic_segmentation_forward.23} parent=0 // loop_body
    %s14 = ssub.s32 %s9, 1
    %s15 = ssub.s32 %s9, 2
    %s16 = sadd.s32 %s9, 1
    %s17 = ssub.s32 %s9, %s16
    %p18 = scmp.eq.s32.totalorder %s17, 0
    %s20 = sadd.s32 %s19, 1
    %s21 = scalar_select %p18, %s19, %s20
    %p24 = pneg %p18
    %p25 = scmp.eq.s32.totalorder %s9, 1
    %p26 = por %p24, %p25
    %p27 = scmp.ne.s32.totalorder %s19, %s22
    %p28 = scmp.eq.s32.totalorder %s9, 0
    %p29 = por %p27, %p28
    %p30 = scmp.ne.s32.totalorder %s19, %s22
    %p31 = scmp.eq.s32.totalorder %s14, 1
    %p32 = por %p30, %p31
    %p33 = scmp.ne.s32.totalorder %s22, %s23
    %p34 = scmp.eq.s32.totalorder %s14, 0
    %p35 = por %p33, %p34
    %p36 = scmp.ne.s32.totalorder %s22, %s23
    %p37 = scmp.eq.s32.totalorder %s15, 1
    %p38 = por %p36, %p37
    %p40 = scmp.ne.s32.totalorder %s23, %s39
    %p41 = scmp.eq.s32.totalorder %s15, 0
    %p42 = por %p40, %p41
    %s44 = sadd.s32 %s43, 1
    %p47 = scmp.eq.s32.totalorder %s9, 1
    %p48 = scmp.ne.s32.totalorder %s43, %s45
    %p49 = scmp.eq.s32.totalorder %s9, 0
    %p50 = por %p48, %p49
    %p51 = scmp.ne.s32.totalorder %s43, %s45
    %p52 = scmp.eq.s32.totalorder %s14, 1
    %p53 = por %p51, %p52
    %p54 = scmp.ne.s32.totalorder %s45, %s46
    %p55 = scmp.eq.s32.totalorder %s14, 0
    %p56 = por %p54, %p55
    %p57 = scmp.ne.s32.totalorder %s45, %s46
    %p58 = scmp.eq.s32.totalorder %s15, 1
    %p59 = por %p57, %p58
    %p61 = scmp.ne.s32.totalorder %s46, %s60
    %p62 = scmp.eq.s32.totalorder %s15, 0
    %p63 = por %p61, %p62
    %s65 = sadd.s32 %s64, 1
    %p68 = scmp.eq.s32.totalorder %s9, 1
    %p69 = scmp.ne.s32.totalorder %s64, %s66
    %p70 = scmp.eq.s32.totalorder %s9, 0
    %p71 = por %p69, %p70
    %p72 = scmp.ne.s32.totalorder %s64, %s66
    %p73 = scmp.eq.s32.totalorder %s14, 1
    %p74 = por %p72, %p73
    %p75 = scmp.ne.s32.totalorder %s66, %s67
    %p76 = scmp.eq.s32.totalorder %s14, 0
    %p77 = por %p75, %p76
    %p78 = scmp.ne.s32.totalorder %s66, %s67
    %p79 = scmp.eq.s32.totalorder %s15, 1
    %p80 = por %p78, %p79
    %p82 = scmp.ne.s32.totalorder %s67, %s81
    %p83 = scmp.eq.s32.totalorder %s15, 0
    %p84 = por %p82, %p83
    %s85 = ssub.s32 %s9, %s16
    %p86 = scmp.eq.s32.totalorder %s85, 0
    %s88 = sadd.s32 %s87, 1
    %s89 = scalar_select %p86, %s87, %s88
    %p92 = pneg %p86
    %p93 = scmp.eq.s32.totalorder %s9, 1
    %p94 = por %p92, %p93
    %p95 = scmp.ne.s32.totalorder %s87, %s90
    %p96 = scmp.eq.s32.totalorder %s9, 0
    %p97 = por %p95, %p96
    %p98 = scmp.ne.s32.totalorder %s87, %s90
    %p99 = scmp.eq.s32.totalorder %s14, 1
    %p100 = por %p98, %p99
    %p101 = scmp.ne.s32.totalorder %s90, %s91
    %p102 = scmp.eq.s32.totalorder %s14, 0
    %p103 = por %p101, %p102
    %p104 = scmp.ne.s32.totalorder %s90, %s91
    %p105 = scmp.eq.s32.totalorder %s15, 1
    %p106 = por %p104, %p105
    %p108 = scmp.ne.s32.totalorder %s91, %s107
    %p109 = scmp.eq.s32.totalorder %s15, 0
    %p110 = por %p108, %p109
    %p111 = scmp.le.s32.totalorder 1, %s9
    %p112 = scmp.lt.s32.totalorder %s9, 3
    %p113 = pnand %p111, %p112
    %p114 = pneg %p113
    // Predicated region
    $region9: #{semantic_segmentation_forward.23} parent=5 // pred_check
      _
    $region10: #{semantic_segmentation_forward.23} parent=5 // pred_check_branch
      %116 = sbr.rel (%p113) target = $region12
    $region11: #{semantic_segmentation_forward.23} parent=5 // pred_region
      %s117 = ssub.s32 %s9, 1
      // Predicated region
      $region13: #{semantic_segmentation_forward.23} parent=11 // pred_check
        %p118 = pneg %p56
      $region14: #{semantic_segmentation_forward.23} parent=11 // pred_check_branch
        %120 = sbr.rel (%p118) target = $region16
      $region15: #{semantic_segmentation_forward.23} parent=11 // pred_region
        _
      $region16: #{semantic_segmentation_forward.23} parent=11 // pred_fallthru
        _
      // Predicated region
      $region17: #{semantic_segmentation_forward.23} parent=11 // pred_check
        %p121 = pneg %p77
      $region18: #{semantic_segmentation_forward.23} parent=11 // pred_check_branch
        %123 = sbr.rel (%p121) target = $region20
      $region19: #{semantic_segmentation_forward.23} parent=11 // pred_region
        _
      $region20: #{semantic_segmentation_forward.23} parent=11 // pred_fallthru
        _
    $region12: #{semantic_segmentation_forward.23} parent=5 // pred_fallthru
      _
    %p124 = scmp.lt.s32.totalorder %s9, 2
    // Predicated region
    $region21: #{semantic_segmentation_forward.23} parent=5 // pred_check
      %p125 = pneg %p124
    $region22: #{semantic_segmentation_forward.23} parent=5 // pred_check_branch
      %127 = sbr.rel (%p125) target = $region24
    $region23: #{semantic_segmentation_forward.23} parent=5 // pred_region
      // Predicated region
      $region25: #{semantic_segmentation_forward.23} parent=23 // pred_check
        %p128 = pneg %p29
      $region26: #{semantic_segmentation_forward.23} parent=23 // pred_check_branch
        %130 = sbr.rel (%p128) target = $region28
      $region27: #{semantic_segmentation_forward.23} parent=23 // pred_region
        %p131 = scmp.lt.s32.totalorder %s9, 1
        %s132 = scalar_select %p131, %s9, 1
        %s133 = smul.addr %s132, 4
        %s134 = scalar_lea.vmem %s0, %s133
      $region28: #{semantic_segmentation_forward.23} parent=23 // pred_fallthru
        _
    $region24: #{semantic_segmentation_forward.23} parent=5 // pred_fallthru
      _
    %p135 = scmp.le.s32.totalorder 1, %s9
    %p136 = scmp.lt.s32.totalorder %s9, 3
    %p137 = pnand %p135, %p136
    %p138 = pneg %p137
    // Predicated region
    $region29: #{semantic_segmentation_forward.23} parent=5 // pred_check
      _
    $region30: #{semantic_segmentation_forward.23} parent=5 // pred_check_branch
      %140 = sbr.rel (%p137) target = $region32
    $region31: #{semantic_segmentation_forward.23} parent=5 // pred_region
      %s141 = ssub.s32 %s9, 1
      %p142 = scmp.lt.s32.totalorder %s14, 1
      %s143 = scalar_select %p142, %s14, 1
      %s144 = smul.addr %s143, 4
      %s145 = scalar_lea.vmem %s0, %s144
      %p146 = pneg %p35
      %p147 = pneg %p32
      %p148 = pneg %p56
      %p149 = pneg %p53
      %p150 = pneg %p77
      %p151 = pneg %p74
      %p152 = pneg %p103
      %p153 = pneg %p100
      %p154 = scmp.lt.s32.totalorder %s14, 1
      %s155 = scalar_select %p154, %s14, 1
      %s156 = smul.addr %s155, 2
      %s157 = scalar_lea.vmem %s3, %s156
      %p158 = scmp.lt.s32.totalorder %s14, 1
      %s159 = scalar_select %p158, %s14, 1
      %s160 = smul.addr %s159, 4
      %s161 = scalar_lea.vmem %s0, %s160
      %p162 = scmp.lt.s32.totalorder %s14, 1
      %s163 = scalar_select %p162, %s14, 1
      %s164 = smul.addr %s163, 2
      %s165 = scalar_lea.vmem %s3, %s164
      %v167 = vld [vmem:[%s161] sm:$0x3]
      %v168 = vld [vmem:[%s161 + $0x2] sm:$0x3]
      %v169 = vunpack.c.l.bf16 %v167
      %v170 = vunpack.c.l.bf16 %v168
      %v173 = vcombine.low %v169, %v170
      %v175 = vunpack.c.l.s4 1983009808
      %v176 = vunpack.c.0.s8 %v175
      %v177 = vlaneseq
      %v178 = vshrl.u32 %v177, 7
      %v179 = vsub.s32 %v176, %v178
      %v180 = vrot.slane %v173, %v179
      %v181 = vcombine.high %v180, %v180
      %v184 = vpack.c.bf16 %v180, %v180
      %v185 = vpack.c.bf16 %v181, %v181
      %v186 = vld [vmem:[%s1] sm:$0xf]
      %v187 = vld [vmem:[%s1 + $0x4] sm:$0xf]
      %v188 = vld [vmem:[%s1 + $0x8] sm:$0xf]
      %v189 = vld [vmem:[%s1 + $0xc] sm:$0xf]
      %v190 = vld [vmem:[%s1 + $0x10] sm:$0xf]
      %v191 = vld [vmem:[%s1 + $0x14] sm:$0xf]
      %v192 = vld [vmem:[%s1 + $0x18] sm:$0xf]
      %v193 = vld [vmem:[%s1 + $0x1c] sm:$0xf]
      %v194 = vld [vmem:[%s1 + $0x20] sm:$0xf]
      %v195 = vld [vmem:[%s1 + $0x24] sm:$0xf]
      %v196 = vld [vmem:[%s1 + $0x28] sm:$0xf]
      %v197 = vld [vmem:[%s1 + $0x2c] sm:$0xf]
      %v198 = vld [vmem:[%s1 + $0x30] sm:$0xf]
      %v199 = vld [vmem:[%s1 + $0x34] sm:$0xf]
      %v200 = vld [vmem:[%s1 + $0x38] sm:$0xf]
      %v201 = vld [vmem:[%s1 + $0x3c] sm:$0xf]
      %v202 = vld [vmem:[%s1 + $0x40] sm:$0xf]
      %v203 = vld [vmem:[%s1 + $0x44] sm:$0xf]
      %v204 = vld [vmem:[%s1 + $0x48] sm:$0xf]
      %v205 = vld [vmem:[%s1 + $0x4c] sm:$0xf]
      %v206 = vld [vmem:[%s2] sm:$0x1]
      %v208 = vlaneseq
      %v209 = vshrl.u32 %v208, 7
      %v210 = vsub.s32 0, %v209
      %v211 = vrot.slane %v206, %v210
      %v233 = vunpack.c.l.b16 %v186
      %v234 = vunpack.c.l.b16 %v187
      %v235 = vunpack.c.l.b16 %v188
      %v236 = vunpack.c.l.b16 %v189
      %v237 = vunpack.c.l.b16 %v190
      %v238 = vunpack.c.l.b16 %v191
      %v239 = vunpack.c.l.b16 %v192
      %v240 = vunpack.c.l.b16 %v193
      %v241 = vunpack.c.l.b16 %v194
      %v242 = vunpack.c.l.b16 %v195
      %v243 = vunpack.c.l.b16 %v196
      %v244 = vunpack.c.l.b16 %v197
      %v245 = vunpack.c.l.b16 %v198
      %v246 = vunpack.c.l.b16 %v199
      %v247 = vunpack.c.l.b16 %v200
      %v248 = vunpack.c.l.b16 %v201
      %v249 = vunpack.c.l.b16 %v202
      %v250 = vunpack.c.l.b16 %v203
      %v251 = vunpack.c.l.b16 %v204
      %v252 = vunpack.c.l.b16 %v205
      %v253 = vpack.c.b16 %v234, %v233
      %v254 = vpack.c.b16 %v236, %v235
      %v255 = vpack.c.b16 %v238, %v237
      %v256 = vpack.c.b16 %v240, %v239
      %v257 = vpack.c.b16 %v242, %v241
      %v258 = vpack.c.b16 %v244, %v243
      %v259 = vpack.c.b16 %v246, %v245
      %v260 = vpack.c.b16 %v248, %v247
      %v261 = vpack.c.b16 %v250, %v249
      %v262 = vpack.c.b16 %v252, %v251
      %vm273 = vcmask 261120
      %v275 = vsel %vm273, %v185, 0
      %277 = vmatprep.subr.bf16.mxu0 0
      %278 = vmatpush1.bf16.msra.mxu0 %v253
      %279 = vmatprep.subr.bf16.mxu0 0
      %280 = vmatpush1.bf16.msra.mxu0 %v254
      %281 = vmatprep.subr.bf16.mxu0 0
      %282 = vmatpush1.bf16.msra.mxu0 %v255
      %283 = vmatprep.subr.bf16.mxu0 0
      %284 = vmatpush1.bf16.msra.mxu0 %v256
      %285 = vmatprep.subr.bf16.mxu0 0
      %286 = vmatpush1.bf16.msra.mxu0 %v257
      %287 = vmatprep.subr.bf16.mxu0 0
      %288 = vmatpush1.bf16.msra.mxu0 %v258
      %289 = vmatprep.subr.bf16.mxu0 0
      %290 = vmatpush1.bf16.msra.mxu0 %v259
      %291 = vmatprep.subr.bf16.mxu0 0
      %292 = vmatpush1.bf16.msra.mxu0 %v260
      %293 = vmatprep.subr.bf16.mxu0 0
      %294 = vmatpush1.bf16.msra.mxu0 %v261
      %295 = vmatprep.subr.bf16.mxu0 0
      %296 = vmatpush1.bf16.msra.mxu0 %v262
      %297 = vmatprep.subr.bf16.mxu0 0
      %298 = vmatpush1.bf16.msra.mxu0 0
      %299 = vmatprep.subr.bf16.mxu0 0
      %300 = vmatpush1.bf16.msra.mxu0 0
      %301 = vmatprep.subr.bf16.mxu0 0
      %302 = vmatpush1.bf16.msra.mxu0 0
      %303 = vmatprep.subr.bf16.mxu0 0
      %304 = vmatpush1.bf16.msra.mxu0 0
      %305 = vmatprep.subr.bf16.mxu0 0
      %306 = vmatpush1.bf16.msra.mxu0 0
      %307 = vmatprep.subr.bf16.mxu0 0
      %308 = vmatpush1.bf16.msra.mxu0 0
      %309 = vmatprep.mubr.bf16.mxu0 %v275
      %310 = vmatmul.mubr.bf16.gmra.mrb[0].mxu0 %v184
      %v311 = vpop.f32.mrb[0].mxu0
      %v312 = vadd.f32 %v211, %v311
      %v313 = vpop.f32.mrb[0].mxu0
      %v314 = vpop.f32.mrb[0].mxu0
      %v315 = vpop.f32.mrb[0].mxu0
      %316 = vdwg.mxu0
      %v317 = vmax.f32 %v312, 0.0
      %v320 = vunpack.c.l.s4 1983009808
      %v321 = vunpack.c.0.s8 %v320
      %v322 = vlaneseq
      %v323 = vshrl.u32 %v322, 7
      %v324 = vsub.s32 %v321, %v323
      %v325 = vrot.slane %v317, %v324
      %v326 = vcombine.high %v325, %v325
      %v329 = vpack.c.bf16 %v325, %v325
      %v330 = vpack.c.bf16 %v326, %v326
      %vm331 = vcmask 253952
      %332 = vst.msk [vmem:[%s165] sm:$0x1] %vm331, %v329
      %333 = vst.msk [vmem:[%s165 + $0x1] sm:$0x1] %vm331, %v330
      %p334 = scmp.lt.s32.totalorder %s14, 1
      %s335 = scalar_select %p334, %s14, 1
      %s336 = smul.addr %s335, 2
      %s337 = scalar_lea.vmem %s3, %s336
      // Predicated region
      $region33: #{semantic_segmentation_forward.23} parent=31 // pred_check
        %p338 = pneg %p100
      $region34: #{semantic_segmentation_forward.23} parent=31 // pred_check_branch
        %340 = sbr.rel (%p338) target = $region36
      $region35: #{semantic_segmentation_forward.23} parent=31 // pred_region
        _
      $region36: #{semantic_segmentation_forward.23} parent=31 // pred_fallthru
        _
    $region32: #{semantic_segmentation_forward.23} parent=5 // pred_fallthru
      _
    %p341 = scmp.le.s32.totalorder 2, %s9
    // Predicated region
    $region37: #{semantic_segmentation_forward.23} parent=5 // pred_check
      %p342 = pneg %p341
    $region38: #{semantic_segmentation_forward.23} parent=5 // pred_check_branch
      %344 = sbr.rel (%p342) target = $region40
    $region39: #{semantic_segmentation_forward.23} parent=5 // pred_region
      %s345 = ssub.s32 %s9, 2
      // Predicated region
      $region41: #{semantic_segmentation_forward.23} parent=39 // pred_check
        %p346 = pneg %p106
      $region42: #{semantic_segmentation_forward.23} parent=39 // pred_check_branch
        %348 = sbr.rel (%p346) target = $region44
      $region43: #{semantic_segmentation_forward.23} parent=39 // pred_region
        %p349 = scmp.lt.s32.totalorder %s15, 1
        %s350 = scalar_select %p349, %s15, 1
        %s351 = smul.addr %s350, 2
        %s352 = scalar_lea.vmem %s3, %s351
      $region44: #{semantic_segmentation_forward.23} parent=39 // pred_fallthru
        _
    $region40: #{semantic_segmentation_forward.23} parent=5 // pred_fallthru
      _
  $region6: #{semantic_segmentation_forward.23} parent=0 // loop_footer
    %s13 = sadd.s32 1, %s9
  $region7: #{semantic_segmentation_forward.23} parent=0 // loop_footer_branch
    %8 = sbr.rel target = $region3
  $region8: #{semantic_segmentation_forward.23} parent=0 // loop_exit
    _

// kernel: semantic_segmentation_forward.24
$region0: #{semantic_segmentation_forward.24}
  #allocation0 [shape = 'u32[]', space=smem, size = 0x4, offset = 0x4, fixed_abs, tag = 'smem constant byte address 0x4 - core index']
  #allocation1 [shape = 'u32[144,128]{1,0:T(1,128)}', space=vmem, size = 0x12000, scoped, tag = 'internal scratch']
  %s0 = inlined_call_operand.vmem [shape: bf16[2,4,4,32], index: 0, kind: input, shape index: {}]
  %s1 = inlined_call_operand.vmem [shape: bf16[9,32,32], index: 1, kind: input, shape index: {}]
  %s2 = inlined_call_operand.vmem [shape: f32[1,32], index: 2, kind: input, shape index: {}]
  %s3 = inlined_call_operand.vmem [shape: bf16[2,2,2,32], index: 3, kind: output, shape index: {}]
  %s4 = sld [smem:[#allocation0]]
  $region45: #{semantic_segmentation_forward.24} parent=0
    _
  %s6 = ssub.s32 1, %s4
  %s7 = scalar_select 0, %s6, %s4
  loop: start=0, step=1, limit=4
  $region2: #{semantic_segmentation_forward.24} parent=0 // loop_pre_header
    _
  $region3: #{semantic_segmentation_forward.24} parent=0 // loop_header
    %s9 = sphi 0, %s13
    %p10 = scmp.ge.s32.totalorder %s9, 4
    %s19 = sphi 0, %s21
    %s22 = sphi 0, %s19
    %s23 = sphi 0, %s22
    %s39 = sphi 0, %s23
    %s43 = sphi 0, %s43
    %s45 = sphi 0, %s43
    %s46 = sphi 0, %s45
    %s60 = sphi 0, %s46
    %s64 = sphi 0, %s64
    %s66 = sphi 0, %s64
    %s67 = sphi 0, %s66
    %s81 = sphi 0, %s67
    %s87 = sphi 0, %s89
    %s90 = sphi 0, %s87
    %s91 = sphi 0, %s90
    %s107 = sphi 0, %s91
  $region4: #{semantic_segmentation_forward.24} parent=0 // loop_header_branch
    %12 = sbr.rel (%p10) target = $region8
  $region5: #{semantic_segmentation_forward.24} parent=0 // loop_body
    %s14 = ssub.s32 %s9, 1
    %s15 = ssub.s32 %s9, 2
    %s16 = sadd.s32 %s9, 1
    %s17 = ssub.s32 %s9, %s16
    %p18 = scmp.eq.s32.totalorder %s17, 0
    %s20 = sadd.s32 %s19, 1
    %s21 = scalar_select %p18, %s19, %s20
    %p24 = pneg %p18
    %p25 = scmp.eq.s32.totalorder %s9, 1
    %p26 = por %p24, %p25
    %p27 = scmp.ne.s32.totalorder %s19, %s22
    %p28 = scmp.eq.s32.totalorder %s9, 0
    %p29 = por %p27, %p28
    %p30 = scmp.ne.s32.totalorder %s19, %s22
    %p31 = scmp.eq.s32.totalorder %s14, 1
    %p32 = por %p30, %p31
    %p33 = scmp.ne.s32.totalorder %s22, %s23
    %p34 = scmp.eq.s32.totalorder %s14, 0
    %p35 = por %p33, %p34
    %p36 = scmp.ne.s32.totalorder %s22, %s23
    %p37 = scmp.eq.s32.totalorder %s15, 1
    %p38 = por %p36, %p37
    %p40 = scmp.ne.s32.totalorder %s23, %s39
    %p41 = scmp.eq.s32.totalorder %s15, 0
    %p42 = por %p40, %p41
    %s44 = sadd.s32 %s43, 1
    %p47 = scmp.eq.s32.totalorder %s9, 1
    %p48 = scmp.ne.s32.totalorder %s43, %s45
    %p49 = scmp.eq.s32.totalorder %s9, 0
    %p50 = por %p48, %p49
    %p51 = scmp.ne.s32.totalorder %s43, %s45
    %p52 = scmp.eq.s32.totalorder %s14, 1
    %p53 = por %p51, %p52
    %p54 = scmp.ne.s32.totalorder %s45, %s46
    %p55 = scmp.eq.s32.totalorder %s14, 0
    %p56 = por %p54, %p55
    %p57 = scmp.ne.s32.totalorder %s45, %s46
    %p58 = scmp.eq.s32.totalorder %s15, 1
    %p59 = por %p57, %p58
    %p61 = scmp.ne.s32.totalorder %s46, %s60
    %p62 = scmp.eq.s32.totalorder %s15, 0
    %p63 = por %p61, %p62
    %s65 = sadd.s32 %s64, 1
    %p68 = scmp.eq.s32.totalorder %s9, 1
    %p69 = scmp.ne.s32.totalorder %s64, %s66
    %p70 = scmp.eq.s32.totalorder %s9, 0
    %p71 = por %p69, %p70
    %p72 = scmp.ne.s32.totalorder %s64, %s66
    %p73 = scmp.eq.s32.totalorder %s14, 1
    %p74 = por %p72, %p73
    %p75 = scmp.ne.s32.totalorder %s66, %s67
    %p76 = scmp.eq.s32.totalorder %s14, 0
    %p77 = por %p75, %p76
    %p78 = scmp.ne.s32.totalorder %s66, %s67
    %p79 = scmp.eq.s32.totalorder %s15, 1
    %p80 = por %p78, %p79
    %p82 = scmp.ne.s32.totalorder %s67, %s81
    %p83 = scmp.eq.s32.totalorder %s15, 0
    %p84 = por %p82, %p83
    %s85 = ssub.s32 %s9, %s16
    %p86 = scmp.eq.s32.totalorder %s85, 0
    %s88 = sadd.s32 %s87, 1
    %s89 = scalar_select %p86, %s87, %s88
    %p92 = pneg %p86
    %p93 = scmp.eq.s32.totalorder %s9, 1
    %p94 = por %p92, %p93
    %p95 = scmp.ne.s32.totalorder %s87, %s90
    %p96 = scmp.eq.s32.totalorder %s9, 0
    %p97 = por %p95, %p96
    %p98 = scmp.ne.s32.totalorder %s87, %s90
    %p99 = scmp.eq.s32.totalorder %s14, 1
    %p100 = por %p98, %p99
    %p101 = scmp.ne.s32.totalorder %s90, %s91
    %p102 = scmp.eq.s32.totalorder %s14, 0
    %p103 = por %p101, %p102
    %p104 = scmp.ne.s32.totalorder %s90, %s91
    %p105 = scmp.eq.s32.totalorder %s15, 1
    %p106 = por %p104, %p105
    %p108 = scmp.ne.s32.totalorder %s91, %s107
    %p109 = scmp.eq.s32.totalorder %s15, 0
    %p110 = por %p108, %p109
    %p111 = scmp.le.s32.totalorder 1, %s9
    %p112 = scmp.lt.s32.totalorder %s9, 3
    %p113 = pnand %p111, %p112
    %p114 = pneg %p113
    // Predicated region
    $region9: #{semantic_segmentation_forward.24} parent=5 // pred_check
      _
    $region10: #{semantic_segmentation_forward.24} parent=5 // pred_check_branch
      %116 = sbr.rel (%p113) target = $region12
    $region11: #{semantic_segmentation_forward.24} parent=5 // pred_region
      %s117 = ssub.s32 %s9, 1
      // Predicated region
      $region13: #{semantic_segmentation_forward.24} parent=11 // pred_check
        %p118 = pneg %p56
      $region14: #{semantic_segmentation_forward.24} parent=11 // pred_check_branch
        %120 = sbr.rel (%p118) target = $region16
      $region15: #{semantic_segmentation_forward.24} parent=11 // pred_region
        _
      $region16: #{semantic_segmentation_forward.24} parent=11 // pred_fallthru
        _
      // Predicated region
      $region17: #{semantic_segmentation_forward.24} parent=11 // pred_check
        %p121 = pneg %p77
      $region18: #{semantic_segmentation_forward.24} parent=11 // pred_check_branch
        %123 = sbr.rel (%p121) target = $region20
      $region19: #{semantic_segmentation_forward.24} parent=11 // pred_region
        _
      $region20: #{semantic_segmentation_forward.24} parent=11 // pred_fallthru
        _
    $region12: #{semantic_segmentation_forward.24} parent=5 // pred_fallthru
      _
    %p124 = scmp.lt.s32.totalorder %s9, 2
    // Predicated region
    $region21: #{semantic_segmentation_forward.24} parent=5 // pred_check
      %p125 = pneg %p124
    $region22: #{semantic_segmentation_forward.24} parent=5 // pred_check_branch
      %127 = sbr.rel (%p125) target = $region24
    $region23: #{semantic_segmentation_forward.24} parent=5 // pred_region
      // Predicated region
      $region25: #{semantic_segmentation_forward.24} parent=23 // pred_check
        %p128 = pneg %p29
      $region26: #{semantic_segmentation_forward.24} parent=23 // pred_check_branch
        %130 = sbr.rel (%p128) target = $region28
      $region27: #{semantic_segmentation_forward.24} parent=23 // pred_region
        %p131 = scmp.lt.s32.totalorder %s9, 1
        %s132 = scalar_select %p131, %s9, 1
        %s133 = smul.addr %s132, 4
        %s134 = smul.addr %s133, 2
        %s135 = scalar_lea.vmem %s0, %s134
      $region28: #{semantic_segmentation_forward.24} parent=23 // pred_fallthru
        _
    $region24: #{semantic_segmentation_forward.24} parent=5 // pred_fallthru
      _
    %p136 = scmp.le.s32.totalorder 1, %s9
    %p137 = scmp.lt.s32.totalorder %s9, 3
    %p138 = pnand %p136, %p137
    %p139 = pneg %p138
    // Predicated region
    $region29: #{semantic_segmentation_forward.24} parent=5 // pred_check
      _
    $region30: #{semantic_segmentation_forward.24} parent=5 // pred_check_branch
      %141 = sbr.rel (%p138) target = $region32
    $region31: #{semantic_segmentation_forward.24} parent=5 // pred_region
      %s142 = ssub.s32 %s9, 1
      %p143 = scmp.lt.s32.totalorder %s14, 1
      %s144 = scalar_select %p143, %s14, 1
      %s145 = smul.addr %s144, 4
      %s146 = smul.addr %s145, 2
      %s147 = scalar_lea.vmem %s0, %s146
      %p148 = pneg %p35
      %p149 = pneg %p32
      %p150 = pneg %p56
      %p151 = pneg %p53
      %p152 = pneg %p77
      %p153 = pneg %p74
      %p154 = pneg %p103
      %p155 = pneg %p100
      %p156 = scmp.lt.s32.totalorder %s14, 1
      %s157 = scalar_select %p156, %s14, 1
      %s158 = smul.addr %s157, 2
      %s159 = scalar_lea.vmem %s3, %s158
      %p160 = scmp.lt.s32.totalorder %s14, 1
      %s161 = scalar_select %p160, %s14, 1
      %s162 = smul.addr %s161, 4
      %s163 = smul.addr %s162, 2
      %s164 = scalar_lea.vmem %s0, %s163
      %p165 = scmp.lt.s32.totalorder %s14, 1
      %s166 = scalar_select %p165, %s14, 1
      %s167 = smul.addr %s166, 2
      %s168 = scalar_lea.vmem %s3, %s167
      %v170 = vld [vmem:[%s164] sm:$0x3]
      %v171 = vld [vmem:[%s164 + $0x2] sm:$0x3]
      %v172 = vld [vmem:[%s164 + $0x4] sm:$0x3]
      %v173 = vld [vmem:[%s164 + $0x6] sm:$0x3]
      %v174 = vunpack.c.l.bf16 %v170
      %v175 = vunpack.c.l.bf16 %v171
      %v176 = vunpack.c.l.bf16 %v172
      %v177 = vunpack.c.l.bf16 %v173
      %v180 = vcombine.low %v174, %v175
      %v182 = vunpack.c.l.s4 1983009808
      %v183 = vunpack.c.0.s8 %v182
      %v184 = vlaneseq
      %v185 = vshrl.u32 %v184, 7
      %v186 = vsub.s32 %v183, %v185
      %v187 = vrot.slane %v180, %v186
      %v189 = vpack.c.bf16 %v187, %v187
      %v190 = vld [vmem:[%s1] sm:$0xf]
      %v191 = vld [vmem:[%s1 + $0x4] sm:$0xf]
      %v192 = vld [vmem:[%s1 + $0x8] sm:$0xf]
      %v193 = vld [vmem:[%s1 + $0xc] sm:$0xf]
      %v195 = vunpack.c.l.s4 1983009808
      %v196 = vunpack.c.0.s8 %v195
      %v197 = vlaneseq
      %v198 = vshrl.u32 %v197, 7
      %v199 = vsub.s32 %v196, %v198
      %v200 = vrot.slane %v174, %v199
      %v201 = vcombine.high %v200, %v200
      %v203 = vunpack.c.l.s4 1983009808
      %v204 = vunpack.c.0.s8 %v203
      %v205 = vlaneseq
      %v206 = vshrl.u32 %v205, 7
      %v207 = vsub.s32 %v204, %v206
      %v208 = vrot.slane %v175, %v207
      %v209 = vcombine.high %v208, %v208
      %vm210 = vcmask 1040384
      %vm211 = vcmask 1042434
      %vm212 = vmor %vm210, %vm211
      %vm213 = vcmask 1044484
      %vm214 = vmor %vm212, %vm213
      %vm215 = vcmask 1046534
      %vm216 = vmor %vm214, %vm215
      %v217 = vrot.slane %v200, 7
      %v218 = vrot.slane %v217, 2
      %v219 = vrot.slane %v201, 7
      %v220 = vsel %vm216, %v218, %v219
      %v221 = vrot.slane %v208, 7
      %v222 = vrot.slane %v221, 2
      %v223 = vrot.slane %v209, 7
      %v224 = vsel %vm216, %v222, %v223
      %v225 = vcombine.low %v220, %v224
      %v227 = vunpack.c.l.s4 1983009808
      %v228 = vunpack.c.0.s8 %v227
      %v229 = vlaneseq
      %v230 = vshrl.u32 %v229, 7
      %v231 = vsub.s32 %v228, %v230
      %v232 = vrot.slane %v225, %v231
      %v234 = vpack.c.bf16 %v232, %v232
      %s235 = scalar_lea.vmem %s1, 16
      %v236 = vld [vmem:[%s235] sm:$0xf]
      %v237 = vld [vmem:[%s235 + $0x4] sm:$0xf]
      %v238 = vld [vmem:[%s235 + $0x8] sm:$0xf]
      %v239 = vld [vmem:[%s235 + $0xc] sm:$0xf]
      %v244 = vunpack.c.l.b16 %v236
      %v245 = vunpack.c.l.b16 %v237
      %v246 = vunpack.c.l.b16 %v238
      %v247 = vunpack.c.l.b16 %v239
      %v248 = vpack.c.b16 %v245, %v244
      %v249 = vpack.c.b16 %v247, %v246
      %vm252 = vcmask 261120
      %v254 = vsel %vm252, %v234, 0
      %256 = vmatprep.subr.bf16.mxu0 0
      %257 = vmatpush1.bf16.msra.mxu0 %v248
      %258 = vmatprep.subr.bf16.mxu0 0
      %259 = vmatpush1.bf16.msra.mxu0 %v249
      %260 = vmatprep.subr.bf16.mxu0 0
      %261 = vmatpush1.bf16.msra.mxu0 0
      %262 = vmatprep.subr.bf16.mxu0 0
      %263 = vmatpush1.bf16.msra.mxu0 0
      %264 = vmatprep.subr.bf16.mxu0 0
      %265 = vmatpush1.bf16.msra.mxu0 0
      %266 = vmatprep.subr.bf16.mxu0 0
      %267 = vmatpush1.bf16.msra.mxu0 0
      %268 = vmatprep.subr.bf16.mxu0 0
      %269 = vmatpush1.bf16.msra.mxu0 0
      %270 = vmatprep.subr.bf16.mxu0 0
      %271 = vmatpush1.bf16.msra.mxu0 0
      %272 = vmatprep.subr.bf16.mxu0 0
      %273 = vmatpush1.bf16.msra.mxu0 0
      %274 = vmatprep.subr.bf16.mxu0 0
      %275 = vmatpush1.bf16.msra.mxu0 0
      %276 = vmatprep.subr.bf16.mxu0 0
      %277 = vmatpush1.bf16.msra.mxu0 0
      %278 = vmatprep.subr.bf16.mxu0 0
      %279 = vmatpush1.bf16.msra.mxu0 0
      %280 = vmatprep.subr.bf16.mxu0 0
      %281 = vmatpush1.bf16.msra.mxu0 0
      %282 = vmatprep.subr.bf16.mxu0 0
      %283 = vmatpush1.bf16.msra.mxu0 0
      %284 = vmatprep.subr.bf16.mxu0 0
      %285 = vmatpush1.bf16.msra.mxu0 0
      %286 = vmatprep.subr.bf16.mxu0 0
      %287 = vmatpush1.bf16.msra.mxu0 0
      %288 = vmatprep.mubr.bf16.mxu0 0
      %289 = vmatmul.mubr.bf16.gmra.mrb[0].mxu0 %v254
      %v290 = vpop.f32.mrb[0].mxu0
      %v291 = vadd.f32 0.0, %v290
      %v292 = vpop.f32.mrb[0].mxu0
      %v293 = vpop.f32.mrb[0].mxu0
      %v294 = vpop.f32.mrb[0].mxu0
      %295 = vdwg.mxu0
      %v300 = vunpack.c.l.b16 %v190
      %v301 = vunpack.c.l.b16 %v191
      %v302 = vunpack.c.l.b16 %v192
      %v303 = vunpack.c.l.b16 %v193
      %v304 = vpack.c.b16 %v301, %v300
      %v305 = vpack.c.b16 %v303, %v302
      %v309 = vsel %vm252, %v189, 0
      %311 = vmatprep.subr.bf16.mxu0 0
      %312 = vmatpush1.bf16.msra.mxu0 %v304
      %313 = vmatprep.subr.bf16.mxu0 0
      %314 = vmatpush1.bf16.msra.mxu0 %v305
      %315 = vmatprep.subr.bf16.mxu0 0
      %316 = vmatpush1.bf16.msra.mxu0 0
      %317 = vmatprep.subr.bf16.mxu0 0
      %318 = vmatpush1.bf16.msra.mxu0 0
      %319 = vmatprep.subr.bf16.mxu0 0
      %320 = vmatpush1.bf16.msra.mxu0 0
      %321 = vmatprep.subr.bf16.mxu0 0
      %322 = vmatpush1.bf16.msra.mxu0 0
      %323 = vmatprep.subr.bf16.mxu0 0
      %324 = vmatpush1.bf16.msra.mxu0 0
      %325 = vmatprep.subr.bf16.mxu0 0
      %326 = vmatpush1.bf16.msra.mxu0 0
      %327 = vmatprep.subr.bf16.mxu0 0
      %328 = vmatpush1.bf16.msra.mxu0 0
      %329 = vmatprep.subr.bf16.mxu0 0
      %330 = vmatpush1.bf16.msra.mxu0 0
      %331 = vmatprep.subr.bf16.mxu0 0
      %332 = vmatpush1.bf16.msra.mxu0 0
      %333 = vmatprep.subr.bf16.mxu0 0
      %334 = vmatpush1.bf16.msra.mxu0 0
      %335 = vmatprep.subr.bf16.mxu0 0
      %336 = vmatpush1.bf16.msra.mxu0 0
      %337 = vmatprep.subr.bf16.mxu0 0
      %338 = vmatpush1.bf16.msra.mxu0 0
      %339 = vmatprep.subr.bf16.mxu0 0
      %340 = vmatpush1.bf16.msra.mxu0 0
      %341 = vmatprep.subr.bf16.mxu0 0
      %342 = vmatpush1.bf16.msra.mxu0 0
      %343 = vmatprep.mubr.bf16.mxu0 0
      %344 = vmatmul.mubr.bf16.gmra.mrb[0].mxu0 %v309
      %v345 = vpop.f32.mrb[0].mxu0
      %v346 = vadd.f32 %v291, %v345
      %v347 = vpop.f32.mrb[0].mxu0
      %v348 = vpop.f32.mrb[0].mxu0
      %v349 = vpop.f32.mrb[0].mxu0
      %350 = vdwg.mxu0
      %v351 = vcombine.low %v201, %v209
      %v353 = vunpack.c.l.s4 1983009808
      %v354 = vunpack.c.0.s8 %v353
      %v355 = vlaneseq
      %v356 = vshrl.u32 %v355, 7
      %v357 = vsub.s32 %v354, %v356
      %v358 = vrot.slane %v351, %v357
      %v360 = vpack.c.bf16 %v358, %v358
      %s361 = scalar_lea.vmem %s1, 32
      %v362 = vld [vmem:[%s361] sm:$0xf]
      %v363 = vld [vmem:[%s361 + $0x4] sm:$0xf]
      %v364 = vld [vmem:[%s361 + $0x8] sm:$0xf]
      %v365 = vld [vmem:[%s361 + $0xc] sm:$0xf]
      %v370 = vunpack.c.l.b16 %v362
      %v371 = vunpack.c.l.b16 %v363
      %v372 = vunpack.c.l.b16 %v364
      %v373 = vunpack.c.l.b16 %v365
      %v374 = vpack.c.b16 %v371, %v370
      %v375 = vpack.c.b16 %v373, %v372
      %v379 = vsel %vm252, %v360, 0
      %381 = vmatprep.subr.bf16.mxu0 0
      %382 = vmatpush1.bf16.msra.mxu0 %v374
      %383 = vmatprep.subr.bf16.mxu0 0
      %384 = vmatpush1.bf16.msra.mxu0 %v375
      %385 = vmatprep.subr.bf16.mxu0 0
      %386 = vmatpush1.bf16.msra.mxu0 0
      %387 = vmatprep.subr.bf16.mxu0 0
      %388 = vmatpush1.bf16.msra.mxu0 0
      %389 = vmatprep.subr.bf16.mxu0 0
      %390 = vmatpush1.bf16.msra.mxu0 0
      %391 = vmatprep.subr.bf16.mxu0 0
      %392 = vmatpush1.bf16.msra.mxu0 0
      %393 = vmatprep.subr.bf16.mxu0 0
      %394 = vmatpush1.bf16.msra.mxu0 0
      %395 = vmatprep.subr.bf16.mxu0 0
      %396 = vmatpush1.bf16.msra.mxu0 0
      %397 = vmatprep.subr.bf16.mxu0 0
      %398 = vmatpush1.bf16.msra.mxu0 0
      %399 = vmatprep.subr.bf16.mxu0 0
      %400 = vmatpush1.bf16.msra.mxu0 0
      %401 = vmatprep.subr.bf16.mxu0 0
      %402 = vmatpush1.bf16.msra.mxu0 0
      %403 = vmatprep.subr.bf16.mxu0 0
      %404 = vmatpush1.bf16.msra.mxu0 0
      %405 = vmatprep.subr.bf16.mxu0 0
      %406 = vmatpush1.bf16.msra.mxu0 0
      %407 = vmatprep.subr.bf16.mxu0 0
      %408 = vmatpush1.bf16.msra.mxu0 0
      %409 = vmatprep.subr.bf16.mxu0 0
      %410 = vmatpush1.bf16.msra.mxu0 0
      %411 = vmatprep.subr.bf16.mxu0 0
      %412 = vmatpush1.bf16.msra.mxu0 0
      %413 = vmatprep.mubr.bf16.mxu0 0
      %414 = vmatmul.mubr.bf16.gmra.mrb[0].mxu0 %v379
      %v415 = vpop.f32.mrb[0].mxu0
      %v416 = vadd.f32 0.0, %v415
      %v417 = vpop.f32.mrb[0].mxu0
      %v418 = vpop.f32.mrb[0].mxu0
      %v419 = vpop.f32.mrb[0].mxu0
      %420 = vdwg.mxu0
      %v421 = vadd.f32 %v346, %v416
      %v423 = vcombine.low %v175, %v176
      %v425 = vunpack.c.l.s4 1983009808
      %v426 = vunpack.c.0.s8 %v425
      %v427 = vlaneseq
      %v428 = vshrl.u32 %v427, 7
      %v429 = vsub.s32 %v426, %v428
      %v430 = vrot.slane %v423, %v429
      %v432 = vpack.c.bf16 %v430, %v430
      %s433 = scalar_lea.vmem %s1, 48
      %v434 = vld [vmem:[%s433] sm:$0xf]
      %v435 = vld [vmem:[%s433 + $0x4] sm:$0xf]
      %v436 = vld [vmem:[%s433 + $0x8] sm:$0xf]
      %v437 = vld [vmem:[%s433 + $0xc] sm:$0xf]
      %v442 = vunpack.c.l.b16 %v434
      %v443 = vunpack.c.l.b16 %v435
      %v444 = vunpack.c.l.b16 %v436
      %v445 = vunpack.c.l.b16 %v437
      %v446 = vpack.c.b16 %v443, %v442
      %v447 = vpack.c.b16 %v445, %v444
      %v451 = vsel %vm252, %v432, 0
      %453 = vmatprep.subr.bf16.mxu0 0
      %454 = vmatpush1.bf16.msra.mxu0 %v446
      %455 = vmatprep.subr.bf16.mxu0 0
      %456 = vmatpush1.bf16.msra.mxu0 %v447
      %457 = vmatprep.subr.bf16.mxu0 0
      %458 = vmatpush1.bf16.msra.mxu0 0
      %459 = vmatprep.subr.bf16.mxu0 0
      %460 = vmatpush1.bf16.msra.mxu0 0
      %461 = vmatprep.subr.bf16.mxu0 0
      %462 = vmatpush1.bf16.msra.mxu0 0
      %463 = vmatprep.subr.bf16.mxu0 0
      %464 = vmatpush1.bf16.msra.mxu0 0
      %465 = vmatprep.subr.bf16.mxu0 0
      %466 = vmatpush1.bf16.msra.mxu0 0
      %467 = vmatprep.subr.bf16.mxu0 0
      %468 = vmatpush1.bf16.msra.mxu0 0
      %469 = vmatprep.subr.bf16.mxu0 0
      %470 = vmatpush1.bf16.msra.mxu0 0
      %471 = vmatprep.subr.bf16.mxu0 0
      %472 = vmatpush1.bf16.msra.mxu0 0
      %473 = vmatprep.subr.bf16.mxu0 0
      %474 = vmatpush1.bf16.msra.mxu0 0
      %475 = vmatprep.subr.bf16.mxu0 0
      %476 = vmatpush1.bf16.msra.mxu0 0
      %477 = vmatprep.subr.bf16.mxu0 0
      %478 = vmatpush1.bf16.msra.mxu0 0
      %479 = vmatprep.subr.bf16.mxu0 0
      %480 = vmatpush1.bf16.msra.mxu0 0
      %481 = vmatprep.subr.bf16.mxu0 0
      %482 = vmatpush1.bf16.msra.mxu0 0
      %483 = vmatprep.subr.bf16.mxu0 0
      %484 = vmatpush1.bf16.msra.mxu0 0
      %485 = vmatprep.mubr.bf16.mxu0 0
      %486 = vmatmul.mubr.bf16.gmra.mrb[0].mxu0 %v451
      %v487 = vpop.f32.mrb[0].mxu0
      %v488 = vadd.f32 0.0, %v487
      %v489 = vpop.f32.mrb[0].mxu0
      %v490 = vpop.f32.mrb[0].mxu0
      %v491 = vpop.f32.mrb[0].mxu0
      %492 = vdwg.mxu0
      %v493 = vadd.f32 %v421, %v488
      %v495 = vunpack.c.l.s4 1983009808
      %v496 = vunpack.c.0.s8 %v495
      %v497 = vlaneseq
      %v498 = vshrl.u32 %v497, 7
      %v499 = vsub.s32 %v496, %v498
      %v500 = vrot.slane %v176, %v499
      %v501 = vcombine.high %v500, %v500
      %v502 = vrot.slane %v500, 7
      %v503 = vrot.slane %v502, 2
      %v504 = vrot.slane %v501, 7
      %v505 = vsel %vm216, %v503, %v504
      %v506 = vcombine.low %v224, %v505
      %v508 = vunpack.c.l.s4 1983009808
      %v509 = vunpack.c.0.s8 %v508
      %v510 = vlaneseq
      %v511 = vshrl.u32 %v510, 7
      %v512 = vsub.s32 %v509, %v511
      %v513 = vrot.slane %v506, %v512
      %v515 = vpack.c.bf16 %v513, %v513
      %s516 = scalar_lea.vmem %s1, 64
      %v517 = vld [vmem:[%s516] sm:$0xf]
      %v518 = vld [vmem:[%s516 + $0x4] sm:$0xf]
      %v519 = vld [vmem:[%s516 + $0x8] sm:$0xf]
      %v520 = vld [vmem:[%s516 + $0xc] sm:$0xf]
      %v525 = vunpack.c.l.b16 %v517
      %v526 = vunpack.c.l.b16 %v518
      %v527 = vunpack.c.l.b16 %v519
      %v528 = vunpack.c.l.b16 %v520
      %v529 = vpack.c.b16 %v526, %v525
      %v530 = vpack.c.b16 %v528, %v527
      %v534 = vsel %vm252, %v515, 0
      %536 = vmatprep.subr.bf16.mxu0 0
      %537 = vmatpush1.bf16.msra.mxu0 %v529
      %538 = vmatprep.subr.bf16.mxu0 0
      %539 = vmatpush1.bf16.msra.mxu0 %v530
      %540 = vmatprep.subr.bf16.mxu0 0
      %541 = vmatpush1.bf16.msra.mxu0 0
      %542 = vmatprep.subr.bf16.mxu0 0
      %543 = vmatpush1.bf16.msra.mxu0 0
      %544 = vmatprep.subr.bf16.mxu0 0
      %545 = vmatpush1.bf16.msra.mxu0 0
      %546 = vmatprep.subr.bf16.mxu0 0
      %547 = vmatpush1.bf16.msra.mxu0 0
      %548 = vmatprep.subr.bf16.mxu0 0
      %549 = vmatpush1.bf16.msra.mxu0 0
      %550 = vmatprep.subr.bf16.mxu0 0
      %551 = vmatpush1.bf16.msra.mxu0 0
      %552 = vmatprep.subr.bf16.mxu0 0
      %553 = vmatpush1.bf16.msra.mxu0 0
      %554 = vmatprep.subr.bf16.mxu0 0
      %555 = vmatpush1.bf16.msra.mxu0 0
      %556 = vmatprep.subr.bf16.mxu0 0
      %557 = vmatpush1.bf16.msra.mxu0 0
      %558 = vmatprep.subr.bf16.mxu0 0
      %559 = vmatpush1.bf16.msra.mxu0 0
      %560 = vmatprep.subr.bf16.mxu0 0
      %561 = vmatpush1.bf16.msra.mxu0 0
      %562 = vmatprep.subr.bf16.mxu0 0
      %563 = vmatpush1.bf16.msra.mxu0 0
      %564 = vmatprep.subr.bf16.mxu0 0
      %565 = vmatpush1.bf16.msra.mxu0 0
      %566 = vmatprep.subr.bf16.mxu0 0
      %567 = vmatpush1.bf16.msra.mxu0 0
      %568 = vmatprep.mubr.bf16.mxu0 0
      %569 = vmatmul.mubr.bf16.gmra.mrb[0].mxu0 %v534
      %v570 = vpop.f32.mrb[0].mxu0
      %v571 = vadd.f32 0.0, %v570
      %v572 = vpop.f32.mrb[0].mxu0
      %v573 = vpop.f32.mrb[0].mxu0
      %v574 = vpop.f32.mrb[0].mxu0
      %575 = vdwg.mxu0
      %v576 = vadd.f32 %v493, %v571
      %v577 = vcombine.low %v209, %v501
      %v579 = vunpack.c.l.s4 1983009808
      %v580 = vunpack.c.0.s8 %v579
      %v581 = vlaneseq
      %v582 = vshrl.u32 %v581, 7
      %v583 = vsub.s32 %v580, %v582
      %v584 = vrot.slane %v577, %v583
      %v586 = vpack.c.bf16 %v584, %v584
      %s587 = scalar_lea.vmem %s1, 80
      %v588 = vld [vmem:[%s587] sm:$0xf]
      %v589 = vld [vmem:[%s587 + $0x4] sm:$0xf]
      %v590 = vld [vmem:[%s587 + $0x8] sm:$0xf]
      %v591 = vld [vmem:[%s587 + $0xc] sm:$0xf]
      %v596 = vunpack.c.l.b16 %v588
      %v597 = vunpack.c.l.b16 %v589
      %v598 = vunpack.c.l.b16 %v590
      %v599 = vunpack.c.l.b16 %v591
      %v600 = vpack.c.b16 %v597, %v596
      %v601 = vpack.c.b16 %v599, %v598
      %v605 = vsel %vm252, %v586, 0
      %607 = vmatprep.subr.bf16.mxu0 0
      %608 = vmatpush1.bf16.msra.mxu0 %v600
      %609 = vmatprep.subr.bf16.mxu0 0
      %610 = vmatpush1.bf16.msra.mxu0 %v601
      %611 = vmatprep.subr.bf16.mxu0 0
      %612 = vmatpush1.bf16.msra.mxu0 0
      %613 = vmatprep.subr.bf16.mxu0 0
      %614 = vmatpush1.bf16.msra.mxu0 0
      %615 = vmatprep.subr.bf16.mxu0 0
      %616 = vmatpush1.bf16.msra.mxu0 0
      %617 = vmatprep.subr.bf16.mxu0 0
      %618 = vmatpush1.bf16.msra.mxu0 0
      %619 = vmatprep.subr.bf16.mxu0 0
      %620 = vmatpush1.bf16.msra.mxu0 0
      %621 = vmatprep.subr.bf16.mxu0 0
      %622 = vmatpush1.bf16.msra.mxu0 0
      %623 = vmatprep.subr.bf16.mxu0 0
      %624 = vmatpush1.bf16.msra.mxu0 0
      %625 = vmatprep.subr.bf16.mxu0 0
      %626 = vmatpush1.bf16.msra.mxu0 0
      %627 = vmatprep.subr.bf16.mxu0 0
      %628 = vmatpush1.bf16.msra.mxu0 0
      %629 = vmatprep.subr.bf16.mxu0 0
      %630 = vmatpush1.bf16.msra.mxu0 0
      %631 = vmatprep.subr.bf16.mxu0 0
      %632 = vmatpush1.bf16.msra.mxu0 0
      %633 = vmatprep.subr.bf16.mxu0 0
      %634 = vmatpush1.bf16.msra.mxu0 0
      %635 = vmatprep.subr.bf16.mxu0 0
      %636 = vmatpush1.bf16.msra.mxu0 0
      %637 = vmatprep.subr.bf16.mxu0 0
      %638 = vmatpush1.bf16.msra.mxu0 0
      %639 = vmatprep.mubr.bf16.mxu0 0
      %640 = vmatmul.mubr.bf16.gmra.mrb[0].mxu0 %v605
      %v641 = vpop.f32.mrb[0].mxu0
      %v642 = vadd.f32 0.0, %v641
      %v643 = vpop.f32.mrb[0].mxu0
      %v644 = vpop.f32.mrb[0].mxu0
      %v645 = vpop.f32.mrb[0].mxu0
      %646 = vdwg.mxu0
      %v647 = vadd.f32 %v576, %v642
      %v649 = vcombine.low %v176, %v177
      %v651 = vunpack.c.l.s4 1983009808
      %v652 = vunpack.c.0.s8 %v651
      %v653 = vlaneseq
      %v654 = vshrl.u32 %v653, 7
      %v655 = vsub.s32 %v652, %v654
      %v656 = vrot.slane %v649, %v655
      %v658 = vpack.c.bf16 %v656, %v656
      %s659 = scalar_lea.vmem %s1, 96
      %v660 = vld [vmem:[%s659] sm:$0xf]
      %v661 = vld [vmem:[%s659 + $0x4] sm:$0xf]
      %v662 = vld [vmem:[%s659 + $0x8] sm:$0xf]
      %v663 = vld [vmem:[%s659 + $0xc] sm:$0xf]
      %v668 = vunpack.c.l.b16 %v660
      %v669 = vunpack.c.l.b16 %v661
      %v670 = vunpack.c.l.b16 %v662
      %v671 = vunpack.c.l.b16 %v663
      %v672 = vpack.c.b16 %v669, %v668
      %v673 = vpack.c.b16 %v671, %v670
      %v677 = vsel %vm252, %v658, 0
      %679 = vmatprep.subr.bf16.mxu0 0
      %680 = vmatpush1.bf16.msra.mxu0 %v672
      %681 = vmatprep.subr.bf16.mxu0 0
      %682 = vmatpush1.bf16.msra.mxu0 %v673
      %683 = vmatprep.subr.bf16.mxu0 0
      %684 = vmatpush1.bf16.msra.mxu0 0
      %685 = vmatprep.subr.bf16.mxu0 0
      %686 = vmatpush1.bf16.msra.mxu0 0
      %687 = vmatprep.subr.bf16.mxu0 0
      %688 = vmatpush1.bf16.msra.mxu0 0
      %689 = vmatprep.subr.bf16.mxu0 0
      %690 = vmatpush1.bf16.msra.mxu0 0
      %691 = vmatprep.subr.bf16.mxu0 0
      %692 = vmatpush1.bf16.msra.mxu0 0
      %693 = vmatprep.subr.bf16.mxu0 0
      %694 = vmatpush1.bf16.msra.mxu0 0
      %695 = vmatprep.subr.bf16.mxu0 0
      %696 = vmatpush1.bf16.msra.mxu0 0
      %697 = vmatprep.subr.bf16.mxu0 0
      %698 = vmatpush1.bf16.msra.mxu0 0
      %699 = vmatprep.subr.bf16.mxu0 0
      %700 = vmatpush1.bf16.msra.mxu0 0
      %701 = vmatprep.subr.bf16.mxu0 0
      %702 = vmatpush1.bf16.msra.mxu0 0
      %703 = vmatprep.subr.bf16.mxu0 0
      %704 = vmatpush1.bf16.msra.mxu0 0
      %705 = vmatprep.subr.bf16.mxu0 0
      %706 = vmatpush1.bf16.msra.mxu0 0
      %707 = vmatprep.subr.bf16.mxu0 0
      %708 = vmatpush1.bf16.msra.mxu0 0
      %709 = vmatprep.subr.bf16.mxu0 0
      %710 = vmatpush1.bf16.msra.mxu0 0
      %711 = vmatprep.mubr.bf16.mxu0 0
      %712 = vmatmul.mubr.bf16.gmra.mrb[0].mxu0 %v677
      %v713 = vpop.f32.mrb[0].mxu0
      %v714 = vadd.f32 0.0, %v713
      %v715 = vpop.f32.mrb[0].mxu0
      %v716 = vpop.f32.mrb[0].mxu0
      %v717 = vpop.f32.mrb[0].mxu0
      %718 = vdwg.mxu0
      %v719 = vadd.f32 %v647, %v714
      %v721 = vunpack.c.l.s4 1983009808
      %v722 = vunpack.c.0.s8 %v721
      %v723 = vlaneseq
      %v724 = vshrl.u32 %v723, 7
      %v725 = vsub.s32 %v722, %v724
      %v726 = vrot.slane %v177, %v725
      %v727 = vcombine.high %v726, %v726
      %v728 = vrot.slane %v726, 7
      %v729 = vrot.slane %v728, 2
      %v730 = vrot.slane %v727, 7
      %v731 = vsel %vm216, %v729, %v730
      %v732 = vcombine.low %v505, %v731
      %v734 = vunpack.c.l.s4 1983009808
      %v735 = vunpack.c.0.s8 %v734
      %v736 = vlaneseq
      %v737 = vshrl.u32 %v736, 7
      %v738 = vsub.s32 %v735, %v737
      %v739 = vrot.slane %v732, %v738
      %v741 = vpack.c.bf16 %v739, %v739
      %s742 = scalar_lea.vmem %s1, 112
      %v743 = vld [vmem:[%s742] sm:$0xf]
      %v744 = vld [vmem:[%s742 + $0x4] sm:$0xf]
      %v745 = vld [vmem:[%s742 + $0x8] sm:$0xf]
      %v746 = vld [vmem:[%s742 + $0xc] sm:$0xf]
      %v751 = vunpack.c.l.b16 %v743
      %v752 = vunpack.c.l.b16 %v744
      %v753 = vunpack.c.l.b16 %v745
      %v754 = vunpack.c.l.b16 %v746
      %v755 = vpack.c.b16 %v752, %v751
      %v756 = vpack.c.b16 %v754, %v753
      %v760 = vsel %vm252, %v741, 0
      %762 = vmatprep.subr.bf16.mxu0 0
      %763 = vmatpush1.bf16.msra.mxu0 %v755
      %764 = vmatprep.subr.bf16.mxu0 0
      %765 = vmatpush1.bf16.msra.mxu0 %v756
      %766 = vmatprep.subr.bf16.mxu0 0
      %767 = vmatpush1.bf16.msra.mxu0 0
      %768 = vmatprep.subr.bf16.mxu0 0
      %769 = vmatpush1.bf16.msra.mxu0 0
      %770 = vmatprep.subr.bf16.mxu0 0
      %771 = vmatpush1.bf16.msra.mxu0 0
      %772 = vmatprep.subr.bf16.mxu0 0
      %773 = vmatpush1.bf16.msra.mxu0 0
      %774 = vmatprep.subr.bf16.mxu0 0
      %775 = vmatpush1.bf16.msra.mxu0 0
      %776 = vmatprep.subr.bf16.mxu0 0
      %777 = vmatpush1.bf16.msra.mxu0 0
      %778 = vmatprep.subr.bf16.mxu0 0
      %779 = vmatpush1.bf16.msra.mxu0 0
      %780 = vmatprep.subr.bf16.mxu0 0
      %781 = vmatpush1.bf16.msra.mxu0 0
      %782 = vmatprep.subr.bf16.mxu0 0
      %783 = vmatpush1.bf16.msra.mxu0 0
      %784 = vmatprep.subr.bf16.mxu0 0
      %785 = vmatpush1.bf16.msra.mxu0 0
      %786 = vmatprep.subr.bf16.mxu0 0
      %787 = vmatpush1.bf16.msra.mxu0 0
      %788 = vmatprep.subr.bf16.mxu0 0
      %789 = vmatpush1.bf16.msra.mxu0 0
      %790 = vmatprep.subr.bf16.mxu0 0
      %791 = vmatpush1.bf16.msra.mxu0 0
      %792 = vmatprep.subr.bf16.mxu0 0
      %793 = vmatpush1.bf16.msra.mxu0 0
      %794 = vmatprep.mubr.bf16.mxu0 0
      %795 = vmatmul.mubr.bf16.gmra.mrb[0].mxu0 %v760
      %v796 = vpop.f32.mrb[0].mxu0
      %v797 = vadd.f32 0.0, %v796
      %v798 = vpop.f32.mrb[0].mxu0
      %v799 = vpop.f32.mrb[0].mxu0
      %v800 = vpop.f32.mrb[0].mxu0
      %801 = vdwg.mxu0
      %v802 = vadd.f32 %v719, %v797
      %v803 = vcombine.low %v501, %v727
      %v805 = vunpack.c.l.s4 1983009808
      %v806 = vunpack.c.0.s8 %v805
      %v807 = vlaneseq
      %v808 = vshrl.u32 %v807, 7
      %v809 = vsub.s32 %v806, %v808
      %v810 = vrot.slane %v803, %v809
      %v812 = vpack.c.bf16 %v810, %v810
      %s813 = scalar_lea.vmem %s1, 128
      %v814 = vld [vmem:[%s813] sm:$0xf]
      %v815 = vld [vmem:[%s813 + $0x4] sm:$0xf]
      %v816 = vld [vmem:[%s813 + $0x8] sm:$0xf]
      %v817 = vld [vmem:[%s813 + $0xc] sm:$0xf]
      %v822 = vunpack.c.l.b16 %v814
      %v823 = vunpack.c.l.b16 %v815
      %v824 = vunpack.c.l.b16 %v816
      %v825 = vunpack.c.l.b16 %v817
      %v826 = vpack.c.b16 %v823, %v822
      %v827 = vpack.c.b16 %v825, %v824
      %v831 = vsel %vm252, %v812, 0
      %833 = vmatprep.subr.bf16.mxu0 0
      %834 = vmatpush1.bf16.msra.mxu0 %v826
      %835 = vmatprep.subr.bf16.mxu0 0
      %836 = vmatpush1.bf16.msra.mxu0 %v827
      %837 = vmatprep.subr.bf16.mxu0 0
      %838 = vmatpush1.bf16.msra.mxu0 0
      %839 = vmatprep.subr.bf16.mxu0 0
      %840 = vmatpush1.bf16.msra.mxu0 0
      %841 = vmatprep.subr.bf16.mxu0 0
      %842 = vmatpush1.bf16.msra.mxu0 0
      %843 = vmatprep.subr.bf16.mxu0 0
      %844 = vmatpush1.bf16.msra.mxu0 0
      %845 = vmatprep.subr.bf16.mxu0 0
      %846 = vmatpush1.bf16.msra.mxu0 0
      %847 = vmatprep.subr.bf16.mxu0 0
      %848 = vmatpush1.bf16.msra.mxu0 0
      %849 = vmatprep.subr.bf16.mxu0 0
      %850 = vmatpush1.bf16.msra.mxu0 0
      %851 = vmatprep.subr.bf16.mxu0 0
      %852 = vmatpush1.bf16.msra.mxu0 0
      %853 = vmatprep.subr.bf16.mxu0 0
      %854 = vmatpush1.bf16.msra.mxu0 0
      %855 = vmatprep.subr.bf16.mxu0 0
      %856 = vmatpush1.bf16.msra.mxu0 0
      %857 = vmatprep.subr.bf16.mxu0 0
      %858 = vmatpush1.bf16.msra.mxu0 0
      %859 = vmatprep.subr.bf16.mxu0 0
      %860 = vmatpush1.bf16.msra.mxu0 0
      %861 = vmatprep.subr.bf16.mxu0 0
      %862 = vmatpush1.bf16.msra.mxu0 0
      %863 = vmatprep.subr.bf16.mxu0 0
      %864 = vmatpush1.bf16.msra.mxu0 0
      %865 = vmatprep.mubr.bf16.mxu0 0
      %866 = vmatmul.mubr.bf16.gmra.mrb[0].mxu0 %v831
      %v867 = vpop.f32.mrb[0].mxu0
      %v868 = vadd.f32 0.0, %v867
      %v869 = vpop.f32.mrb[0].mxu0
      %v870 = vpop.f32.mrb[0].mxu0
      %v871 = vpop.f32.mrb[0].mxu0
      %872 = vdwg.mxu0
      %v873 = vadd.f32 %v802, %v868
      %v874 = vld [vmem:[%s2] sm:$0x1]
      %v876 = vlaneseq
      %v877 = vshrl.u32 %v876, 7
      %v878 = vsub.s32 0, %v877
      %v879 = vrot.slane %v874, %v878
      %v881 = vadd.f32 %v873, %v879
      %v882 = vmax.f32 %v881, 0.0
      %v885 = vunpack.c.l.s4 1983009808
      %v886 = vunpack.c.0.s8 %v885
      %v887 = vlaneseq
      %v888 = vshrl.u32 %v887, 7
      %v889 = vsub.s32 %v886, %v888
      %v890 = vrot.slane %v882, %v889
      %v891 = vcombine.high %v890, %v890
      %v894 = vpack.c.bf16 %v890, %v890
      %v895 = vpack.c.bf16 %v891, %v891
      %vm896 = vcmask 253952
      %897 = vst.msk [vmem:[%s168] sm:$0x1] %vm896, %v894
      %898 = vst.msk [vmem:[%s168 + $0x1] sm:$0x1] %vm896, %v895
      %p899 = scmp.lt.s32.totalorder %s14, 1
      %s900 = scalar_select %p899, %s14, 1
      %s901 = smul.addr %s900, 2
      %s902 = scalar_lea.vmem %s3, %s901
      // Predicated region
      $region33: #{semantic_segmentation_forward.24} parent=31 // pred_check
        %p903 = pneg %p100
      $region34: #{semantic_segmentation_forward.24} parent=31 // pred_check_branch
        %905 = sbr.rel (%p903) target = $region36
      $region35: #{semantic_segmentation_forward.24} parent=31 // pred_region
        _
      $region36: #{semantic_segmentation_forward.24} parent=31 // pred_fallthru
        _
    $region32: #{semantic_segmentation_forward.24} parent=5 // pred_fallthru
      _
    %p906 = scmp.le.s32.totalorder 2, %s9
    // Predicated region
    $region37: #{semantic_segmentation_forward.24} parent=5 // pred_check
      %p907 = pneg %p906
    $region38: #{semantic_segmentation_forward.24} parent=5 // pred_check_branch
      %909 = sbr.rel (%p907) target = $region40
    $region39: #{semantic_segmentation_forward.24} parent=5 // pred_region
      %s910 = ssub.s32 %s9, 2
      // Predicated region
      $region41: #{semantic_segmentation_forward.24} parent=39 // pred_check
        %p911 = pneg %p106
      $region42: #{semantic_segmentation_forward.24} parent=39 // pred_check_branch
        %913 = sbr.rel (%p911) target = $region44
      $region43: #{semantic_segmentation_forward.24} parent=39 // pred_region
        %p914 = scmp.lt.s32.totalorder %s15, 1
        %s915 = scalar_select %p914, %s15, 1
        %s916 = smul.addr %s915, 2
        %s917 = scalar_lea.vmem %s3, %s916
      $region44: #{semantic_segmentation_forward.24} parent=39 // pred_fallthru
        _
    $region40: #{semantic_segmentation_forward.24} parent=5 // pred_fallthru
      _
  $region6: #{semantic_segmentation_forward.24} parent=0 // loop_footer
    %s13 = sadd.s32 1, %s9
  $region7: #{semantic_segmentation_forward.24} parent=0 // loop_footer_branch
    %8 = sbr.rel target = $region3
  $region8: #{semantic_segmentation_forward.24} parent=0 // loop_exit
    _

// kernel: semantic_segmentation_forward.26
$region0: #{semantic_segmentation_forward.26}
  #allocation0 [shape = 'u32[]', space=smem, size = 0x4, offset = 0x4, fixed_abs, tag = 'smem constant byte address 0x4 - core index']
  #allocation1 [shape = 'u32[144,128]{1,0:T(1,128)}', space=vmem, size = 0x12000, scoped, tag = 'internal scratch']
  %s0 = inlined_call_operand.vmem [shape: f32[16,2], index: 0, kind: input, shape index: {}]
  %s1 = inlined_call_operand.vmem [shape: f32[2,4], index: 1, kind: input, shape index: {}]
  %s2 = inlined_call_operand.vmem [shape: f32[1,4], index: 2, kind: input, shape index: {}]
  %s3 = inlined_call_operand.vmem [shape: f32[16,4], index: 3, kind: output, shape index: {}]
  %s4 = sld [smem:[#allocation0]]
  $region22: #{semantic_segmentation_forward.26} parent=0
    _
  %s6 = ssub.s32 1, %s4
  %s7 = scalar_select 0, %s6, %s4
  // Predicated region
  $region2: #{semantic_segmentation_forward.26} parent=0 // pred_check
    _
  $region3: #{semantic_segmentation_forward.26} parent=0 // pred_check_branch
    %9 = sbr.rel (0) target = $region5
  $region4: #{semantic_segmentation_forward.26} parent=0 // pred_region
    _
  $region5: #{semantic_segmentation_forward.26} parent=0 // pred_fallthru
    _
  // Predicated region
  $region6: #{semantic_segmentation_forward.26} parent=0 // pred_check
    _
  $region7: #{semantic_segmentation_forward.26} parent=0 // pred_check_branch
    %11 = sbr.rel (0) target = $region9
  $region8: #{semantic_segmentation_forward.26} parent=0 // pred_region
    _
  $region9: #{semantic_segmentation_forward.26} parent=0 // pred_fallthru
    _
  // Predicated region
  $region10: #{semantic_segmentation_forward.26} parent=0 // pred_check
    _
  $region11: #{semantic_segmentation_forward.26} parent=0 // pred_check_branch
    %13 = sbr.rel (0) target = $region13
  $region12: #{semantic_segmentation_forward.26} parent=0 // pred_region
    _
  $region13: #{semantic_segmentation_forward.26} parent=0 // pred_fallthru
    _
  %v14 = vld [vmem:[%s0] sm:$0xff]
  %v15 = vld [vmem:[%s0 + $0x8] sm:$0xff]
  %v16 = vld [vmem:[%s1] sm:$0x3]
  %v17 = vld [vmem:[%s2] sm:$0x1]
  %v19 = vlaneseq
  %v20 = vshrl.u32 %v19, 7
  %v21 = vsub.s32 0, %v20
  %v22 = vrot.slane %v17, %v21
  %vm24 = vcmask 15360
  %v26 = vsel %vm24, %v14, 0
  %v29 = vsel %vm24, %v15, 0
  %vm31 = vcmask 1041408
  %v33 = vsel %vm31, %v16, 0
  %35 = vmatprep.subr.mxu0 0.0
  %36 = vmatpush1.msra.mxu0 %v33
  %37 = vmatprep.subr.mxu0 0.0
  %38 = vmatpush1.msra.mxu0 0.0
  %39 = vmatprep.subr.mxu0 0.0
  %40 = vmatpush1.msra.mxu0 0.0
  %41 = vmatprep.subr.mxu0 0.0
  %42 = vmatpush1.msra.mxu0 0.0
  %43 = vmatprep.subr.mxu0 0.0
  %44 = vmatpush1.msra.mxu0 0.0
  %45 = vmatprep.subr.mxu0 0.0
  %46 = vmatpush1.msra.mxu0 0.0
  %47 = vmatprep.subr.mxu0 0.0
  %48 = vmatpush1.msra.mxu0 0.0
  %49 = vmatprep.subr.mxu0 0.0
  %50 = vmatpush1.msra.mxu0 0.0
  %51 = vmatprep.subr.mxu0 0.0
  %52 = vmatpush1.msra.mxu0 0.0
  %53 = vmatprep.subr.mxu0 0.0
  %54 = vmatpush1.msra.mxu0 0.0
  %55 = vmatprep.subr.mxu0 0.0
  %56 = vmatpush1.msra.mxu0 0.0
  %57 = vmatprep.subr.mxu0 0.0
  %58 = vmatpush1.msra.mxu0 0.0
  %59 = vmatprep.subr.mxu0 0.0
  %60 = vmatpush1.msra.mxu0 0.0
  %61 = vmatprep.subr.mxu0 0.0
  %62 = vmatpush1.msra.mxu0 0.0
  %63 = vmatprep.subr.mxu0 0.0
  %64 = vmatpush1.msra.mxu0 0.0
  %65 = vmatprep.subr.mxu0 0.0
  %66 = vmatpush1.msra.mxu0 0.0
  %67 = vmatprep.subr.mxu0 0.0
  %68 = vmatpush1.msra.mxu0 0.0
  %69 = vmatprep.subr.mxu0 0.0
  %70 = vmatpush1.msra.mxu0 0.0
  %71 = vmatprep.subr.mxu0 0.0
  %72 = vmatpush1.msra.mxu0 0.0
  %73 = vmatprep.subr.mxu0 0.0
  %74 = vmatpush1.msra.mxu0 0.0
  %75 = vmatprep.subr.mxu0 0.0
  %76 = vmatpush1.msra.mxu0 0.0
  %77 = vmatprep.subr.mxu0 0.0
  %78 = vmatpush1.msra.mxu0 0.0
  %79 = vmatprep.subr.mxu0 0.0
  %80 = vmatpush1.msra.mxu0 0.0
  %81 = vmatprep.subr.mxu0 0.0
  %82 = vmatpush1.msra.mxu0 0.0
  %83 = vmatprep.subr.mxu0 0.0
  %84 = vmatpush1.msra.mxu0 0.0
  %85 = vmatprep.subr.mxu0 0.0
  %86 = vmatpush1.msra.mxu0 0.0
  %87 = vmatprep.subr.mxu0 0.0
  %88 = vmatpush1.msra.mxu0 0.0
  %89 = vmatprep.subr.mxu0 0.0
  %90 = vmatpush1.msra.mxu0 0.0
  %91 = vmatprep.subr.mxu0 0.0
  %92 = vmatpush1.msra.mxu0 0.0
  %93 = vmatprep.subr.mxu0 0.0
  %94 = vmatpush1.msra.mxu0 0.0
  %95 = vmatprep.subr.mxu0 0.0
  %96 = vmatpush1.msra.mxu0 0.0
  %97 = vmatprep.subr.mxu0 0.0
  %98 = vmatpush1.msra.mxu0 0.0
  %99 = vmatprep.mubr.f32.mxu0 0.0
  %100 = vmatmul.mubr.f32.gmra.mrb[0].mxu0 %v26
  %v101 = vpop.f32.mrb[0].mxu0
  %v102 = vadd.f32 %v22, %v101
  %v103 = vpop.f32.mrb[0].mxu0
  %104 = vmatprep.mubr.f32.mxu0 0.0
  %105 = vmatmul.mubr.f32.gmra.mrb[0].mxu0 %v29
  %v106 = vpop.f32.mrb[0].mxu0
  %v107 = vadd.f32 %v22, %v106
  %v108 = vpop.f32.mrb[0].mxu0
  %109 = vdwg.mxu0
  %vm110 = vcmask 31744
  %111 = vst.msk [vmem:[%s3] sm:$0xff] %vm110, %v102
  %112 = vst.msk [vmem:[%s3 + $0x8] sm:$0xff] %vm110, %v107
  // Predicated region
  $region14: #{semantic_segmentation_forward.26} parent=0 // pred_check
    _
  $region15: #{semantic_segmentation_forward.26} parent=0 // pred_check_branch
    %114 = sbr.rel (0) target = $region17
  $region16: #{semantic_segmentation_forward.26} parent=0 // pred_region
    _
  $region17: #{semantic_segmentation_forward.26} parent=0 // pred_fallthru
    _
  // Predicated region
  $region18: #{semantic_segmentation_forward.26} parent=0 // pred_check
    _
  $region19: #{semantic_segmentation_forward.26} parent=0 // pred_check_branch
    %116 = sbr.rel (0) target = $region21
  $region20: #{semantic_segmentation_forward.26} parent=0 // pred_region
    _
  $region21: #{semantic_segmentation_forward.26} parent=0 // pred_fallthru
    _

// kernel: semantic_segmentation_forward.25
$region0: #{semantic_segmentation_forward.25}
  #allocation0 [shape = 'u32[]', space=smem, size = 0x4, offset = 0x4, fixed_abs, tag = 'smem constant byte address 0x4 - core index']
  #allocation1 [shape = 'u32[144,128]{1,0:T(1,128)}', space=vmem, size = 0x12000, scoped, tag = 'internal scratch']
  #allocation2 [shape = 'f32[1,1]{1,0:T(1,128)S(1)}', space=vmem, size = 0x200, scoped, tag = 'scoped memory for semantic_segmentation_forward.25']
  %s0 = inlined_call_operand.vmem [shape: bf16[2,4,4,32], index: 0, kind: input, shape index: {}]
  %s1 = inlined_call_operand.vmem [shape: bf16[9,32,1], index: 1, kind: input, shape index: {}]
  %s2 = inlined_call_operand.<no memory space> [shape: f32[1,1], index: 2, kind: input, shape index: {}]
  %s3 = inlined_call_operand.vmem [shape: f32[2,2,2,1], index: 3, kind: output, shape index: {}]
  %s4 = sld [smem:[#allocation0]]
  $region45: #{semantic_segmentation_forward.25} parent=0
    _
  %s6 = ssub.s32 1, %s4
  %s7 = scalar_select 0, %s6, %s4
  %v8 = vstv %s2
  %9 = vst [vmem:[#allocation2] sm:$0x1] %v8
  loop: start=0, step=1, limit=4
  $region2: #{semantic_segmentation_forward.25} parent=0 // loop_pre_header
    _
  $region3: #{semantic_segmentation_forward.25} parent=0 // loop_header
    %s11 = sphi 0, %s15
    %p12 = scmp.ge.s32.totalorder %s11, 4
    %s21 = sphi 0, %s23
    %s24 = sphi 0, %s21
    %s25 = sphi 0, %s24
    %s41 = sphi 0, %s25
    %s45 = sphi 0, %s45
    %s47 = sphi 0, %s45
    %s48 = sphi 0, %s47
    %s62 = sphi 0, %s48
    %s66 = sphi 0, %s66
    %s68 = sphi 0, %s66
    %s69 = sphi 0, %s68
    %s83 = sphi 0, %s69
    %s89 = sphi 0, %s91
    %s92 = sphi 0, %s89
    %s93 = sphi 0, %s92
    %s109 = sphi 0, %s93
  $region4: #{semantic_segmentation_forward.25} parent=0 // loop_header_branch
    %14 = sbr.rel (%p12) target = $region8
  $region5: #{semantic_segmentation_forward.25} parent=0 // loop_body
    %s16 = ssub.s32 %s11, 1
    %s17 = ssub.s32 %s11, 2
    %s18 = sadd.s32 %s11, 1
    %s19 = ssub.s32 %s11, %s18
    %p20 = scmp.eq.s32.totalorder %s19, 0
    %s22 = sadd.s32 %s21, 1
    %s23 = scalar_select %p20, %s21, %s22
    %p26 = pneg %p20
    %p27 = scmp.eq.s32.totalorder %s11, 1
    %p28 = por %p26, %p27
    %p29 = scmp.ne.s32.totalorder %s21, %s24
    %p30 = scmp.eq.s32.totalorder %s11, 0
    %p31 = por %p29, %p30
    %p32 = scmp.ne.s32.totalorder %s21, %s24
    %p33 = scmp.eq.s32.totalorder %s16, 1
    %p34 = por %p32, %p33
    %p35 = scmp.ne.s32.totalorder %s24, %s25
    %p36 = scmp.eq.s32.totalorder %s16, 0
    %p37 = por %p35, %p36
    %p38 = scmp.ne.s32.totalorder %s24, %s25
    %p39 = scmp.eq.s32.totalorder %s17, 1
    %p40 = por %p38, %p39
    %p42 = scmp.ne.s32.totalorder %s25, %s41
    %p43 = scmp.eq.s32.totalorder %s17, 0
    %p44 = por %p42, %p43
    %s46 = sadd.s32 %s45, 1
    %p49 = scmp.eq.s32.totalorder %s11, 1
    %p50 = scmp.ne.s32.totalorder %s45, %s47
    %p51 = scmp.eq.s32.totalorder %s11, 0
    %p52 = por %p50, %p51
    %p53 = scmp.ne.s32.totalorder %s45, %s47
    %p54 = scmp.eq.s32.totalorder %s16, 1
    %p55 = por %p53, %p54
    %p56 = scmp.ne.s32.totalorder %s47, %s48
    %p57 = scmp.eq.s32.totalorder %s16, 0
    %p58 = por %p56, %p57
    %p59 = scmp.ne.s32.totalorder %s47, %s48
    %p60 = scmp.eq.s32.totalorder %s17, 1
    %p61 = por %p59, %p60
    %p63 = scmp.ne.s32.totalorder %s48, %s62
    %p64 = scmp.eq.s32.totalorder %s17, 0
    %p65 = por %p63, %p64
    %s67 = sadd.s32 %s66, 1
    %p70 = scmp.eq.s32.totalorder %s11, 1
    %p71 = scmp.ne.s32.totalorder %s66, %s68
    %p72 = scmp.eq.s32.totalorder %s11, 0
    %p73 = por %p71, %p72
    %p74 = scmp.ne.s32.totalorder %s66, %s68
    %p75 = scmp.eq.s32.totalorder %s16, 1
    %p76 = por %p74, %p75
    %p77 = scmp.ne.s32.totalorder %s68, %s69
    %p78 = scmp.eq.s32.totalorder %s16, 0
    %p79 = por %p77, %p78
    %p80 = scmp.ne.s32.totalorder %s68, %s69
    %p81 = scmp.eq.s32.totalorder %s17, 1
    %p82 = por %p80, %p81
    %p84 = scmp.ne.s32.totalorder %s69, %s83
    %p85 = scmp.eq.s32.totalorder %s17, 0
    %p86 = por %p84, %p85
    %s87 = ssub.s32 %s11, %s18
    %p88 = scmp.eq.s32.totalorder %s87, 0
    %s90 = sadd.s32 %s89, 1
    %s91 = scalar_select %p88, %s89, %s90
    %p94 = pneg %p88
    %p95 = scmp.eq.s32.totalorder %s11, 1
    %p96 = por %p94, %p95
    %p97 = scmp.ne.s32.totalorder %s89, %s92
    %p98 = scmp.eq.s32.totalorder %s11, 0
    %p99 = por %p97, %p98
    %p100 = scmp.ne.s32.totalorder %s89, %s92
    %p101 = scmp.eq.s32.totalorder %s16, 1
    %p102 = por %p100, %p101
    %p103 = scmp.ne.s32.totalorder %s92, %s93
    %p104 = scmp.eq.s32.totalorder %s16, 0
    %p105 = por %p103, %p104
    %p106 = scmp.ne.s32.totalorder %s92, %s93
    %p107 = scmp.eq.s32.totalorder %s17, 1
    %p108 = por %p106, %p107
    %p110 = scmp.ne.s32.totalorder %s93, %s109
    %p111 = scmp.eq.s32.totalorder %s17, 0
    %p112 = por %p110, %p111
    %p113 = scmp.le.s32.totalorder 1, %s11
    %p114 = scmp.lt.s32.totalorder %s11, 3
    %p115 = pnand %p113, %p114
    %p116 = pneg %p115
    // Predicated region
    $region9: #{semantic_segmentation_forward.25} parent=5 // pred_check
      _
    $region10: #{semantic_segmentation_forward.25} parent=5 // pred_check_branch
      %118 = sbr.rel (%p115) target = $region12
    $region11: #{semantic_segmentation_forward.25} parent=5 // pred_region
      %s119 = ssub.s32 %s11, 1
      // Predicated region
      $region13: #{semantic_segmentation_forward.25} parent=11 // pred_check
        %p120 = pneg %p58
      $region14: #{semantic_segmentation_forward.25} parent=11 // pred_check_branch
        %122 = sbr.rel (%p120) target = $region16
      $region15: #{semantic_segmentation_forward.25} parent=11 // pred_region
        _
      $region16: #{semantic_segmentation_forward.25} parent=11 // pred_fallthru
        _
      // Predicated region
      $region17: #{semantic_segmentation_forward.25} parent=11 // pred_check
        %p123 = pneg %p79
      $region18: #{semantic_segmentation_forward.25} parent=11 // pred_check_branch
        %125 = sbr.rel (%p123) target = $region20
      $region19: #{semantic_segmentation_forward.25} parent=11 // pred_region
        _
      $region20: #{semantic_segmentation_forward.25} parent=11 // pred_fallthru
        _
    $region12: #{semantic_segmentation_forward.25} parent=5 // pred_fallthru
      _
    %p126 = scmp.lt.s32.totalorder %s11, 2
    // Predicated region
    $region21: #{semantic_segmentation_forward.25} parent=5 // pred_check
      %p127 = pneg %p126
    $region22: #{semantic_segmentation_forward.25} parent=5 // pred_check_branch
      %129 = sbr.rel (%p127) target = $region24
    $region23: #{semantic_segmentation_forward.25} parent=5 // pred_region
      // Predicated region
      $region25: #{semantic_segmentation_forward.25} parent=23 // pred_check
        %p130 = pneg %p31
      $region26: #{semantic_segmentation_forward.25} parent=23 // pred_check_branch
        %132 = sbr.rel (%p130) target = $region28
      $region27: #{semantic_segmentation_forward.25} parent=23 // pred_region
        %p133 = scmp.lt.s32.totalorder %s11, 1
        %s134 = scalar_select %p133, %s11, 1
        %s135 = smul.addr %s134, 4
        %s136 = smul.addr %s135, 2
        %s137 = scalar_lea.vmem %s0, %s136
      $region28: #{semantic_segmentation_forward.25} parent=23 // pred_fallthru
        _
    $region24: #{semantic_segmentation_forward.25} parent=5 // pred_fallthru
      _
    %p138 = scmp.le.s32.totalorder 1, %s11
    %p139 = scmp.lt.s32.totalorder %s11, 3
    %p140 = pnand %p138, %p139
    %p141 = pneg %p140
    // Predicated region
    $region29: #{semantic_segmentation_forward.25} parent=5 // pred_check
      _
    $region30: #{semantic_segmentation_forward.25} parent=5 // pred_check_branch
      %143 = sbr.rel (%p140) target = $region32
    $region31: #{semantic_segmentation_forward.25} parent=5 // pred_region
      %s144 = ssub.s32 %s11, 1
      %p145 = scmp.lt.s32.totalorder %s16, 1
      %s146 = scalar_select %p145, %s16, 1
      %s147 = smul.addr %s146, 4
      %s148 = smul.addr %s147, 2
      %s149 = scalar_lea.vmem %s0, %s148
      %p150 = pneg %p37
      %p151 = pneg %p34
      %p152 = pneg %p58
      %p153 = pneg %p55
      %p154 = pneg %p79
      %p155 = pneg %p76
      %p156 = pneg %p105
      %p157 = pneg %p102
      %p158 = scmp.lt.s32.totalorder %s16, 1
      %s159 = scalar_select %p158, %s16, 1
      %s160 = smul.addr %s159, 2
      %s161 = smul.addr %s160, 2
      %s162 = scalar_lea.vmem %s3, %s161
      %p163 = scmp.lt.s32.totalorder %s16, 1
      %s164 = scalar_select %p163, %s16, 1
      %s165 = smul.addr %s164, 4
      %s166 = smul.addr %s165, 2
      %s167 = scalar_lea.vmem %s0, %s166
      %p168 = scmp.lt.s32.totalorder %s16, 1
      %s169 = scalar_select %p168, %s16, 1
      %s170 = smul.addr %s169, 2
      %s171 = smul.addr %s170, 2
      %s172 = scalar_lea.vmem %s3, %s171
      %v174 = vld [vmem:[%s167] sm:$0x3]
      %v175 = vld [vmem:[%s167 + $0x2] sm:$0x3]
      %v176 = vld [vmem:[%s167 + $0x4] sm:$0x3]
      %v177 = vld [vmem:[%s167 + $0x6] sm:$0x3]
      %v178 = vunpack.c.l.bf16 %v174
      %v179 = vunpack.c.l.bf16 %v175
      %v180 = vunpack.c.l.bf16 %v176
      %v181 = vunpack.c.l.bf16 %v177
      %v184 = vcombine.low %v178, %v179
      %v186 = vunpack.c.l.s4 1983009808
      %v187 = vunpack.c.0.s8 %v186
      %v188 = vlaneseq
      %v189 = vshrl.u32 %v188, 7
      %v190 = vsub.s32 %v187, %v189
      %v191 = vrot.slane %v184, %v190
      %v193 = vpack.c.bf16 %v191, %v191
      %v194 = vld [vmem:[%s1] sm:$0xf]
      %v195 = vld [vmem:[%s1 + $0x4] sm:$0xf]
      %v196 = vld [vmem:[%s1 + $0x8] sm:$0xf]
      %v197 = vld [vmem:[%s1 + $0xc] sm:$0xf]
      %v199 = vunpack.c.l.s4 1983009808
      %v200 = vunpack.c.0.s8 %v199
      %v201 = vlaneseq
      %v202 = vshrl.u32 %v201, 7
      %v203 = vsub.s32 %v200, %v202
      %v204 = vrot.slane %v178, %v203
      %v205 = vcombine.high %v204, %v204
      %v207 = vunpack.c.l.s4 1983009808
      %v208 = vunpack.c.0.s8 %v207
      %v209 = vlaneseq
      %v210 = vshrl.u32 %v209, 7
      %v211 = vsub.s32 %v208, %v210
      %v212 = vrot.slane %v179, %v211
      %v213 = vcombine.high %v212, %v212
      %vm214 = vcmask 1040384
      %vm215 = vcmask 1042434
      %vm216 = vmor %vm214, %vm215
      %vm217 = vcmask 1044484
      %vm218 = vmor %vm216, %vm217
      %vm219 = vcmask 1046534
      %vm220 = vmor %vm218, %vm219
      %v221 = vrot.slane %v204, 7
      %v222 = vrot.slane %v221, 2
      %v223 = vrot.slane %v205, 7
      %v224 = vsel %vm220, %v222, %v223
      %v225 = vrot.slane %v212, 7
      %v226 = vrot.slane %v225, 2
      %v227 = vrot.slane %v213, 7
      %v228 = vsel %vm220, %v226, %v227
      %v229 = vcombine.low %v224, %v228
      %v231 = vunpack.c.l.s4 1983009808
      %v232 = vunpack.c.0.s8 %v231
      %v233 = vlaneseq
      %v234 = vshrl.u32 %v233, 7
      %v235 = vsub.s32 %v232, %v234
      %v236 = vrot.slane %v229, %v235
      %v238 = vpack.c.bf16 %v236, %v236
      %s239 = scalar_lea.vmem %s1, 16
      %v240 = vld [vmem:[%s239] sm:$0xf]
      %v241 = vld [vmem:[%s239 + $0x4] sm:$0xf]
      %v242 = vld [vmem:[%s239 + $0x8] sm:$0xf]
      %v243 = vld [vmem:[%s239 + $0xc] sm:$0xf]
      %v248 = vunpack.c.l.b16 %v240
      %v249 = vunpack.c.l.b16 %v241
      %v250 = vunpack.c.l.b16 %v242
      %v251 = vunpack.c.l.b16 %v243
      %v252 = vpack.c.b16 %v249, %v248
      %v253 = vpack.c.b16 %v251, %v250
      %vm256 = vcmask 261120
      %v258 = vsel %vm256, %v238, 0
      %260 = vmatprep.subr.bf16.mxu0 0
      %261 = vmatpush1.bf16.msra.mxu0 %v252
      %262 = vmatprep.subr.bf16.mxu0 0
      %263 = vmatpush1.bf16.msra.mxu0 %v253
      %264 = vmatprep.subr.bf16.mxu0 0
      %265 = vmatpush1.bf16.msra.mxu0 0
      %266 = vmatprep.subr.bf16.mxu0 0
      %267 = vmatpush1.bf16.msra.mxu0 0
      %268 = vmatprep.subr.bf16.mxu0 0
      %269 = vmatpush1.bf16.msra.mxu0 0
      %270 = vmatprep.subr.bf16.mxu0 0
      %271 = vmatpush1.bf16.msra.mxu0 0
      %272 = vmatprep.subr.bf16.mxu0 0
      %273 = vmatpush1.bf16.msra.mxu0 0
      %274 = vmatprep.subr.bf16.mxu0 0
      %275 = vmatpush1.bf16.msra.mxu0 0
      %276 = vmatprep.subr.bf16.mxu0 0
      %277 = vmatpush1.bf16.msra.mxu0 0
      %278 = vmatprep.subr.bf16.mxu0 0
      %279 = vmatpush1.bf16.msra.mxu0 0
      %280 = vmatprep.subr.bf16.mxu0 0
      %281 = vmatpush1.bf16.msra.mxu0 0
      %282 = vmatprep.subr.bf16.mxu0 0
      %283 = vmatpush1.bf16.msra.mxu0 0
      %284 = vmatprep.subr.bf16.mxu0 0
      %285 = vmatpush1.bf16.msra.mxu0 0
      %286 = vmatprep.subr.bf16.mxu0 0
      %287 = vmatpush1.bf16.msra.mxu0 0
      %288 = vmatprep.subr.bf16.mxu0 0
      %289 = vmatpush1.bf16.msra.mxu0 0
      %290 = vmatprep.subr.bf16.mxu0 0
      %291 = vmatpush1.bf16.msra.mxu0 0
      %292 = vmatprep.mubr.bf16.mxu0 0
      %293 = vmatmul.mubr.bf16.gmra.mrb[0].mxu0 %v258
      %v294 = vpop.f32.mrb[0].mxu0
      %v295 = vadd.f32 0.0, %v294
      %v296 = vpop.f32.mrb[0].mxu0
      %v297 = vpop.f32.mrb[0].mxu0
      %v298 = vpop.f32.mrb[0].mxu0
      %299 = vdwg.mxu0
      %v304 = vunpack.c.l.b16 %v194
      %v305 = vunpack.c.l.b16 %v195
      %v306 = vunpack.c.l.b16 %v196
      %v307 = vunpack.c.l.b16 %v197
      %v308 = vpack.c.b16 %v305, %v304
      %v309 = vpack.c.b16 %v307, %v306
      %v313 = vsel %vm256, %v193, 0
      %315 = vmatprep.subr.bf16.mxu0 0
      %316 = vmatpush1.bf16.msra.mxu0 %v308
      %317 = vmatprep.subr.bf16.mxu0 0
      %318 = vmatpush1.bf16.msra.mxu0 %v309
      %319 = vmatprep.subr.bf16.mxu0 0
      %320 = vmatpush1.bf16.msra.mxu0 0
      %321 = vmatprep.subr.bf16.mxu0 0
      %322 = vmatpush1.bf16.msra.mxu0 0
      %323 = vmatprep.subr.bf16.mxu0 0
      %324 = vmatpush1.bf16.msra.mxu0 0
      %325 = vmatprep.subr.bf16.mxu0 0
      %326 = vmatpush1.bf16.msra.mxu0 0
      %327 = vmatprep.subr.bf16.mxu0 0
      %328 = vmatpush1.bf16.msra.mxu0 0
      %329 = vmatprep.subr.bf16.mxu0 0
      %330 = vmatpush1.bf16.msra.mxu0 0
      %331 = vmatprep.subr.bf16.mxu0 0
      %332 = vmatpush1.bf16.msra.mxu0 0
      %333 = vmatprep.subr.bf16.mxu0 0
      %334 = vmatpush1.bf16.msra.mxu0 0
      %335 = vmatprep.subr.bf16.mxu0 0
      %336 = vmatpush1.bf16.msra.mxu0 0
      %337 = vmatprep.subr.bf16.mxu0 0
      %338 = vmatpush1.bf16.msra.mxu0 0
      %339 = vmatprep.subr.bf16.mxu0 0
      %340 = vmatpush1.bf16.msra.mxu0 0
      %341 = vmatprep.subr.bf16.mxu0 0
      %342 = vmatpush1.bf16.msra.mxu0 0
      %343 = vmatprep.subr.bf16.mxu0 0
      %344 = vmatpush1.bf16.msra.mxu0 0
      %345 = vmatprep.subr.bf16.mxu0 0
      %346 = vmatpush1.bf16.msra.mxu0 0
      %347 = vmatprep.mubr.bf16.mxu0 0
      %348 = vmatmul.mubr.bf16.gmra.mrb[0].mxu0 %v313
      %v349 = vpop.f32.mrb[0].mxu0
      %v350 = vadd.f32 %v295, %v349
      %v351 = vpop.f32.mrb[0].mxu0
      %v352 = vpop.f32.mrb[0].mxu0
      %v353 = vpop.f32.mrb[0].mxu0
      %354 = vdwg.mxu0
      %v355 = vcombine.low %v205, %v213
      %v357 = vunpack.c.l.s4 1983009808
      %v358 = vunpack.c.0.s8 %v357
      %v359 = vlaneseq
      %v360 = vshrl.u32 %v359, 7
      %v361 = vsub.s32 %v358, %v360
      %v362 = vrot.slane %v355, %v361
      %v364 = vpack.c.bf16 %v362, %v362
      %s365 = scalar_lea.vmem %s1, 32
      %v366 = vld [vmem:[%s365] sm:$0xf]
      %v367 = vld [vmem:[%s365 + $0x4] sm:$0xf]
      %v368 = vld [vmem:[%s365 + $0x8] sm:$0xf]
      %v369 = vld [vmem:[%s365 + $0xc] sm:$0xf]
      %v374 = vunpack.c.l.b16 %v366
      %v375 = vunpack.c.l.b16 %v367
      %v376 = vunpack.c.l.b16 %v368
      %v377 = vunpack.c.l.b16 %v369
      %v378 = vpack.c.b16 %v375, %v374
      %v379 = vpack.c.b16 %v377, %v376
      %v383 = vsel %vm256, %v364, 0
      %385 = vmatprep.subr.bf16.mxu0 0
      %386 = vmatpush1.bf16.msra.mxu0 %v378
      %387 = vmatprep.subr.bf16.mxu0 0
      %388 = vmatpush1.bf16.msra.mxu0 %v379
      %389 = vmatprep.subr.bf16.mxu0 0
      %390 = vmatpush1.bf16.msra.mxu0 0
      %391 = vmatprep.subr.bf16.mxu0 0
      %392 = vmatpush1.bf16.msra.mxu0 0
      %393 = vmatprep.subr.bf16.mxu0 0
      %394 = vmatpush1.bf16.msra.mxu0 0
      %395 = vmatprep.subr.bf16.mxu0 0
      %396 = vmatpush1.bf16.msra.mxu0 0
      %397 = vmatprep.subr.bf16.mxu0 0
      %398 = vmatpush1.bf16.msra.mxu0 0
      %399 = vmatprep.subr.bf16.mxu0 0
      %400 = vmatpush1.bf16.msra.mxu0 0
      %401 = vmatprep.subr.bf16.mxu0 0
      %402 = vmatpush1.bf16.msra.mxu0 0
      %403 = vmatprep.subr.bf16.mxu0 0
      %404 = vmatpush1.bf16.msra.mxu0 0
      %405 = vmatprep.subr.bf16.mxu0 0
      %406 = vmatpush1.bf16.msra.mxu0 0
      %407 = vmatprep.subr.bf16.mxu0 0
      %408 = vmatpush1.bf16.msra.mxu0 0
      %409 = vmatprep.subr.bf16.mxu0 0
      %410 = vmatpush1.bf16.msra.mxu0 0
      %411 = vmatprep.subr.bf16.mxu0 0
      %412 = vmatpush1.bf16.msra.mxu0 0
      %413 = vmatprep.subr.bf16.mxu0 0
      %414 = vmatpush1.bf16.msra.mxu0 0
      %415 = vmatprep.subr.bf16.mxu0 0
      %416 = vmatpush1.bf16.msra.mxu0 0
      %417 = vmatprep.mubr.bf16.mxu0 0
      %418 = vmatmul.mubr.bf16.gmra.mrb[0].mxu0 %v383
      %v419 = vpop.f32.mrb[0].mxu0
      %v420 = vadd.f32 0.0, %v419
      %v421 = vpop.f32.mrb[0].mxu0
      %v422 = vpop.f32.mrb[0].mxu0
      %v423 = vpop.f32.mrb[0].mxu0
      %424 = vdwg.mxu0
      %v425 = vadd.f32 %v350, %v420
      %v427 = vcombine.low %v179, %v180
      %v429 = vunpack.c.l.s4 1983009808
      %v430 = vunpack.c.0.s8 %v429
      %v431 = vlaneseq
      %v432 = vshrl.u32 %v431, 7
      %v433 = vsub.s32 %v430, %v432
      %v434 = vrot.slane %v427, %v433
      %v436 = vpack.c.bf16 %v434, %v434
      %s437 = scalar_lea.vmem %s1, 48
      %v438 = vld [vmem:[%s437] sm:$0xf]
      %v439 = vld [vmem:[%s437 + $0x4] sm:$0xf]
      %v440 = vld [vmem:[%s437 + $0x8] sm:$0xf]
      %v441 = vld [vmem:[%s437 + $0xc] sm:$0xf]
      %v446 = vunpack.c.l.b16 %v438
      %v447 = vunpack.c.l.b16 %v439
      %v448 = vunpack.c.l.b16 %v440
      %v449 = vunpack.c.l.b16 %v441
      %v450 = vpack.c.b16 %v447, %v446
      %v451 = vpack.c.b16 %v449, %v448
      %v455 = vsel %vm256, %v436, 0
      %457 = vmatprep.subr.bf16.mxu0 0
      %458 = vmatpush1.bf16.msra.mxu0 %v450
      %459 = vmatprep.subr.bf16.mxu0 0
      %460 = vmatpush1.bf16.msra.mxu0 %v451
      %461 = vmatprep.subr.bf16.mxu0 0
      %462 = vmatpush1.bf16.msra.mxu0 0
      %463 = vmatprep.subr.bf16.mxu0 0
      %464 = vmatpush1.bf16.msra.mxu0 0
      %465 = vmatprep.subr.bf16.mxu0 0
      %466 = vmatpush1.bf16.msra.mxu0 0
      %467 = vmatprep.subr.bf16.mxu0 0
      %468 = vmatpush1.bf16.msra.mxu0 0
      %469 = vmatprep.subr.bf16.mxu0 0
      %470 = vmatpush1.bf16.msra.mxu0 0
      %471 = vmatprep.subr.bf16.mxu0 0
      %472 = vmatpush1.bf16.msra.mxu0 0
      %473 = vmatprep.subr.bf16.mxu0 0
      %474 = vmatpush1.bf16.msra.mxu0 0
      %475 = vmatprep.subr.bf16.mxu0 0
      %476 = vmatpush1.bf16.msra.mxu0 0
      %477 = vmatprep.subr.bf16.mxu0 0
      %478 = vmatpush1.bf16.msra.mxu0 0
      %479 = vmatprep.subr.bf16.mxu0 0
      %480 = vmatpush1.bf16.msra.mxu0 0
      %481 = vmatprep.subr.bf16.mxu0 0
      %482 = vmatpush1.bf16.msra.mxu0 0
      %483 = vmatprep.subr.bf16.mxu0 0
      %484 = vmatpush1.bf16.msra.mxu0 0
      %485 = vmatprep.subr.bf16.mxu0 0
      %486 = vmatpush1.bf16.msra.mxu0 0
      %487 = vmatprep.subr.bf16.mxu0 0
      %488 = vmatpush1.bf16.msra.mxu0 0
      %489 = vmatprep.mubr.bf16.mxu0 0
      %490 = vmatmul.mubr.bf16.gmra.mrb[0].mxu0 %v455
      %v491 = vpop.f32.mrb[0].mxu0
      %v492 = vadd.f32 0.0, %v491
      %v493 = vpop.f32.mrb[0].mxu0
      %v494 = vpop.f32.mrb[0].mxu0
      %v495 = vpop.f32.mrb[0].mxu0
      %496 = vdwg.mxu0
      %v497 = vadd.f32 %v425, %v492
      %v499 = vunpack.c.l.s4 1983009808
      %v500 = vunpack.c.0.s8 %v499
      %v501 = vlaneseq
      %v502 = vshrl.u32 %v501, 7
      %v503 = vsub.s32 %v500, %v502
      %v504 = vrot.slane %v180, %v503
      %v505 = vcombine.high %v504, %v504
      %v506 = vrot.slane %v504, 7
      %v507 = vrot.slane %v506, 2
      %v508 = vrot.slane %v505, 7
      %v509 = vsel %vm220, %v507, %v508
      %v510 = vcombine.low %v228, %v509
      %v512 = vunpack.c.l.s4 1983009808
      %v513 = vunpack.c.0.s8 %v512
      %v514 = vlaneseq
      %v515 = vshrl.u32 %v514, 7
      %v516 = vsub.s32 %v513, %v515
      %v517 = vrot.slane %v510, %v516
      %v519 = vpack.c.bf16 %v517, %v517
      %s520 = scalar_lea.vmem %s1, 64
      %v521 = vld [vmem:[%s520] sm:$0xf]
      %v522 = vld [vmem:[%s520 + $0x4] sm:$0xf]
      %v523 = vld [vmem:[%s520 + $0x8] sm:$0xf]
      %v524 = vld [vmem:[%s520 + $0xc] sm:$0xf]
      %v529 = vunpack.c.l.b16 %v521
      %v530 = vunpack.c.l.b16 %v522
      %v531 = vunpack.c.l.b16 %v523
      %v532 = vunpack.c.l.b16 %v524
      %v533 = vpack.c.b16 %v530, %v529
      %v534 = vpack.c.b16 %v532, %v531
      %v538 = vsel %vm256, %v519, 0
      %540 = vmatprep.subr.bf16.mxu0 0
      %541 = vmatpush1.bf16.msra.mxu0 %v533
      %542 = vmatprep.subr.bf16.mxu0 0
      %543 = vmatpush1.bf16.msra.mxu0 %v534
      %544 = vmatprep.subr.bf16.mxu0 0
      %545 = vmatpush1.bf16.msra.mxu0 0
      %546 = vmatprep.subr.bf16.mxu0 0
      %547 = vmatpush1.bf16.msra.mxu0 0
      %548 = vmatprep.subr.bf16.mxu0 0
      %549 = vmatpush1.bf16.msra.mxu0 0
      %550 = vmatprep.subr.bf16.mxu0 0
      %551 = vmatpush1.bf16.msra.mxu0 0
      %552 = vmatprep.subr.bf16.mxu0 0
      %553 = vmatpush1.bf16.msra.mxu0 0
      %554 = vmatprep.subr.bf16.mxu0 0
      %555 = vmatpush1.bf16.msra.mxu0 0
      %556 = vmatprep.subr.bf16.mxu0 0
      %557 = vmatpush1.bf16.msra.mxu0 0
      %558 = vmatprep.subr.bf16.mxu0 0
      %559 = vmatpush1.bf16.msra.mxu0 0
      %560 = vmatprep.subr.bf16.mxu0 0
      %561 = vmatpush1.bf16.msra.mxu0 0
      %562 = vmatprep.subr.bf16.mxu0 0
      %563 = vmatpush1.bf16.msra.mxu0 0
      %564 = vmatprep.subr.bf16.mxu0 0
      %565 = vmatpush1.bf16.msra.mxu0 0
      %566 = vmatprep.subr.bf16.mxu0 0
      %567 = vmatpush1.bf16.msra.mxu0 0
      %568 = vmatprep.subr.bf16.mxu0 0
      %569 = vmatpush1.bf16.msra.mxu0 0
      %570 = vmatprep.subr.bf16.mxu0 0
      %571 = vmatpush1.bf16.msra.mxu0 0
      %572 = vmatprep.mubr.bf16.mxu0 0
      %573 = vmatmul.mubr.bf16.gmra.mrb[0].mxu0 %v538
      %v574 = vpop.f32.mrb[0].mxu0
      %v575 = vadd.f32 0.0, %v574
      %v576 = vpop.f32.mrb[0].mxu0
      %v577 = vpop.f32.mrb[0].mxu0
      %v578 = vpop.f32.mrb[0].mxu0
      %579 = vdwg.mxu0
      %v580 = vadd.f32 %v497, %v575
      %v581 = vcombine.low %v213, %v505
      %v583 = vunpack.c.l.s4 1983009808
      %v584 = vunpack.c.0.s8 %v583
      %v585 = vlaneseq
      %v586 = vshrl.u32 %v585, 7
      %v587 = vsub.s32 %v584, %v586
      %v588 = vrot.slane %v581, %v587
      %v590 = vpack.c.bf16 %v588, %v588
      %s591 = scalar_lea.vmem %s1, 80
      %v592 = vld [vmem:[%s591] sm:$0xf]
      %v593 = vld [vmem:[%s591 + $0x4] sm:$0xf]
      %v594 = vld [vmem:[%s591 + $0x8] sm:$0xf]
      %v595 = vld [vmem:[%s591 + $0xc] sm:$0xf]
      %v600 = vunpack.c.l.b16 %v592
      %v601 = vunpack.c.l.b16 %v593
      %v602 = vunpack.c.l.b16 %v594
      %v603 = vunpack.c.l.b16 %v595
      %v604 = vpack.c.b16 %v601, %v600
      %v605 = vpack.c.b16 %v603, %v602
      %v609 = vsel %vm256, %v590, 0
      %611 = vmatprep.subr.bf16.mxu0 0
      %612 = vmatpush1.bf16.msra.mxu0 %v604
      %613 = vmatprep.subr.bf16.mxu0 0
      %614 = vmatpush1.bf16.msra.mxu0 %v605
      %615 = vmatprep.subr.bf16.mxu0 0
      %616 = vmatpush1.bf16.msra.mxu0 0
      %617 = vmatprep.subr.bf16.mxu0 0
      %618 = vmatpush1.bf16.msra.mxu0 0
      %619 = vmatprep.subr.bf16.mxu0 0
      %620 = vmatpush1.bf16.msra.mxu0 0
      %621 = vmatprep.subr.bf16.mxu0 0
      %622 = vmatpush1.bf16.msra.mxu0 0
      %623 = vmatprep.subr.bf16.mxu0 0
      %624 = vmatpush1.bf16.msra.mxu0 0
      %625 = vmatprep.subr.bf16.mxu0 0
      %626 = vmatpush1.bf16.msra.mxu0 0
      %627 = vmatprep.subr.bf16.mxu0 0
      %628 = vmatpush1.bf16.msra.mxu0 0
      %629 = vmatprep.subr.bf16.mxu0 0
      %630 = vmatpush1.bf16.msra.mxu0 0
      %631 = vmatprep.subr.bf16.mxu0 0
      %632 = vmatpush1.bf16.msra.mxu0 0
      %633 = vmatprep.subr.bf16.mxu0 0
      %634 = vmatpush1.bf16.msra.mxu0 0
      %635 = vmatprep.subr.bf16.mxu0 0
      %636 = vmatpush1.bf16.msra.mxu0 0
      %637 = vmatprep.subr.bf16.mxu0 0
      %638 = vmatpush1.bf16.msra.mxu0 0
      %639 = vmatprep.subr.bf16.mxu0 0
      %640 = vmatpush1.bf16.msra.mxu0 0
      %641 = vmatprep.subr.bf16.mxu0 0
      %642 = vmatpush1.bf16.msra.mxu0 0
      %643 = vmatprep.mubr.bf16.mxu0 0
      %644 = vmatmul.mubr.bf16.gmra.mrb[0].mxu0 %v609
      %v645 = vpop.f32.mrb[0].mxu0
      %v646 = vadd.f32 0.0, %v645
      %v647 = vpop.f32.mrb[0].mxu0
      %v648 = vpop.f32.mrb[0].mxu0
      %v649 = vpop.f32.mrb[0].mxu0
      %650 = vdwg.mxu0
      %v651 = vadd.f32 %v580, %v646
      %v653 = vcombine.low %v180, %v181
      %v655 = vunpack.c.l.s4 1983009808
      %v656 = vunpack.c.0.s8 %v655
      %v657 = vlaneseq
      %v658 = vshrl.u32 %v657, 7
      %v659 = vsub.s32 %v656, %v658
      %v660 = vrot.slane %v653, %v659
      %v662 = vpack.c.bf16 %v660, %v660
      %s663 = scalar_lea.vmem %s1, 96
      %v664 = vld [vmem:[%s663] sm:$0xf]
      %v665 = vld [vmem:[%s663 + $0x4] sm:$0xf]
      %v666 = vld [vmem:[%s663 + $0x8] sm:$0xf]
      %v667 = vld [vmem:[%s663 + $0xc] sm:$0xf]
      %v672 = vunpack.c.l.b16 %v664
      %v673 = vunpack.c.l.b16 %v665
      %v674 = vunpack.c.l.b16 %v666
      %v675 = vunpack.c.l.b16 %v667
      %v676 = vpack.c.b16 %v673, %v672
      %v677 = vpack.c.b16 %v675, %v674
      %v681 = vsel %vm256, %v662, 0
      %683 = vmatprep.subr.bf16.mxu0 0
      %684 = vmatpush1.bf16.msra.mxu0 %v676
      %685 = vmatprep.subr.bf16.mxu0 0
      %686 = vmatpush1.bf16.msra.mxu0 %v677
      %687 = vmatprep.subr.bf16.mxu0 0
      %688 = vmatpush1.bf16.msra.mxu0 0
      %689 = vmatprep.subr.bf16.mxu0 0
      %690 = vmatpush1.bf16.msra.mxu0 0
      %691 = vmatprep.subr.bf16.mxu0 0
      %692 = vmatpush1.bf16.msra.mxu0 0
      %693 = vmatprep.subr.bf16.mxu0 0
      %694 = vmatpush1.bf16.msra.mxu0 0
      %695 = vmatprep.subr.bf16.mxu0 0
      %696 = vmatpush1.bf16.msra.mxu0 0
      %697 = vmatprep.subr.bf16.mxu0 0
      %698 = vmatpush1.bf16.msra.mxu0 0
      %699 = vmatprep.subr.bf16.mxu0 0
      %700 = vmatpush1.bf16.msra.mxu0 0
      %701 = vmatprep.subr.bf16.mxu0 0
      %702 = vmatpush1.bf16.msra.mxu0 0
      %703 = vmatprep.subr.bf16.mxu0 0
      %704 = vmatpush1.bf16.msra.mxu0 0
      %705 = vmatprep.subr.bf16.mxu0 0
      %706 = vmatpush1.bf16.msra.mxu0 0
      %707 = vmatprep.subr.bf16.mxu0 0
      %708 = vmatpush1.bf16.msra.mxu0 0
      %709 = vmatprep.subr.bf16.mxu0 0
      %710 = vmatpush1.bf16.msra.mxu0 0
      %711 = vmatprep.subr.bf16.mxu0 0
      %712 = vmatpush1.bf16.msra.mxu0 0
      %713 = vmatprep.subr.bf16.mxu0 0
      %714 = vmatpush1.bf16.msra.mxu0 0
      %715 = vmatprep.mubr.bf16.mxu0 0
      %716 = vmatmul.mubr.bf16.gmra.mrb[0].mxu0 %v681
      %v717 = vpop.f32.mrb[0].mxu0
      %v718 = vadd.f32 0.0, %v717
      %v719 = vpop.f32.mrb[0].mxu0
      %v720 = vpop.f32.mrb[0].mxu0
      %v721 = vpop.f32.mrb[0].mxu0
      %722 = vdwg.mxu0
      %v723 = vadd.f32 %v651, %v718
      %v725 = vunpack.c.l.s4 1983009808
      %v726 = vunpack.c.0.s8 %v725
      %v727 = vlaneseq
      %v728 = vshrl.u32 %v727, 7
      %v729 = vsub.s32 %v726, %v728
      %v730 = vrot.slane %v181, %v729
      %v731 = vcombine.high %v730, %v730
      %v732 = vrot.slane %v730, 7
      %v733 = vrot.slane %v732, 2
      %v734 = vrot.slane %v731, 7
      %v735 = vsel %vm220, %v733, %v734
      %v736 = vcombine.low %v509, %v735
      %v738 = vunpack.c.l.s4 1983009808
      %v739 = vunpack.c.0.s8 %v738
      %v740 = vlaneseq
      %v741 = vshrl.u32 %v740, 7
      %v742 = vsub.s32 %v739, %v741
      %v743 = vrot.slane %v736, %v742
      %v745 = vpack.c.bf16 %v743, %v743
      %s746 = scalar_lea.vmem %s1, 112
      %v747 = vld [vmem:[%s746] sm:$0xf]
      %v748 = vld [vmem:[%s746 + $0x4] sm:$0xf]
      %v749 = vld [vmem:[%s746 + $0x8] sm:$0xf]
      %v750 = vld [vmem:[%s746 + $0xc] sm:$0xf]
      %v755 = vunpack.c.l.b16 %v747
      %v756 = vunpack.c.l.b16 %v748
      %v757 = vunpack.c.l.b16 %v749
      %v758 = vunpack.c.l.b16 %v750
      %v759 = vpack.c.b16 %v756, %v755
      %v760 = vpack.c.b16 %v758, %v757
      %v764 = vsel %vm256, %v745, 0
      %766 = vmatprep.subr.bf16.mxu0 0
      %767 = vmatpush1.bf16.msra.mxu0 %v759
      %768 = vmatprep.subr.bf16.mxu0 0
      %769 = vmatpush1.bf16.msra.mxu0 %v760
      %770 = vmatprep.subr.bf16.mxu0 0
      %771 = vmatpush1.bf16.msra.mxu0 0
      %772 = vmatprep.subr.bf16.mxu0 0
      %773 = vmatpush1.bf16.msra.mxu0 0
      %774 = vmatprep.subr.bf16.mxu0 0
      %775 = vmatpush1.bf16.msra.mxu0 0
      %776 = vmatprep.subr.bf16.mxu0 0
      %777 = vmatpush1.bf16.msra.mxu0 0
      %778 = vmatprep.subr.bf16.mxu0 0
      %779 = vmatpush1.bf16.msra.mxu0 0
      %780 = vmatprep.subr.bf16.mxu0 0
      %781 = vmatpush1.bf16.msra.mxu0 0
      %782 = vmatprep.subr.bf16.mxu0 0
      %783 = vmatpush1.bf16.msra.mxu0 0
      %784 = vmatprep.subr.bf16.mxu0 0
      %785 = vmatpush1.bf16.msra.mxu0 0
      %786 = vmatprep.subr.bf16.mxu0 0
      %787 = vmatpush1.bf16.msra.mxu0 0
      %788 = vmatprep.subr.bf16.mxu0 0
      %789 = vmatpush1.bf16.msra.mxu0 0
      %790 = vmatprep.subr.bf16.mxu0 0
      %791 = vmatpush1.bf16.msra.mxu0 0
      %792 = vmatprep.subr.bf16.mxu0 0
      %793 = vmatpush1.bf16.msra.mxu0 0
      %794 = vmatprep.subr.bf16.mxu0 0
      %795 = vmatpush1.bf16.msra.mxu0 0
      %796 = vmatprep.subr.bf16.mxu0 0
      %797 = vmatpush1.bf16.msra.mxu0 0
      %798 = vmatprep.mubr.bf16.mxu0 0
      %799 = vmatmul.mubr.bf16.gmra.mrb[0].mxu0 %v764
      %v800 = vpop.f32.mrb[0].mxu0
      %v801 = vadd.f32 0.0, %v800
      %v802 = vpop.f32.mrb[0].mxu0
      %v803 = vpop.f32.mrb[0].mxu0
      %v804 = vpop.f32.mrb[0].mxu0
      %805 = vdwg.mxu0
      %v806 = vadd.f32 %v723, %v801
      %v807 = vcombine.low %v505, %v731
      %v809 = vunpack.c.l.s4 1983009808
      %v810 = vunpack.c.0.s8 %v809
      %v811 = vlaneseq
      %v812 = vshrl.u32 %v811, 7
      %v813 = vsub.s32 %v810, %v812
      %v814 = vrot.slane %v807, %v813
      %v816 = vpack.c.bf16 %v814, %v814
      %s817 = scalar_lea.vmem %s1, 128
      %v818 = vld [vmem:[%s817] sm:$0xf]
      %v819 = vld [vmem:[%s817 + $0x4] sm:$0xf]
      %v820 = vld [vmem:[%s817 + $0x8] sm:$0xf]
      %v821 = vld [vmem:[%s817 + $0xc] sm:$0xf]
      %v826 = vunpack.c.l.b16 %v818
      %v827 = vunpack.c.l.b16 %v819
      %v828 = vunpack.c.l.b16 %v820
      %v829 = vunpack.c.l.b16 %v821
      %v830 = vpack.c.b16 %v827, %v826
      %v831 = vpack.c.b16 %v829, %v828
      %v835 = vsel %vm256, %v816, 0
      %837 = vmatprep.subr.bf16.mxu0 0
      %838 = vmatpush1.bf16.msra.mxu0 %v830
      %839 = vmatprep.subr.bf16.mxu0 0
      %840 = vmatpush1.bf16.msra.mxu0 %v831
      %841 = vmatprep.subr.bf16.mxu0 0
      %842 = vmatpush1.bf16.msra.mxu0 0
      %843 = vmatprep.subr.bf16.mxu0 0
      %844 = vmatpush1.bf16.msra.mxu0 0
      %845 = vmatprep.subr.bf16.mxu0 0
      %846 = vmatpush1.bf16.msra.mxu0 0
      %847 = vmatprep.subr.bf16.mxu0 0
      %848 = vmatpush1.bf16.msra.mxu0 0
      %849 = vmatprep.subr.bf16.mxu0 0
      %850 = vmatpush1.bf16.msra.mxu0 0
      %851 = vmatprep.subr.bf16.mxu0 0
      %852 = vmatpush1.bf16.msra.mxu0 0
      %853 = vmatprep.subr.bf16.mxu0 0
      %854 = vmatpush1.bf16.msra.mxu0 0
      %855 = vmatprep.subr.bf16.mxu0 0
      %856 = vmatpush1.bf16.msra.mxu0 0
      %857 = vmatprep.subr.bf16.mxu0 0
      %858 = vmatpush1.bf16.msra.mxu0 0
      %859 = vmatprep.subr.bf16.mxu0 0
      %860 = vmatpush1.bf16.msra.mxu0 0
      %861 = vmatprep.subr.bf16.mxu0 0
      %862 = vmatpush1.bf16.msra.mxu0 0
      %863 = vmatprep.subr.bf16.mxu0 0
      %864 = vmatpush1.bf16.msra.mxu0 0
      %865 = vmatprep.subr.bf16.mxu0 0
      %866 = vmatpush1.bf16.msra.mxu0 0
      %867 = vmatprep.subr.bf16.mxu0 0
      %868 = vmatpush1.bf16.msra.mxu0 0
      %869 = vmatprep.mubr.bf16.mxu0 0
      %870 = vmatmul.mubr.bf16.gmra.mrb[0].mxu0 %v835
      %v871 = vpop.f32.mrb[0].mxu0
      %v872 = vadd.f32 0.0, %v871
      %v873 = vpop.f32.mrb[0].mxu0
      %v874 = vpop.f32.mrb[0].mxu0
      %v875 = vpop.f32.mrb[0].mxu0
      %876 = vdwg.mxu0
      %v877 = vadd.f32 %v806, %v872
      %v878 = vld [vmem:[#allocation2] sm:$0x1]
      %v880 = vlaneseq
      %v881 = vshrl.u32 %v880, 7
      %v882 = vsub.s32 0, %v881
      %v883 = vrot.slane %v878, %v882
      %v885 = vadd.f32 %v877, %v883
      %v888 = vunpack.c.l.s4 1983009808
      %v889 = vunpack.c.0.s8 %v888
      %v890 = vlaneseq
      %v891 = vshrl.u32 %v890, 7
      %v892 = vsub.s32 %v889, %v891
      %v893 = vrot.slane %v885, %v892
      %v894 = vcombine.high %v893, %v893
      %vm897 = vcmask 1024
      %898 = vst.msk [vmem:[%s172] sm:$0x3] %vm897, %v893
      %899 = vst.msk [vmem:[%s172 + $0x2] sm:$0x3] %vm897, %v894
      %p900 = scmp.lt.s32.totalorder %s16, 1
      %s901 = scalar_select %p900, %s16, 1
      %s902 = smul.addr %s901, 2
      %s903 = smul.addr %s902, 2
      %s904 = scalar_lea.vmem %s3, %s903
      // Predicated region
      $region33: #{semantic_segmentation_forward.25} parent=31 // pred_check
        %p905 = pneg %p102
      $region34: #{semantic_segmentation_forward.25} parent=31 // pred_check_branch
        %907 = sbr.rel (%p905) target = $region36
      $region35: #{semantic_segmentation_forward.25} parent=31 // pred_region
        _
      $region36: #{semantic_segmentation_forward.25} parent=31 // pred_fallthru
        _
    $region32: #{semantic_segmentation_forward.25} parent=5 // pred_fallthru
      _
    %p908 = scmp.le.s32.totalorder 2, %s11
    // Predicated region
    $region37: #{semantic_segmentation_forward.25} parent=5 // pred_check
      %p909 = pneg %p908
    $region38: #{semantic_segmentation_forward.25} parent=5 // pred_check_branch
      %911 = sbr.rel (%p909) target = $region40
    $region39: #{semantic_segmentation_forward.25} parent=5 // pred_region
      %s912 = ssub.s32 %s11, 2
      // Predicated region
      $region41: #{semantic_segmentation_forward.25} parent=39 // pred_check
        %p913 = pneg %p108
      $region42: #{semantic_segmentation_forward.25} parent=39 // pred_check_branch
        %915 = sbr.rel (%p913) target = $region44
      $region43: #{semantic_segmentation_forward.25} parent=39 // pred_region
        %p916 = scmp.lt.s32.totalorder %s17, 1
        %s917 = scalar_select %p916, %s17, 1
        %s918 = smul.addr %s917, 2
        %s919 = smul.addr %s918, 2
        %s920 = scalar_lea.vmem %s3, %s919
      $region44: #{semantic_segmentation_forward.25} parent=39 // pred_fallthru
        _
    $region40: #{semantic_segmentation_forward.25} parent=5 // pred_fallthru
      _
  $region6: #{semantic_segmentation_forward.25} parent=0 // loop_footer
    %s15 = sadd.s32 1, %s11
  $region7: #{semantic_segmentation_forward.25} parent=0 // loop_footer_branch
    %10 = sbr.rel target = $region3
  $region8: #{semantic_segmentation_forward.25} parent=0 // loop_exit
    _

// kernel: semantic_segmentation_forward.27
$region0: #{semantic_segmentation_forward.27}
  #allocation0 [shape = 'u32[]', space=smem, size = 0x4, offset = 0x4, fixed_abs, tag = 'smem constant byte address 0x4 - core index']
  #allocation1 [shape = 'u32[144,128]{1,0:T(1,128)}', space=vmem, size = 0x12000, scoped, tag = 'internal scratch']
  %s0 = inlined_call_operand.vmem [shape: f32[16,2], index: 0, kind: input, shape index: {}]
  %s1 = inlined_call_operand.vmem [shape: f32[2,32], index: 1, kind: input, shape index: {}]
  %s2 = inlined_call_operand.vmem [shape: f32[1,32], index: 2, kind: input, shape index: {}]
  %s3 = inlined_call_operand.vmem [shape: f32[16,32], index: 3, kind: output, shape index: {}]
  %s4 = sld [smem:[#allocation0]]
  $region22: #{semantic_segmentation_forward.27} parent=0
    _
  %s6 = ssub.s32 1, %s4
  %s7 = scalar_select 0, %s6, %s4
  // Predicated region
  $region2: #{semantic_segmentation_forward.27} parent=0 // pred_check
    _
  $region3: #{semantic_segmentation_forward.27} parent=0 // pred_check_branch
    %9 = sbr.rel (0) target = $region5
  $region4: #{semantic_segmentation_forward.27} parent=0 // pred_region
    _
  $region5: #{semantic_segmentation_forward.27} parent=0 // pred_fallthru
    _
  // Predicated region
  $region6: #{semantic_segmentation_forward.27} parent=0 // pred_check
    _
  $region7: #{semantic_segmentation_forward.27} parent=0 // pred_check_branch
    %11 = sbr.rel (0) target = $region9
  $region8: #{semantic_segmentation_forward.27} parent=0 // pred_region
    _
  $region9: #{semantic_segmentation_forward.27} parent=0 // pred_fallthru
    _
  // Predicated region
  $region10: #{semantic_segmentation_forward.27} parent=0 // pred_check
    _
  $region11: #{semantic_segmentation_forward.27} parent=0 // pred_check_branch
    %13 = sbr.rel (0) target = $region13
  $region12: #{semantic_segmentation_forward.27} parent=0 // pred_region
    _
  $region13: #{semantic_segmentation_forward.27} parent=0 // pred_fallthru
    _
  %v14 = vld [vmem:[%s0] sm:$0xff]
  %v15 = vld [vmem:[%s0 + $0x8] sm:$0xff]
  %v16 = vld [vmem:[%s1] sm:$0x3]
  %v17 = vld [vmem:[%s2] sm:$0x1]
  %v19 = vlaneseq
  %v20 = vshrl.u32 %v19, 7
  %v21 = vsub.s32 0, %v20
  %v22 = vrot.slane %v17, %v21
  %vm24 = vcmask 15360
  %v26 = vsel %vm24, %v14, 0
  %v29 = vsel %vm24, %v15, 0
  %vm31 = vcmask 1041408
  %v33 = vsel %vm31, %v16, 0
  %35 = vmatprep.subr.mxu0 0.0
  %36 = vmatpush1.msra.mxu0 %v33
  %37 = vmatprep.subr.mxu0 0.0
  %38 = vmatpush1.msra.mxu0 0.0
  %39 = vmatprep.subr.mxu0 0.0
  %40 = vmatpush1.msra.mxu0 0.0
  %41 = vmatprep.subr.mxu0 0.0
  %42 = vmatpush1.msra.mxu0 0.0
  %43 = vmatprep.subr.mxu0 0.0
  %44 = vmatpush1.msra.mxu0 0.0
  %45 = vmatprep.subr.mxu0 0.0
  %46 = vmatpush1.msra.mxu0 0.0
  %47 = vmatprep.subr.mxu0 0.0
  %48 = vmatpush1.msra.mxu0 0.0
  %49 = vmatprep.subr.mxu0 0.0
  %50 = vmatpush1.msra.mxu0 0.0
  %51 = vmatprep.subr.mxu0 0.0
  %52 = vmatpush1.msra.mxu0 0.0
  %53 = vmatprep.subr.mxu0 0.0
  %54 = vmatpush1.msra.mxu0 0.0
  %55 = vmatprep.subr.mxu0 0.0
  %56 = vmatpush1.msra.mxu0 0.0
  %57 = vmatprep.subr.mxu0 0.0
  %58 = vmatpush1.msra.mxu0 0.0
  %59 = vmatprep.subr.mxu0 0.0
  %60 = vmatpush1.msra.mxu0 0.0
  %61 = vmatprep.subr.mxu0 0.0
  %62 = vmatpush1.msra.mxu0 0.0
  %63 = vmatprep.subr.mxu0 0.0
  %64 = vmatpush1.msra.mxu0 0.0
  %65 = vmatprep.subr.mxu0 0.0
  %66 = vmatpush1.msra.mxu0 0.0
  %67 = vmatprep.subr.mxu0 0.0
  %68 = vmatpush1.msra.mxu0 0.0
  %69 = vmatprep.subr.mxu0 0.0
  %70 = vmatpush1.msra.mxu0 0.0
  %71 = vmatprep.subr.mxu0 0.0
  %72 = vmatpush1.msra.mxu0 0.0
  %73 = vmatprep.subr.mxu0 0.0
  %74 = vmatpush1.msra.mxu0 0.0
  %75 = vmatprep.subr.mxu0 0.0
  %76 = vmatpush1.msra.mxu0 0.0
  %77 = vmatprep.subr.mxu0 0.0
  %78 = vmatpush1.msra.mxu0 0.0
  %79 = vmatprep.subr.mxu0 0.0
  %80 = vmatpush1.msra.mxu0 0.0
  %81 = vmatprep.subr.mxu0 0.0
  %82 = vmatpush1.msra.mxu0 0.0
  %83 = vmatprep.subr.mxu0 0.0
  %84 = vmatpush1.msra.mxu0 0.0
  %85 = vmatprep.subr.mxu0 0.0
  %86 = vmatpush1.msra.mxu0 0.0
  %87 = vmatprep.subr.mxu0 0.0
  %88 = vmatpush1.msra.mxu0 0.0
  %89 = vmatprep.subr.mxu0 0.0
  %90 = vmatpush1.msra.mxu0 0.0
  %91 = vmatprep.subr.mxu0 0.0
  %92 = vmatpush1.msra.mxu0 0.0
  %93 = vmatprep.subr.mxu0 0.0
  %94 = vmatpush1.msra.mxu0 0.0
  %95 = vmatprep.subr.mxu0 0.0
  %96 = vmatpush1.msra.mxu0 0.0
  %97 = vmatprep.subr.mxu0 0.0
  %98 = vmatpush1.msra.mxu0 0.0
  %99 = vmatprep.mubr.f32.mxu0 0.0
  %100 = vmatmul.mubr.f32.gmra.mrb[0].mxu0 %v26
  %v101 = vpop.f32.mrb[0].mxu0
  %v102 = vadd.f32 %v22, %v101
  %v103 = vpop.f32.mrb[0].mxu0
  %104 = vmatprep.mubr.f32.mxu0 0.0
  %105 = vmatmul.mubr.f32.gmra.mrb[0].mxu0 %v29
  %v106 = vpop.f32.mrb[0].mxu0
  %v107 = vadd.f32 %v22, %v106
  %v108 = vpop.f32.mrb[0].mxu0
  %109 = vdwg.mxu0
  %vm110 = vcmask 261120
  %111 = vst.msk [vmem:[%s3] sm:$0xff] %vm110, %v102
  %112 = vst.msk [vmem:[%s3 + $0x8] sm:$0xff] %vm110, %v107
  // Predicated region
  $region14: #{semantic_segmentation_forward.27} parent=0 // pred_check
    _
  $region15: #{semantic_segmentation_forward.27} parent=0 // pred_check_branch
    %114 = sbr.rel (0) target = $region17
  $region16: #{semantic_segmentation_forward.27} parent=0 // pred_region
    _
  $region17: #{semantic_segmentation_forward.27} parent=0 // pred_fallthru
    _
  // Predicated region
  $region18: #{semantic_segmentation_forward.27} parent=0 // pred_check
    _
  $region19: #{semantic_segmentation_forward.27} parent=0 // pred_check_branch
    %116 = sbr.rel (0) target = $region21
  $region20: #{semantic_segmentation_forward.27} parent=0 // pred_region
    _
  $region21: #{semantic_segmentation_forward.27} parent=0 // pred_fallthru
    _

</llo_original>
